<compile_context>
chip_gen: v7x
topology: tpu7x:2x2x1
jax: 0.10.0
libtpu: 0.0.40
codegen_flags: <defaults>
</compile_context>

<pallas_src>
import math

import jax
import jax.numpy as jnp
from jax import lax
from jax.experimental import pallas as pl
from jax.experimental.pallas import tpu as pltpu

NUM_HEADS = 4
LN_EPS = 1e-5


def _layernorm(x, g, b):
    mean = jnp.mean(x, axis=-1, keepdims=True)
    var = jnp.mean((x - mean) ** 2, axis=-1, keepdims=True)
    return (x - mean) * lax.rsqrt(var + LN_EPS) * g + b


def _gelu_exact(x):
    # PyTorch nn.GELU() default = exact erf formulation.
    return 0.5 * x * (1.0 + lax.erf(x * (1.0 / math.sqrt(2.0))))


def self_attention_kernel(
    x_full_ref,                              # (1, S, C)  full sequence (K/V source)
    x_q_ref,                                 # (1, TQ, C) query tile (residual)
    g1_ref, b1_ref,                          # (1, C) LayerNorm before MHA
    wqkv_ref, bqkv_ref,                      # (C, 3C) bf16 fused in_proj.T, (1, 3C) f32
    wo_ref, bo_ref,                          # (C, C) bf16 out_proj.T, (1, C) f32
    g2_ref, b2_ref,                          # (1, C) LayerNorm in ff_self
    w1_ref, bf1_ref, w2_ref, bf2_ref,        # ff linears (bf16, pre-transposed) + biases
    out_ref,                                 # (1, TQ, C)
    q_scr, k_scr, v_scr,                     # (S, C) bf16 VMEM scratch
):
    qt = pl.program_id(1)
    S, C = x_full_ref.shape[1], x_full_ref.shape[2]
    TQ = out_ref.shape[1]
    D = C // NUM_HEADS
    scale = 1.0 / math.sqrt(D)

    # --- once per batch element: LN + fused QKV projection for the whole sequence ---
    @pl.when(qt == 0)
    def _():
        xf = x_full_ref[0].astype(jnp.float32)                      # (S, C)
        xf_ln = _layernorm(xf, g1_ref[...], b1_ref[...])
        qkv = jnp.dot(xf_ln.astype(jnp.bfloat16), wqkv_ref[...],
                      preferred_element_type=jnp.float32) + bqkv_ref[...]
        q_scr[...] = (qkv[:, :C] * scale).astype(jnp.bfloat16)      # scale folded into q
        k_scr[...] = qkv[:, C:2 * C].astype(jnp.bfloat16)
        v_scr[...] = qkv[:, 2 * C:].astype(jnp.bfloat16)

    # --- per query tile: attention over the full key/value sequence ---
    q_start = pl.multiple_of(qt * TQ, TQ)
    x_tile = x_q_ref[0].astype(jnp.float32)                         # (TQ, C)

    qh = q_scr[pl.ds(q_start, TQ), :].reshape(TQ, NUM_HEADS, D)     # bf16
    kh = k_scr[...].reshape(S, NUM_HEADS, D)
    vh = v_scr[...].reshape(S, NUM_HEADS, D)

    s = jnp.einsum("qhd,khd->hqk", qh, kh,
                   preferred_element_type=jnp.float32)              # (H, TQ, S) f32
    s = s - jnp.max(s, axis=-1, keepdims=True)
    p = jnp.exp(s)
    p = p * pl.reciprocal(jnp.sum(p, axis=-1, keepdims=True), approx=True)
    o = jnp.einsum("hqk,khd->qhd", p.astype(jnp.bfloat16), vh,
                   preferred_element_type=jnp.float32)              # (TQ, H, D) f32
    attn = o.reshape(TQ, C)

    # --- output projection + residual ---
    attn = jnp.dot(attn.astype(jnp.bfloat16), wo_ref[...],
                   preferred_element_type=jnp.float32) + bo_ref[...]
    attn_val = attn + x_tile

    # --- ff_self: LN -> Linear -> GELU -> Linear, + residual ---
    h1 = _layernorm(attn_val, g2_ref[...], b2_ref[...])
    h2 = jnp.dot(h1.astype(jnp.bfloat16), w1_ref[...],
                 preferred_element_type=jnp.float32) + bf1_ref[...]
    h3 = _gelu_exact(h2)
    h4 = jnp.dot(h3.astype(jnp.bfloat16), w2_ref[...],
                 preferred_element_type=jnp.float32) + bf2_ref[...]

    out_ref[0] = (h4 + attn_val).astype(out_ref.dtype)


def _pick_tq(S):
    """Largest query tile <= 256 that divides S (keeps scores bounded to (Tq,S))."""
    if S <= 256:
        return S
    for t in (256, 128, 64, 32, 16, 8):
        if S % t == 0:
            return t
    return S


def init_params(key, channels):
    C = channels
    ks = jax.random.split(key, 8)
    scale = 0.1
    return {
        # LayerNorm before MHA (PyTorch defaults: ones / zeros)
        "g1": jnp.ones((C,), jnp.float32),
        "b1": jnp.zeros((C,), jnp.float32),
        # MultiheadAttention in/out projections
        "in_proj_w": jax.random.normal(ks[0], (3 * C, C), jnp.float32) * scale,
        "in_proj_b": jax.random.normal(ks[1], (3 * C,), jnp.float32) * scale,
        "wo": jax.random.normal(ks[2], (C, C), jnp.float32) * scale,
        "bo": jax.random.normal(ks[3], (C,), jnp.float32) * scale,
        # ff_self
        "g2": jnp.ones((C,), jnp.float32),
        "b2": jnp.zeros((C,), jnp.float32),
        "w1": jax.random.normal(ks[4], (C, C), jnp.float32) * scale,
        "bf1": jax.random.normal(ks[5], (C,), jnp.float32) * scale,
        "w2": jax.random.normal(ks[6], (C, C), jnp.float32) * scale,
        "bf2": jax.random.normal(ks[7], (C,), jnp.float32) * scale,
    }


def self_attention_forward(x_nchw, params, size):
    B, C, H, W = x_nchw.shape
    assert H == size and W == size and C % NUM_HEADS == 0
    S = size * size
    TQ = _pick_tq(S)
    n_q = S // TQ

    # NCHW -> (B, S, C)   (layout glue outside the kernel)
    x_seq = x_nchw.reshape(B, C, S).swapaxes(1, 2)

    r1 = lambda v: v.reshape(1, -1)                      # (1, C)-style vectors, f32
    bf16 = lambda w: w.astype(jnp.bfloat16)              # bf16 weights -> half the DMA

    # Fused, pre-transposed QKV projection:  qkv = x_ln @ in_proj_w.T + in_proj_b
    wqkv = bf16(params["in_proj_w"].T)                   # (C, 3C)
    bqkv = r1(params["in_proj_b"])                       # (1, 3C)

    args = (
        x_seq, x_seq,
        r1(params["g1"]), r1(params["b1"]),
        wqkv, bqkv,
        bf16(params["wo"].T), r1(params["bo"]),
        r1(params["g2"]), r1(params["b2"]),
        bf16(params["w1"].T), r1(params["bf1"]),
        bf16(params["w2"].T), r1(params["bf2"]),
    )

    def const_spec(shape):
        return pl.BlockSpec(shape, lambda b, q: (0, 0))

    in_specs = [
        pl.BlockSpec((1, S, C), lambda b, q: (b, 0, 0)),     # x full (K/V source)
        pl.BlockSpec((1, TQ, C), lambda b, q: (b, q, 0)),    # x query tile (residual)
        const_spec((1, C)), const_spec((1, C)),              # ln1 g, b
        const_spec((C, 3 * C)), const_spec((1, 3 * C)),      # fused Wqkv, bqkv
        const_spec((C, C)), const_spec((1, C)),              # Wo, bo
        const_spec((1, C)), const_spec((1, C)),              # ln2 g, b
        const_spec((C, C)), const_spec((1, C)),              # ff W1, b1
        const_spec((C, C)), const_spec((1, C)),              # ff W2, b2
    ]

    out = pl.pallas_call(
        self_attention_kernel,
        out_shape=jax.ShapeDtypeStruct((B, S, C), x_nchw.dtype),
        grid_spec=pltpu.PrefetchScalarGridSpec(
            num_scalar_prefetch=0,
            grid=(B, n_q),
            in_specs=in_specs,
            out_specs=pl.BlockSpec((1, TQ, C), lambda b, q: (b, q, 0)),
            scratch_shapes=[
                pltpu.VMEM((S, C), jnp.bfloat16),   # q (pre-scaled)
                pltpu.VMEM((S, C), jnp.bfloat16),   # k
                pltpu.VMEM((S, C), jnp.bfloat16),   # v
            ],
        ),
        compiler_params=pltpu.CompilerParams(
            dimension_semantics=("parallel", "arbitrary"),
            vmem_limit_bytes=32 * 1024 * 1024,
        ),
    )(*args)

    # (B, S, C) -> NCHW
    return out.swapaxes(1, 2).reshape(B, C, size, size)


def reference_forward(x_nchw, params, size):
    """Pure-JAX f32 reference mirroring the PyTorch module."""
    B, C, _, _ = x_nchw.shape
    S = size * size
    x = x_nchw.reshape(B, C, S).swapaxes(1, 2).astype(jnp.float32)

    def ln(v, g, b):
        m = v.mean(-1, keepdims=True)
        var = ((v - m) ** 2).mean(-1, keepdims=True)
        return (v - m) / jnp.sqrt(var + LN_EPS) * g + b

    x_ln = ln(x, params["g1"], params["b1"])
    wq, wk, wv = jnp.split(params["in_proj_w"], 3, axis=0)
    bq, bk, bv = jnp.split(params["in_proj_b"], 3, axis=0)
    q = x_ln @ wq.T + bq
    k = x_ln @ wk.T + bk
    v = x_ln @ wv.T + bv
    D = C // NUM_HEADS
    sh = lambda t: t.reshape(B, S, NUM_HEADS, D).transpose(0, 2, 1, 3)
    qh, kh, vh = sh(q), sh(k), sh(v)
    s = jnp.einsum("bhsd,bhtd->bhst", qh, kh) / math.sqrt(D)
    p = jax.nn.softmax(s, axis=-1)
    o = jnp.einsum("bhst,bhtd->bhsd", p, vh).transpose(0, 2, 1, 3).reshape(B, S, C)
    o = o @ params["wo"].T + params["bo"]
    av = o + x
    h = ln(av, params["g2"], params["b2"])
    h = h @ params["w1"].T + params["bf1"]
    h = 0.5 * h * (1.0 + jax.scipy.special.erf(h / math.sqrt(2.0)))
    h = h @ params["w2"].T + params["bf2"]
    out = h + av
    return out.swapaxes(1, 2).reshape(B, C, size, size)


if __name__ == "__main__":
    B, channels, size = 2, 8, 8          # x: (2, 8, 8, 8), seq = 64, head_dim = 2
    key = jax.random.PRNGKey(0)
    kx, kp = jax.random.split(key)
    x = jax.random.normal(kx, (B, channels, size, size), jnp.float32)
    params = init_params(kp, channels)

    out = self_attention_forward(x, params, size)
    out = jax.block_until_ready(out)

    ref = reference_forward(x, params, size)
    assert out.shape == (B, channels, size, size)
    # bf16 MXU operands (f32 accumulation) -> allow ~1e-2 scale deviation.
    assert jnp.allclose(out, ref, atol=2e-2, rtol=2e-2)

    print("KERNEL_OK")
</pallas_src>

<mosaic_0001>
module attributes {stable_mosaic.version = 11 : i64} {
  func.func @self_attention_kernel(%arg0: i32, %arg1: i32, %arg2: memref<1x64x8xf32, #tpu.memory_space<vmem>>, %arg3: memref<1x64x8xf32, #tpu.memory_space<vmem>>, %arg4: memref<1x8xf32, #tpu.memory_space<vmem>>, %arg5: memref<1x8xf32, #tpu.memory_space<vmem>>, %arg6: memref<8x24xbf16, #tpu.memory_space<vmem>>, %arg7: memref<1x24xf32, #tpu.memory_space<vmem>>, %arg8: memref<8x8xbf16, #tpu.memory_space<vmem>>, %arg9: memref<1x8xf32, #tpu.memory_space<vmem>>, %arg10: memref<1x8xf32, #tpu.memory_space<vmem>>, %arg11: memref<1x8xf32, #tpu.memory_space<vmem>>, %arg12: memref<8x8xbf16, #tpu.memory_space<vmem>>, %arg13: memref<1x8xf32, #tpu.memory_space<vmem>>, %arg14: memref<8x8xbf16, #tpu.memory_space<vmem>>, %arg15: memref<1x8xf32, #tpu.memory_space<vmem>>, %arg16: memref<1x64x8xf32, #tpu.memory_space<vmem>>, %arg17: memref<64x8xbf16, #tpu.memory_space<vmem>>, %arg18: memref<64x8xbf16, #tpu.memory_space<vmem>>, %arg19: memref<64x8xbf16, #tpu.memory_space<vmem>>) attributes {dimension_semantics = [#tpu.dimension_semantics<parallel>, #tpu.dimension_semantics<arbitrary>], iteration_bounds = array<i64: 2, 1>, scalar_prefetch = 0 : i64, scratch_operands = 3 : i64, tpu.core_type = #tpu.core_type<tc>, window_params = [{transform_indices = @transform_0, window_bounds = array<i64: 1, 64, 8>}, {transform_indices = @transform_1, window_bounds = array<i64: 1, 64, 8>}, {pipeline_mode = #tpu.pipeline_mode<synchronous>, transform_indices = @transform_2, window_bounds = array<i64: 1, 8>}, {pipeline_mode = #tpu.pipeline_mode<synchronous>, transform_indices = @transform_3, window_bounds = array<i64: 1, 8>}, {pipeline_mode = #tpu.pipeline_mode<synchronous>, transform_indices = @transform_4, window_bounds = array<i64: 8, 24>}, {pipeline_mode = #tpu.pipeline_mode<synchronous>, transform_indices = @transform_5, window_bounds = array<i64: 1, 24>}, {pipeline_mode = #tpu.pipeline_mode<synchronous>, transform_indices = @transform_6, window_bounds = array<i64: 8, 8>}, {pipeline_mode = #tpu.pipeline_mode<synchronous>, transform_indices = @transform_7, window_bounds = array<i64: 1, 8>}, {pipeline_mode = #tpu.pipeline_mode<synchronous>, transform_indices = @transform_8, window_bounds = array<i64: 1, 8>}, {pipeline_mode = #tpu.pipeline_mode<synchronous>, transform_indices = @transform_9, window_bounds = array<i64: 1, 8>}, {pipeline_mode = #tpu.pipeline_mode<synchronous>, transform_indices = @transform_10, window_bounds = array<i64: 8, 8>}, {pipeline_mode = #tpu.pipeline_mode<synchronous>, transform_indices = @transform_11, window_bounds = array<i64: 1, 8>}, {pipeline_mode = #tpu.pipeline_mode<synchronous>, transform_indices = @transform_12, window_bounds = array<i64: 8, 8>}, {pipeline_mode = #tpu.pipeline_mode<synchronous>, transform_indices = @transform_13, window_bounds = array<i64: 1, 8>}, {transform_indices = @transform_14, window_bounds = array<i64: 1, 64, 8>}]} {
    %c0_i32 = arith.constant 0 : i32
    %0 = arith.cmpi eq, %arg1, %c0_i32 : i32
    %1 = arith.extui %0 : i1 to i32
    %c0_i32_0 = arith.constant 0 : i32
    %2 = arith.cmpi ne, %1, %c0_i32_0 : i32
    scf.if %2 {
      %c0_41 = arith.constant 0 : index
      %c0_42 = arith.constant 0 : index
      %c0_43 = arith.constant 0 : index
      %84 = vector.load %arg2[%c0_41, %c0_42, %c0_43] : memref<1x64x8xf32, #tpu.memory_space<vmem>>, vector<1x64x8xf32>
      %85 = vector.shape_cast %84 : vector<1x64x8xf32> to vector<64x8xf32>
      %c0_44 = arith.constant 0 : index
      %c0_45 = arith.constant 0 : index
      %86 = vector.load %arg4[%c0_44, %c0_45] : memref<1x8xf32, #tpu.memory_space<vmem>>, vector<1x8xf32>
      %c0_46 = arith.constant 0 : index
      %c0_47 = arith.constant 0 : index
      %87 = vector.load %arg5[%c0_46, %c0_47] : memref<1x8xf32, #tpu.memory_space<vmem>>, vector<1x8xf32>
      %cst_48 = arith.constant dense<0.000000e+00> : vector<64xf32>
      %88 = vector.multi_reduction <add>, %85, %cst_48 [1] : vector<64x8xf32> to vector<64xf32>
      %89 = vector.shape_cast %88 : vector<64xf32> to vector<64x1xf32>
      %cst_49 = arith.constant 8.000000e+00 : f32
      %90 = vector.broadcast %cst_49 : f32 to vector<64x1xf32>
      %91 = arith.divf %89, %90 : vector<64x1xf32>
      %92 = vector.broadcast %91 : vector<64x1xf32> to vector<64x8xf32>
      %93 = arith.subf %85, %92 : vector<64x8xf32>
      %94 = arith.mulf %93, %93 : vector<64x8xf32>
      %cst_50 = arith.constant dense<0.000000e+00> : vector<64xf32>
      %95 = vector.multi_reduction <add>, %94, %cst_50 [1] : vector<64x8xf32> to vector<64xf32>
      %96 = vector.shape_cast %95 : vector<64xf32> to vector<64x1xf32>
      %cst_51 = arith.constant 8.000000e+00 : f32
      %97 = vector.broadcast %cst_51 : f32 to vector<64x1xf32>
      %98 = arith.divf %96, %97 : vector<64x1xf32>
      %99 = vector.broadcast %91 : vector<64x1xf32> to vector<64x8xf32>
      %100 = arith.subf %85, %99 : vector<64x8xf32>
      %cst_52 = arith.constant 9.99999974E-6 : f32
      %101 = vector.broadcast %cst_52 : f32 to vector<64x1xf32>
      %102 = arith.addf %98, %101 : vector<64x1xf32>
      %103 = math.rsqrt %102 : vector<64x1xf32>
      %104 = vector.broadcast %103 : vector<64x1xf32> to vector<64x8xf32>
      %105 = arith.mulf %100, %104 : vector<64x8xf32>
      %106 = vector.broadcast %86 : vector<1x8xf32> to vector<64x8xf32>
      %107 = arith.mulf %105, %106 : vector<64x8xf32>
      %108 = vector.broadcast %87 : vector<1x8xf32> to vector<64x8xf32>
      %109 = arith.addf %107, %108 : vector<64x8xf32>
      %110 = arith.truncf %109 : vector<64x8xf32> to vector<64x8xbf16>
      %c0_53 = arith.constant 0 : index
      %c0_54 = arith.constant 0 : index
      %111 = vector.load %arg6[%c0_53, %c0_54] : memref<8x24xbf16, #tpu.memory_space<vmem>>, vector<8x24xbf16>
      %cst_55 = arith.constant dense<0.000000e+00> : vector<64x24xf32>
      %112 = tpu.matmul %110, %111, %cst_55 {dimension_numbers = #tpu.dot_dimension_numbers<[1], [0], [0], [1], [0, 0, 1, 1], [], []>} : vector<64x8xbf16>, vector<8x24xbf16>, vector<64x24xf32> -> vector<64x24xf32>
      %c0_56 = arith.constant 0 : index
      %c0_57 = arith.constant 0 : index
      %113 = vector.load %arg7[%c0_56, %c0_57] : memref<1x24xf32, #tpu.memory_space<vmem>>, vector<1x24xf32>
      %114 = vector.broadcast %113 : vector<1x24xf32> to vector<64x24xf32>
      %115 = arith.addf %112, %114 : vector<64x24xf32>
      %116 = vector.extract_strided_slice %115 {offsets = [0, 0], sizes = [64, 8], strides = [1, 1]} : vector<64x24xf32> to vector<64x8xf32>
      %cst_58 = arith.constant 0.707106769 : f32
      %117 = vector.broadcast %cst_58 : f32 to vector<64x8xf32>
      %118 = arith.mulf %116, %117 : vector<64x8xf32>
      %119 = arith.truncf %118 : vector<64x8xf32> to vector<64x8xbf16>
      %c0_59 = arith.constant 0 : index
      %c0_60 = arith.constant 0 : index
      %120 = vector.load %arg17[%c0_59, %c0_60] : memref<64x8xbf16, #tpu.memory_space<vmem>>, vector<64x8xbf16>
      tpu.vector_store %arg17[%c0_59, %c0_60], %119 {strides = array<i32>} : memref<64x8xbf16, #tpu.memory_space<vmem>>, vector<64x8xbf16>,
      %121 = vector.extract_strided_slice %115 {offsets = [0, 8], sizes = [64, 8], strides = [1, 1]} : vector<64x24xf32> to vector<64x8xf32>
      %122 = arith.truncf %121 : vector<64x8xf32> to vector<64x8xbf16>
      %c0_61 = arith.constant 0 : index
      %c0_62 = arith.constant 0 : index
      %123 = vector.load %arg18[%c0_61, %c0_62] : memref<64x8xbf16, #tpu.memory_space<vmem>>, vector<64x8xbf16>
      tpu.vector_store %arg18[%c0_61, %c0_62], %122 {strides = array<i32>} : memref<64x8xbf16, #tpu.memory_space<vmem>>, vector<64x8xbf16>,
      %124 = vector.extract_strided_slice %115 {offsets = [0, 16], sizes = [64, 8], strides = [1, 1]} : vector<64x24xf32> to vector<64x8xf32>
      %125 = arith.truncf %124 : vector<64x8xf32> to vector<64x8xbf16>
      %c0_63 = arith.constant 0 : index
      %c0_64 = arith.constant 0 : index
      %126 = vector.load %arg19[%c0_63, %c0_64] : memref<64x8xbf16, #tpu.memory_space<vmem>>, vector<64x8xbf16>
      tpu.vector_store %arg19[%c0_63, %c0_64], %125 {strides = array<i32>} : memref<64x8xbf16, #tpu.memory_space<vmem>>, vector<64x8xbf16>,
    } else {
    }
    %c64_i32 = arith.constant 64 : i32
    %3 = arith.muli %arg1, %c64_i32 : i32
    %4 = tpu.assume_multiple %3, 64 : i32
    %c0 = arith.constant 0 : index
    %c0_1 = arith.constant 0 : index
    %c0_2 = arith.constant 0 : index
    %5 = vector.load %arg3[%c0, %c0_1, %c0_2] : memref<1x64x8xf32, #tpu.memory_space<vmem>>, vector<1x64x8xf32>
    %6 = vector.shape_cast %5 : vector<1x64x8xf32> to vector<64x8xf32>
    %7 = arith.index_cast %4 : i32 to index
    %c0_3 = arith.constant 0 : index
    %8 = vector.load %arg17[%7, %c0_3] : memref<64x8xbf16, #tpu.memory_space<vmem>>, vector<64x8xbf16>
    %9 = vector.shape_cast %8 : vector<64x8xbf16> to vector<64x4x2xbf16>
    %c0_4 = arith.constant 0 : index
    %c0_5 = arith.constant 0 : index
    %10 = vector.load %arg18[%c0_4, %c0_5] : memref<64x8xbf16, #tpu.memory_space<vmem>>, vector<64x8xbf16>
    %11 = vector.shape_cast %10 : vector<64x8xbf16> to vector<64x4x2xbf16>
    %c0_6 = arith.constant 0 : index
    %c0_7 = arith.constant 0 : index
    %12 = vector.load %arg19[%c0_6, %c0_7] : memref<64x8xbf16, #tpu.memory_space<vmem>>, vector<64x8xbf16>
    %13 = vector.shape_cast %12 : vector<64x8xbf16> to vector<64x4x2xbf16>
    "tpu.trace_start"() <{level = 10 : i32, message = "qhd,khd->hqk"}> : () -> ()
    %cst = arith.constant dense<0.000000e+00> : vector<4x64x64xf32>
    %14 = tpu.matmul %9, %11, %cst {dimension_numbers = #tpu.dot_dimension_numbers<[2], [2], [0], [0], [0, 1, 0, 0, 1, 0], [1], [1]>} : vector<64x4x2xbf16>, vector<64x4x2xbf16>, vector<4x64x64xf32> -> vector<4x64x64xf32>
    "tpu.trace_stop"() : () -> ()
    %cst_8 = arith.constant dense<0xFF800000> : vector<4x64xf32>
    %15 = vector.multi_reduction <maximumf>, %14, %cst_8 [2] : vector<4x64x64xf32> to vector<4x64xf32>
    %16 = vector.shape_cast %15 : vector<4x64xf32> to vector<4x64x1xf32>
    %17 = vector.broadcast %16 : vector<4x64x1xf32> to vector<4x64x64xf32>
    %18 = arith.subf %14, %17 : vector<4x64x64xf32>
    %19 = math.exp %18 : vector<4x64x64xf32>
    %cst_9 = arith.constant dense<0.000000e+00> : vector<4x64xf32>
    %20 = vector.multi_reduction <add>, %19, %cst_9 [2] : vector<4x64x64xf32> to vector<4x64xf32>
    %21 = vector.shape_cast %20 : vector<4x64xf32> to vector<4x64x1xf32>
    %22 = tpu.reciprocal %21 {approx = true} : vector<4x64x1xf32> -> vector<4x64x1xf32>
    %23 = vector.broadcast %22 : vector<4x64x1xf32> to vector<4x64x64xf32>
    %24 = arith.mulf %19, %23 : vector<4x64x64xf32>
    %25 = arith.truncf %24 : vector<4x64x64xf32> to vector<4x64x64xbf16>
    "tpu.trace_start"() <{level = 10 : i32, message = "hqk,khd->qhd"}> : () -> ()
    %cst_10 = arith.constant dense<0.000000e+00> : vector<4x2x64xf32>
    %26 = tpu.matmul %13, %25, %cst_10 {dimension_numbers = #tpu.dot_dimension_numbers<[0], [2], [2], [1], [0, 1, 0, 2, 1, 1], [1], [0]>} : vector<64x4x2xbf16>, vector<4x64x64xbf16>, vector<4x2x64xf32> -> vector<4x2x64xf32>
    %27 = tpu.transpose %26, [2, 0, 1] : vector<4x2x64xf32> -> vector<64x4x2xf32>
    "tpu.trace_stop"() : () -> ()
    %28 = vector.shape_cast %27 : vector<64x4x2xf32> to vector<64x8xf32>
    %29 = arith.truncf %28 : vector<64x8xf32> to vector<64x8xbf16>
    %c0_11 = arith.constant 0 : index
    %c0_12 = arith.constant 0 : index
    %30 = vector.load %arg8[%c0_11, %c0_12] : memref<8x8xbf16, #tpu.memory_space<vmem>>, vector<8x8xbf16>
    %cst_13 = arith.constant dense<0.000000e+00> : vector<64x8xf32>
    %31 = tpu.matmul %29, %30, %cst_13 {dimension_numbers = #tpu.dot_dimension_numbers<[1], [0], [0], [1], [0, 0, 1, 1], [], []>} : vector<64x8xbf16>, vector<8x8xbf16>, vector<64x8xf32> -> vector<64x8xf32>
    %c0_14 = arith.constant 0 : index
    %c0_15 = arith.constant 0 : index
    %32 = vector.load %arg9[%c0_14, %c0_15] : memref<1x8xf32, #tpu.memory_space<vmem>>, vector<1x8xf32>
    %33 = vector.broadcast %32 : vector<1x8xf32> to vector<64x8xf32>
    %34 = arith.addf %31, %33 : vector<64x8xf32>
    %35 = arith.addf %34, %6 : vector<64x8xf32>
    %c0_16 = arith.constant 0 : index
    %c0_17 = arith.constant 0 : index
    %36 = vector.load %arg10[%c0_16, %c0_17] : memref<1x8xf32, #tpu.memory_space<vmem>>, vector<1x8xf32>
    %c0_18 = arith.constant 0 : index
    %c0_19 = arith.constant 0 : index
    %37 = vector.load %arg11[%c0_18, %c0_19] : memref<1x8xf32, #tpu.memory_space<vmem>>, vector<1x8xf32>
    %cst_20 = arith.constant dense<0.000000e+00> : vector<64xf32>
    %38 = vector.multi_reduction <add>, %35, %cst_20 [1] : vector<64x8xf32> to vector<64xf32>
    %39 = vector.shape_cast %38 : vector<64xf32> to vector<64x1xf32>
    %cst_21 = arith.constant 8.000000e+00 : f32
    %40 = vector.broadcast %cst_21 : f32 to vector<64x1xf32>
    %41 = arith.divf %39, %40 : vector<64x1xf32>
    %42 = vector.broadcast %41 : vector<64x1xf32> to vector<64x8xf32>
    %43 = arith.subf %35, %42 : vector<64x8xf32>
    %44 = arith.mulf %43, %43 : vector<64x8xf32>
    %cst_22 = arith.constant dense<0.000000e+00> : vector<64xf32>
    %45 = vector.multi_reduction <add>, %44, %cst_22 [1] : vector<64x8xf32> to vector<64xf32>
    %46 = vector.shape_cast %45 : vector<64xf32> to vector<64x1xf32>
    %cst_23 = arith.constant 8.000000e+00 : f32
    %47 = vector.broadcast %cst_23 : f32 to vector<64x1xf32>
    %48 = arith.divf %46, %47 : vector<64x1xf32>
    %49 = vector.broadcast %41 : vector<64x1xf32> to vector<64x8xf32>
    %50 = arith.subf %35, %49 : vector<64x8xf32>
    %cst_24 = arith.constant 9.99999974E-6 : f32
    %51 = vector.broadcast %cst_24 : f32 to vector<64x1xf32>
    %52 = arith.addf %48, %51 : vector<64x1xf32>
    %53 = math.rsqrt %52 : vector<64x1xf32>
    %54 = vector.broadcast %53 : vector<64x1xf32> to vector<64x8xf32>
    %55 = arith.mulf %50, %54 : vector<64x8xf32>
    %56 = vector.broadcast %36 : vector<1x8xf32> to vector<64x8xf32>
    %57 = arith.mulf %55, %56 : vector<64x8xf32>
    %58 = vector.broadcast %37 : vector<1x8xf32> to vector<64x8xf32>
    %59 = arith.addf %57, %58 : vector<64x8xf32>
    %60 = arith.truncf %59 : vector<64x8xf32> to vector<64x8xbf16>
    %c0_25 = arith.constant 0 : index
    %c0_26 = arith.constant 0 : index
    %61 = vector.load %arg12[%c0_25, %c0_26] : memref<8x8xbf16, #tpu.memory_space<vmem>>, vector<8x8xbf16>
    %cst_27 = arith.constant dense<0.000000e+00> : vector<64x8xf32>
    %62 = tpu.matmul %60, %61, %cst_27 {dimension_numbers = #tpu.dot_dimension_numbers<[1], [0], [0], [1], [0, 0, 1, 1], [], []>} : vector<64x8xbf16>, vector<8x8xbf16>, vector<64x8xf32> -> vector<64x8xf32>
    %c0_28 = arith.constant 0 : index
    %c0_29 = arith.constant 0 : index
    %63 = vector.load %arg13[%c0_28, %c0_29] : memref<1x8xf32, #tpu.memory_space<vmem>>, vector<1x8xf32>
    %64 = vector.broadcast %63 : vector<1x8xf32> to vector<64x8xf32>
    %65 = arith.addf %62, %64 : vector<64x8xf32>
    %cst_30 = arith.constant 5.000000e-01 : f32
    %66 = vector.broadcast %cst_30 : f32 to vector<64x8xf32>
    %67 = arith.mulf %66, %65 : vector<64x8xf32>
    %cst_31 = arith.constant 0.707106769 : f32
    %68 = vector.broadcast %cst_31 : f32 to vector<64x8xf32>
    %69 = arith.mulf %65, %68 : vector<64x8xf32>
    %70 = math.erf %69 : vector<64x8xf32>
    %cst_32 = arith.constant 1.000000e+00 : f32
    %71 = vector.broadcast %cst_32 : f32 to vector<64x8xf32>
    %72 = arith.addf %71, %70 : vector<64x8xf32>
    %73 = arith.mulf %67, %72 : vector<64x8xf32>
    %74 = arith.truncf %73 : vector<64x8xf32> to vector<64x8xbf16>
    %c0_33 = arith.constant 0 : index
    %c0_34 = arith.constant 0 : index
    %75 = vector.load %arg14[%c0_33, %c0_34] : memref<8x8xbf16, #tpu.memory_space<vmem>>, vector<8x8xbf16>
    %cst_35 = arith.constant dense<0.000000e+00> : vector<64x8xf32>
    %76 = tpu.matmul %74, %75, %cst_35 {dimension_numbers = #tpu.dot_dimension_numbers<[1], [0], [0], [1], [0, 0, 1, 1], [], []>} : vector<64x8xbf16>, vector<8x8xbf16>, vector<64x8xf32> -> vector<64x8xf32>
    %c0_36 = arith.constant 0 : index
    %c0_37 = arith.constant 0 : index
    %77 = vector.load %arg15[%c0_36, %c0_37] : memref<1x8xf32, #tpu.memory_space<vmem>>, vector<1x8xf32>
    %78 = vector.broadcast %77 : vector<1x8xf32> to vector<64x8xf32>
    %79 = arith.addf %76, %78 : vector<64x8xf32>
    %80 = arith.addf %79, %35 : vector<64x8xf32>
    %c0_38 = arith.constant 0 : index
    %c0_39 = arith.constant 0 : index
    %c0_40 = arith.constant 0 : index
    %81 = vector.load %arg16[%c0_38, %c0_39, %c0_40] : memref<1x64x8xf32, #tpu.memory_space<vmem>>, vector<1x64x8xf32>
    %82 = vector.shape_cast %81 : vector<1x64x8xf32> to vector<64x8xf32>
    %83 = vector.shape_cast %80 : vector<64x8xf32> to vector<1x64x8xf32>
    tpu.vector_store %arg16[%c0_38, %c0_39, %c0_40], %83 {strides = array<i32>} : memref<1x64x8xf32, #tpu.memory_space<vmem>>, vector<1x64x8xf32>,
    return
  }
  func.func @transform_0(%arg0: i32, %arg1: i32) -> (i32, i32, i32) {
    %c0_i32 = arith.constant 0 : i32
    %c0_i32_0 = arith.constant 0 : i32
    %c0_i32_1 = arith.constant 0 : i32
    return %arg0, %c0_i32, %c0_i32_0 : i32, i32, i32
  }
  func.func @transform_1(%arg0: i32, %arg1: i32) -> (i32, i32, i32) {
    %c0_i32 = arith.constant 0 : i32
    %c0_i32_0 = arith.constant 0 : i32
    return %arg0, %arg1, %c0_i32 : i32, i32, i32
  }
  func.func @transform_2(%arg0: i32, %arg1: i32) -> (i32, i32) {
    %c0_i32 = arith.constant 0 : i32
    %c0_i32_0 = arith.constant 0 : i32
    %c0_i32_1 = arith.constant 0 : i32
    return %c0_i32, %c0_i32_0 : i32, i32
  }
  func.func @transform_3(%arg0: i32, %arg1: i32) -> (i32, i32) {
    %c0_i32 = arith.constant 0 : i32
    %c0_i32_0 = arith.constant 0 : i32
    %c0_i32_1 = arith.constant 0 : i32
    return %c0_i32, %c0_i32_0 : i32, i32
  }
  func.func @transform_4(%arg0: i32, %arg1: i32) -> (i32, i32) {
    %c0_i32 = arith.constant 0 : i32
    %c0_i32_0 = arith.constant 0 : i32
    %c0_i32_1 = arith.constant 0 : i32
    return %c0_i32, %c0_i32_0 : i32, i32
  }
  func.func @transform_5(%arg0: i32, %arg1: i32) -> (i32, i32) {
    %c0_i32 = arith.constant 0 : i32
    %c0_i32_0 = arith.constant 0 : i32
    %c0_i32_1 = arith.constant 0 : i32
    return %c0_i32, %c0_i32_0 : i32, i32
  }
  func.func @transform_6(%arg0: i32, %arg1: i32) -> (i32, i32) {
    %c0_i32 = arith.constant 0 : i32
    %c0_i32_0 = arith.constant 0 : i32
    %c0_i32_1 = arith.constant 0 : i32
    return %c0_i32, %c0_i32_0 : i32, i32
  }
  func.func @transform_7(%arg0: i32, %arg1: i32) -> (i32, i32) {
    %c0_i32 = arith.constant 0 : i32
    %c0_i32_0 = arith.constant 0 : i32
    %c0_i32_1 = arith.constant 0 : i32
    return %c0_i32, %c0_i32_0 : i32, i32
  }
  func.func @transform_8(%arg0: i32, %arg1: i32) -> (i32, i32) {
    %c0_i32 = arith.constant 0 : i32
    %c0_i32_0 = arith.constant 0 : i32
    %c0_i32_1 = arith.constant 0 : i32
    return %c0_i32, %c0_i32_0 : i32, i32
  }
  func.func @transform_9(%arg0: i32, %arg1: i32) -> (i32, i32) {
    %c0_i32 = arith.constant 0 : i32
    %c0_i32_0 = arith.constant 0 : i32
    %c0_i32_1 = arith.constant 0 : i32
    return %c0_i32, %c0_i32_0 : i32, i32
  }
  func.func @transform_10(%arg0: i32, %arg1: i32) -> (i32, i32) {
    %c0_i32 = arith.constant 0 : i32
    %c0_i32_0 = arith.constant 0 : i32
    %c0_i32_1 = arith.constant 0 : i32
    return %c0_i32, %c0_i32_0 : i32, i32
  }
  func.func @transform_11(%arg0: i32, %arg1: i32) -> (i32, i32) {
    %c0_i32 = arith.constant 0 : i32
    %c0_i32_0 = arith.constant 0 : i32
    %c0_i32_1 = arith.constant 0 : i32
    return %c0_i32, %c0_i32_0 : i32, i32
  }
  func.func @transform_12(%arg0: i32, %arg1: i32) -> (i32, i32) {
    %c0_i32 = arith.constant 0 : i32
    %c0_i32_0 = arith.constant 0 : i32
    %c0_i32_1 = arith.constant 0 : i32
    return %c0_i32, %c0_i32_0 : i32, i32
  }
  func.func @transform_13(%arg0: i32, %arg1: i32) -> (i32, i32) {
    %c0_i32 = arith.constant 0 : i32
    %c0_i32_0 = arith.constant 0 : i32
    %c0_i32_1 = arith.constant 0 : i32
    return %c0_i32, %c0_i32_0 : i32, i32
  }
  func.func @transform_14(%arg0: i32, %arg1: i32) -> (i32, i32, i32) {
    %c0_i32 = arith.constant 0 : i32
    %c0_i32_0 = arith.constant 0 : i32
    return %arg0, %arg1, %c0_i32 : i32, i32, i32
  }
}

</mosaic_0001>

<llo_original>
// kernel: tpu_custom_call.1
$region0: #{tpu_custom_call.1}
  #allocation0 [shape = 'u32[]', space=smem, size = 0x4, offset = 0x4, fixed_abs, tag = 'smem constant byte address 0x4 - core index']
  #allocation1 [shape = 'u32[144,128]{1,0:T(1,128)}', space=vmem, size = 0x12000, scoped, tag = 'internal scratch']
  #allocation2 [shape = 'bf16[64,8]{1,0:T(16,128)(2,1)}', space=vmem, size = 0x4000, scoped, tag = 'scratch operand']
  #allocation3 [shape = 'bf16[64,8]{1,0:T(16,128)(2,1)}', space=vmem, size = 0x4000, scoped, tag = 'scratch operand']
  #allocation4 [shape = 'bf16[64,8]{1,0:T(16,128)(2,1)}', space=vmem, size = 0x4000, scoped, tag = 'scratch operand']
  %s0 = inlined_call_operand.vmem [shape: f32[2,64,8], index: 0, kind: input, shape index: {}]
  %s1 = inlined_call_operand.vmem [shape: f32[2,64,8], index: 1, kind: input, shape index: {}]
  %s2 = inlined_call_operand.vmem [shape: f32[1,8], index: 2, kind: input, shape index: {}]
  %s3 = inlined_call_operand.vmem [shape: f32[1,8], index: 3, kind: input, shape index: {}]
  %s4 = inlined_call_operand.vmem [shape: bf16[8,24], index: 4, kind: input, shape index: {}]
  %s5 = inlined_call_operand.vmem [shape: f32[1,24], index: 5, kind: input, shape index: {}]
  %s6 = inlined_call_operand.vmem [shape: bf16[8,8], index: 6, kind: input, shape index: {}]
  %s7 = inlined_call_operand.vmem [shape: f32[1,8], index: 7, kind: input, shape index: {}]
  %s8 = inlined_call_operand.vmem [shape: f32[1,8], index: 8, kind: input, shape index: {}]
  %s9 = inlined_call_operand.vmem [shape: f32[1,8], index: 9, kind: input, shape index: {}]
  %s10 = inlined_call_operand.vmem [shape: bf16[8,8], index: 10, kind: input, shape index: {}]
  %s11 = inlined_call_operand.vmem [shape: f32[1,8], index: 11, kind: input, shape index: {}]
  %s12 = inlined_call_operand.vmem [shape: bf16[8,8], index: 12, kind: input, shape index: {}]
  %s13 = inlined_call_operand.vmem [shape: f32[1,8], index: 13, kind: input, shape index: {}]
  %s14 = inlined_call_operand.vmem [shape: f32[2,64,8], index: 14, kind: output, shape index: {}]
  %s15 = sld [smem:[#allocation0]]
  $region93: #{tpu_custom_call.1} parent=0
    _
  %s17 = ssub.s32 1, %s15
  %s18 = scalar_select 0, %s17, %s15
  loop: start=0, step=1, limit=4
  $region2: #{tpu_custom_call.1} parent=0 // loop_pre_header
    _
  $region3: #{tpu_custom_call.1} parent=0 // loop_header
    %s20 = sphi 0, %s24
    %p21 = scmp.ge.s32.totalorder %s20, 4
    %s27 = sphi 0, %s39
    %s28 = sphi 0, %s35
    %s29 = sphi 0, %s27
    %s30 = sphi 0, %s28
    %s31 = sphi 0, %s29
    %s32 = sphi 0, %s30
    %s42 = sphi 0, %s44
    %s45 = sphi 0, %s42
    %s46 = sphi 0, %s45
    %s62 = sphi 0, %s46
    %s70 = sphi 0, %s72
    %s73 = sphi 0, %s70
    %s74 = sphi 0, %s73
    %s90 = sphi 0, %s74
    %s94 = sphi 0, %s94
    %s96 = sphi 0, %s94
    %s97 = sphi 0, %s96
    %s111 = sphi 0, %s97
    %s115 = sphi 0, %s115
    %s117 = sphi 0, %s115
    %s118 = sphi 0, %s117
    %s132 = sphi 0, %s118
    %s136 = sphi 0, %s136
    %s138 = sphi 0, %s136
    %s139 = sphi 0, %s138
    %s153 = sphi 0, %s139
    %s157 = sphi 0, %s157
    %s159 = sphi 0, %s157
    %s160 = sphi 0, %s159
    %s174 = sphi 0, %s160
    %s178 = sphi 0, %s178
    %s180 = sphi 0, %s178
    %s181 = sphi 0, %s180
    %s195 = sphi 0, %s181
    %s199 = sphi 0, %s199
    %s201 = sphi 0, %s199
    %s202 = sphi 0, %s201
    %s216 = sphi 0, %s202
    %s220 = sphi 0, %s220
    %s222 = sphi 0, %s220
    %s223 = sphi 0, %s222
    %s237 = sphi 0, %s223
    %s241 = sphi 0, %s241
    %s243 = sphi 0, %s241
    %s244 = sphi 0, %s243
    %s258 = sphi 0, %s244
    %s262 = sphi 0, %s262
    %s264 = sphi 0, %s262
    %s265 = sphi 0, %s264
    %s279 = sphi 0, %s265
    %s283 = sphi 0, %s283
    %s285 = sphi 0, %s283
    %s286 = sphi 0, %s285
    %s300 = sphi 0, %s286
    %s304 = sphi 0, %s304
    %s306 = sphi 0, %s304
    %s307 = sphi 0, %s306
    %s321 = sphi 0, %s307
    %s325 = sphi 0, %s325
    %s327 = sphi 0, %s325
    %s328 = sphi 0, %s327
    %s342 = sphi 0, %s328
    %s350 = sphi 0, %s352
    %s353 = sphi 0, %s350
    %s354 = sphi 0, %s353
    %s370 = sphi 0, %s354
  $region4: #{tpu_custom_call.1} parent=0 // loop_header_branch
    %23 = sbr.rel (%p21) target = $region8
  $region5: #{tpu_custom_call.1} parent=0 // loop_body
    %s25 = ssub.s32 %s20, 1
    %s26 = ssub.s32 %s20, 2
    %s33 = sadd.s32 1, %s28
    %p34 = scmp.ge.s32.totalorder %s33, 1
    %s35 = scalar_select %p34, 0, %s33
    %s36 = sadd.s32 1, %s27
    %s37 = scalar_select %p34, %s36, %s27
    %p38 = scmp.ge.s32.totalorder %s37, 2
    %s39 = scalar_select %p38, 0, %s37
    %s40 = ssub.s32 %s27, %s39
    %p41 = scmp.eq.s32.totalorder %s40, 0
    %s43 = sadd.s32 %s42, 1
    %s44 = scalar_select %p41, %s42, %s43
    %p47 = pneg %p41
    %p48 = scmp.eq.s32.totalorder %s20, 1
    %p49 = por %p47, %p48
    %p50 = scmp.ne.s32.totalorder %s42, %s45
    %p51 = scmp.eq.s32.totalorder %s20, 0
    %p52 = por %p50, %p51
    %p53 = scmp.ne.s32.totalorder %s42, %s45
    %p54 = scmp.eq.s32.totalorder %s25, 1
    %p55 = por %p53, %p54
    %p56 = scmp.ne.s32.totalorder %s45, %s46
    %p57 = scmp.eq.s32.totalorder %s25, 0
    %p58 = por %p56, %p57
    %p59 = scmp.ne.s32.totalorder %s45, %s46
    %p60 = scmp.eq.s32.totalorder %s26, 1
    %p61 = por %p59, %p60
    %p63 = scmp.ne.s32.totalorder %s46, %s62
    %p64 = scmp.eq.s32.totalorder %s26, 0
    %p65 = por %p63, %p64
    %s66 = ssub.s32 %s27, %s39
    %s67 = ssub.s32 %s28, %s35
    %s68 = sor.u32 %s66, %s67
    %p69 = scmp.eq.s32.totalorder %s68, 0
    %s71 = sadd.s32 %s70, 1
    %s72 = scalar_select %p69, %s70, %s71
    %p75 = pneg %p69
    %p76 = scmp.eq.s32.totalorder %s20, 1
    %p77 = por %p75, %p76
    %p78 = scmp.ne.s32.totalorder %s70, %s73
    %p79 = scmp.eq.s32.totalorder %s20, 0
    %p80 = por %p78, %p79
    %p81 = scmp.ne.s32.totalorder %s70, %s73
    %p82 = scmp.eq.s32.totalorder %s25, 1
    %p83 = por %p81, %p82
    %p84 = scmp.ne.s32.totalorder %s73, %s74
    %p85 = scmp.eq.s32.totalorder %s25, 0
    %p86 = por %p84, %p85
    %p87 = scmp.ne.s32.totalorder %s73, %s74
    %p88 = scmp.eq.s32.totalorder %s26, 1
    %p89 = por %p87, %p88
    %p91 = scmp.ne.s32.totalorder %s74, %s90
    %p92 = scmp.eq.s32.totalorder %s26, 0
    %p93 = por %p91, %p92
    %s95 = sadd.s32 %s94, 1
    %p98 = scmp.eq.s32.totalorder %s20, 1
    %p99 = scmp.ne.s32.totalorder %s94, %s96
    %p100 = scmp.eq.s32.totalorder %s20, 0
    %p101 = por %p99, %p100
    %p102 = scmp.ne.s32.totalorder %s94, %s96
    %p103 = scmp.eq.s32.totalorder %s25, 1
    %p104 = por %p102, %p103
    %p105 = scmp.ne.s32.totalorder %s96, %s97
    %p106 = scmp.eq.s32.totalorder %s25, 0
    %p107 = por %p105, %p106
    %p108 = scmp.ne.s32.totalorder %s96, %s97
    %p109 = scmp.eq.s32.totalorder %s26, 1
    %p110 = por %p108, %p109
    %p112 = scmp.ne.s32.totalorder %s97, %s111
    %p113 = scmp.eq.s32.totalorder %s26, 0
    %p114 = por %p112, %p113
    %s116 = sadd.s32 %s115, 1
    %p119 = scmp.eq.s32.totalorder %s20, 1
    %p120 = scmp.ne.s32.totalorder %s115, %s117
    %p121 = scmp.eq.s32.totalorder %s20, 0
    %p122 = por %p120, %p121
    %p123 = scmp.ne.s32.totalorder %s115, %s117
    %p124 = scmp.eq.s32.totalorder %s25, 1
    %p125 = por %p123, %p124
    %p126 = scmp.ne.s32.totalorder %s117, %s118
    %p127 = scmp.eq.s32.totalorder %s25, 0
    %p128 = por %p126, %p127
    %p129 = scmp.ne.s32.totalorder %s117, %s118
    %p130 = scmp.eq.s32.totalorder %s26, 1
    %p131 = por %p129, %p130
    %p133 = scmp.ne.s32.totalorder %s118, %s132
    %p134 = scmp.eq.s32.totalorder %s26, 0
    %p135 = por %p133, %p134
    %s137 = sadd.s32 %s136, 1
    %p140 = scmp.eq.s32.totalorder %s20, 1
    %p141 = scmp.ne.s32.totalorder %s136, %s138
    %p142 = scmp.eq.s32.totalorder %s20, 0
    %p143 = por %p141, %p142
    %p144 = scmp.ne.s32.totalorder %s136, %s138
    %p145 = scmp.eq.s32.totalorder %s25, 1
    %p146 = por %p144, %p145
    %p147 = scmp.ne.s32.totalorder %s138, %s139
    %p148 = scmp.eq.s32.totalorder %s25, 0
    %p149 = por %p147, %p148
    %p150 = scmp.ne.s32.totalorder %s138, %s139
    %p151 = scmp.eq.s32.totalorder %s26, 1
    %p152 = por %p150, %p151
    %p154 = scmp.ne.s32.totalorder %s139, %s153
    %p155 = scmp.eq.s32.totalorder %s26, 0
    %p156 = por %p154, %p155
    %s158 = sadd.s32 %s157, 1
    %p161 = scmp.eq.s32.totalorder %s20, 1
    %p162 = scmp.ne.s32.totalorder %s157, %s159
    %p163 = scmp.eq.s32.totalorder %s20, 0
    %p164 = por %p162, %p163
    %p165 = scmp.ne.s32.totalorder %s157, %s159
    %p166 = scmp.eq.s32.totalorder %s25, 1
    %p167 = por %p165, %p166
    %p168 = scmp.ne.s32.totalorder %s159, %s160
    %p169 = scmp.eq.s32.totalorder %s25, 0
    %p170 = por %p168, %p169
    %p171 = scmp.ne.s32.totalorder %s159, %s160
    %p172 = scmp.eq.s32.totalorder %s26, 1
    %p173 = por %p171, %p172
    %p175 = scmp.ne.s32.totalorder %s160, %s174
    %p176 = scmp.eq.s32.totalorder %s26, 0
    %p177 = por %p175, %p176
    %s179 = sadd.s32 %s178, 1
    %p182 = scmp.eq.s32.totalorder %s20, 1
    %p183 = scmp.ne.s32.totalorder %s178, %s180
    %p184 = scmp.eq.s32.totalorder %s20, 0
    %p185 = por %p183, %p184
    %p186 = scmp.ne.s32.totalorder %s178, %s180
    %p187 = scmp.eq.s32.totalorder %s25, 1
    %p188 = por %p186, %p187
    %p189 = scmp.ne.s32.totalorder %s180, %s181
    %p190 = scmp.eq.s32.totalorder %s25, 0
    %p191 = por %p189, %p190
    %p192 = scmp.ne.s32.totalorder %s180, %s181
    %p193 = scmp.eq.s32.totalorder %s26, 1
    %p194 = por %p192, %p193
    %p196 = scmp.ne.s32.totalorder %s181, %s195
    %p197 = scmp.eq.s32.totalorder %s26, 0
    %p198 = por %p196, %p197
    %s200 = sadd.s32 %s199, 1
    %p203 = scmp.eq.s32.totalorder %s20, 1
    %p204 = scmp.ne.s32.totalorder %s199, %s201
    %p205 = scmp.eq.s32.totalorder %s20, 0
    %p206 = por %p204, %p205
    %p207 = scmp.ne.s32.totalorder %s199, %s201
    %p208 = scmp.eq.s32.totalorder %s25, 1
    %p209 = por %p207, %p208
    %p210 = scmp.ne.s32.totalorder %s201, %s202
    %p211 = scmp.eq.s32.totalorder %s25, 0
    %p212 = por %p210, %p211
    %p213 = scmp.ne.s32.totalorder %s201, %s202
    %p214 = scmp.eq.s32.totalorder %s26, 1
    %p215 = por %p213, %p214
    %p217 = scmp.ne.s32.totalorder %s202, %s216
    %p218 = scmp.eq.s32.totalorder %s26, 0
    %p219 = por %p217, %p218
    %s221 = sadd.s32 %s220, 1
    %p224 = scmp.eq.s32.totalorder %s20, 1
    %p225 = scmp.ne.s32.totalorder %s220, %s222
    %p226 = scmp.eq.s32.totalorder %s20, 0
    %p227 = por %p225, %p226
    %p228 = scmp.ne.s32.totalorder %s220, %s222
    %p229 = scmp.eq.s32.totalorder %s25, 1
    %p230 = por %p228, %p229
    %p231 = scmp.ne.s32.totalorder %s222, %s223
    %p232 = scmp.eq.s32.totalorder %s25, 0
    %p233 = por %p231, %p232
    %p234 = scmp.ne.s32.totalorder %s222, %s223
    %p235 = scmp.eq.s32.totalorder %s26, 1
    %p236 = por %p234, %p235
    %p238 = scmp.ne.s32.totalorder %s223, %s237
    %p239 = scmp.eq.s32.totalorder %s26, 0
    %p240 = por %p238, %p239
    %s242 = sadd.s32 %s241, 1
    %p245 = scmp.eq.s32.totalorder %s20, 1
    %p246 = scmp.ne.s32.totalorder %s241, %s243
    %p247 = scmp.eq.s32.totalorder %s20, 0
    %p248 = por %p246, %p247
    %p249 = scmp.ne.s32.totalorder %s241, %s243
    %p250 = scmp.eq.s32.totalorder %s25, 1
    %p251 = por %p249, %p250
    %p252 = scmp.ne.s32.totalorder %s243, %s244
    %p253 = scmp.eq.s32.totalorder %s25, 0
    %p254 = por %p252, %p253
    %p255 = scmp.ne.s32.totalorder %s243, %s244
    %p256 = scmp.eq.s32.totalorder %s26, 1
    %p257 = por %p255, %p256
    %p259 = scmp.ne.s32.totalorder %s244, %s258
    %p260 = scmp.eq.s32.totalorder %s26, 0
    %p261 = por %p259, %p260
    %s263 = sadd.s32 %s262, 1
    %p266 = scmp.eq.s32.totalorder %s20, 1
    %p267 = scmp.ne.s32.totalorder %s262, %s264
    %p268 = scmp.eq.s32.totalorder %s20, 0
    %p269 = por %p267, %p268
    %p270 = scmp.ne.s32.totalorder %s262, %s264
    %p271 = scmp.eq.s32.totalorder %s25, 1
    %p272 = por %p270, %p271
    %p273 = scmp.ne.s32.totalorder %s264, %s265
    %p274 = scmp.eq.s32.totalorder %s25, 0
    %p275 = por %p273, %p274
    %p276 = scmp.ne.s32.totalorder %s264, %s265
    %p277 = scmp.eq.s32.totalorder %s26, 1
    %p278 = por %p276, %p277
    %p280 = scmp.ne.s32.totalorder %s265, %s279
    %p281 = scmp.eq.s32.totalorder %s26, 0
    %p282 = por %p280, %p281
    %s284 = sadd.s32 %s283, 1
    %p287 = scmp.eq.s32.totalorder %s20, 1
    %p288 = scmp.ne.s32.totalorder %s283, %s285
    %p289 = scmp.eq.s32.totalorder %s20, 0
    %p290 = por %p288, %p289
    %p291 = scmp.ne.s32.totalorder %s283, %s285
    %p292 = scmp.eq.s32.totalorder %s25, 1
    %p293 = por %p291, %p292
    %p294 = scmp.ne.s32.totalorder %s285, %s286
    %p295 = scmp.eq.s32.totalorder %s25, 0
    %p296 = por %p294, %p295
    %p297 = scmp.ne.s32.totalorder %s285, %s286
    %p298 = scmp.eq.s32.totalorder %s26, 1
    %p299 = por %p297, %p298
    %p301 = scmp.ne.s32.totalorder %s286, %s300
    %p302 = scmp.eq.s32.totalorder %s26, 0
    %p303 = por %p301, %p302
    %s305 = sadd.s32 %s304, 1
    %p308 = scmp.eq.s32.totalorder %s20, 1
    %p309 = scmp.ne.s32.totalorder %s304, %s306
    %p310 = scmp.eq.s32.totalorder %s20, 0
    %p311 = por %p309, %p310
    %p312 = scmp.ne.s32.totalorder %s304, %s306
    %p313 = scmp.eq.s32.totalorder %s25, 1
    %p314 = por %p312, %p313
    %p315 = scmp.ne.s32.totalorder %s306, %s307
    %p316 = scmp.eq.s32.totalorder %s25, 0
    %p317 = por %p315, %p316
    %p318 = scmp.ne.s32.totalorder %s306, %s307
    %p319 = scmp.eq.s32.totalorder %s26, 1
    %p320 = por %p318, %p319
    %p322 = scmp.ne.s32.totalorder %s307, %s321
    %p323 = scmp.eq.s32.totalorder %s26, 0
    %p324 = por %p322, %p323
    %s326 = sadd.s32 %s325, 1
    %p329 = scmp.eq.s32.totalorder %s20, 1
    %p330 = scmp.ne.s32.totalorder %s325, %s327
    %p331 = scmp.eq.s32.totalorder %s20, 0
    %p332 = por %p330, %p331
    %p333 = scmp.ne.s32.totalorder %s325, %s327
    %p334 = scmp.eq.s32.totalorder %s25, 1
    %p335 = por %p333, %p334
    %p336 = scmp.ne.s32.totalorder %s327, %s328
    %p337 = scmp.eq.s32.totalorder %s25, 0
    %p338 = por %p336, %p337
    %p339 = scmp.ne.s32.totalorder %s327, %s328
    %p340 = scmp.eq.s32.totalorder %s26, 1
    %p341 = por %p339, %p340
    %p343 = scmp.ne.s32.totalorder %s328, %s342
    %p344 = scmp.eq.s32.totalorder %s26, 0
    %p345 = por %p343, %p344
    %s346 = ssub.s32 %s27, %s39
    %s347 = ssub.s32 %s28, %s35
    %s348 = sor.u32 %s346, %s347
    %p349 = scmp.eq.s32.totalorder %s348, 0
    %s351 = sadd.s32 %s350, 1
    %s352 = scalar_select %p349, %s350, %s351
    %p355 = pneg %p349
    %p356 = scmp.eq.s32.totalorder %s20, 1
    %p357 = por %p355, %p356
    %p358 = scmp.ne.s32.totalorder %s350, %s353
    %p359 = scmp.eq.s32.totalorder %s20, 0
    %p360 = por %p358, %p359
    %p361 = scmp.ne.s32.totalorder %s350, %s353
    %p362 = scmp.eq.s32.totalorder %s25, 1
    %p363 = por %p361, %p362
    %p364 = scmp.ne.s32.totalorder %s353, %s354
    %p365 = scmp.eq.s32.totalorder %s25, 0
    %p366 = por %p364, %p365
    %p367 = scmp.ne.s32.totalorder %s353, %s354
    %p368 = scmp.eq.s32.totalorder %s26, 1
    %p369 = por %p367, %p368
    %p371 = scmp.ne.s32.totalorder %s354, %s370
    %p372 = scmp.eq.s32.totalorder %s26, 0
    %p373 = por %p371, %p372
    %p374 = scmp.le.s32.totalorder 1, %s20
    %p375 = scmp.lt.s32.totalorder %s20, 3
    %p376 = pnand %p374, %p375
    %p377 = pneg %p376
    // Predicated region
    $region9: #{tpu_custom_call.1} parent=5 // pred_check
      _
    $region10: #{tpu_custom_call.1} parent=5 // pred_check_branch
      %379 = sbr.rel (%p376) target = $region12
    $region11: #{tpu_custom_call.1} parent=5 // pred_region
      %s380 = ssub.s32 %s20, 1
      // Predicated region
      $region13: #{tpu_custom_call.1} parent=11 // pred_check
        %p381 = pneg %p107
      $region14: #{tpu_custom_call.1} parent=11 // pred_check_branch
        %383 = sbr.rel (%p381) target = $region16
      $region15: #{tpu_custom_call.1} parent=11 // pred_region
        _
      $region16: #{tpu_custom_call.1} parent=11 // pred_fallthru
        _
      // Predicated region
      $region17: #{tpu_custom_call.1} parent=11 // pred_check
        %p384 = pneg %p128
      $region18: #{tpu_custom_call.1} parent=11 // pred_check_branch
        %386 = sbr.rel (%p384) target = $region20
      $region19: #{tpu_custom_call.1} parent=11 // pred_region
        _
      $region20: #{tpu_custom_call.1} parent=11 // pred_fallthru
        _
      // Predicated region
      $region21: #{tpu_custom_call.1} parent=11 // pred_check
        %p387 = pneg %p149
      $region22: #{tpu_custom_call.1} parent=11 // pred_check_branch
        %389 = sbr.rel (%p387) target = $region24
      $region23: #{tpu_custom_call.1} parent=11 // pred_region
        _
      $region24: #{tpu_custom_call.1} parent=11 // pred_fallthru
        _
      // Predicated region
      $region25: #{tpu_custom_call.1} parent=11 // pred_check
        %p390 = pneg %p170
      $region26: #{tpu_custom_call.1} parent=11 // pred_check_branch
        %392 = sbr.rel (%p390) target = $region28
      $region27: #{tpu_custom_call.1} parent=11 // pred_region
        _
      $region28: #{tpu_custom_call.1} parent=11 // pred_fallthru
        _
      // Predicated region
      $region29: #{tpu_custom_call.1} parent=11 // pred_check
        %p393 = pneg %p191
      $region30: #{tpu_custom_call.1} parent=11 // pred_check_branch
        %395 = sbr.rel (%p393) target = $region32
      $region31: #{tpu_custom_call.1} parent=11 // pred_region
        _
      $region32: #{tpu_custom_call.1} parent=11 // pred_fallthru
        _
      // Predicated region
      $region33: #{tpu_custom_call.1} parent=11 // pred_check
        %p396 = pneg %p212
      $region34: #{tpu_custom_call.1} parent=11 // pred_check_branch
        %398 = sbr.rel (%p396) target = $region36
      $region35: #{tpu_custom_call.1} parent=11 // pred_region
        _
      $region36: #{tpu_custom_call.1} parent=11 // pred_fallthru
        _
      // Predicated region
      $region37: #{tpu_custom_call.1} parent=11 // pred_check
        %p399 = pneg %p233
      $region38: #{tpu_custom_call.1} parent=11 // pred_check_branch
        %401 = sbr.rel (%p399) target = $region40
      $region39: #{tpu_custom_call.1} parent=11 // pred_region
        _
      $region40: #{tpu_custom_call.1} parent=11 // pred_fallthru
        _
      // Predicated region
      $region41: #{tpu_custom_call.1} parent=11 // pred_check
        %p402 = pneg %p254
      $region42: #{tpu_custom_call.1} parent=11 // pred_check_branch
        %404 = sbr.rel (%p402) target = $region44
      $region43: #{tpu_custom_call.1} parent=11 // pred_region
        _
      $region44: #{tpu_custom_call.1} parent=11 // pred_fallthru
        _
      // Predicated region
      $region45: #{tpu_custom_call.1} parent=11 // pred_check
        %p405 = pneg %p275
      $region46: #{tpu_custom_call.1} parent=11 // pred_check_branch
        %407 = sbr.rel (%p405) target = $region48
      $region47: #{tpu_custom_call.1} parent=11 // pred_region
        _
      $region48: #{tpu_custom_call.1} parent=11 // pred_fallthru
        _
      // Predicated region
      $region49: #{tpu_custom_call.1} parent=11 // pred_check
        %p408 = pneg %p296
      $region50: #{tpu_custom_call.1} parent=11 // pred_check_branch
        %410 = sbr.rel (%p408) target = $region52
      $region51: #{tpu_custom_call.1} parent=11 // pred_region
        _
      $region52: #{tpu_custom_call.1} parent=11 // pred_fallthru
        _
      // Predicated region
      $region53: #{tpu_custom_call.1} parent=11 // pred_check
        %p411 = pneg %p317
      $region54: #{tpu_custom_call.1} parent=11 // pred_check_branch
        %413 = sbr.rel (%p411) target = $region56
      $region55: #{tpu_custom_call.1} parent=11 // pred_region
        _
      $region56: #{tpu_custom_call.1} parent=11 // pred_fallthru
        _
      // Predicated region
      $region57: #{tpu_custom_call.1} parent=11 // pred_check
        %p414 = pneg %p338
      $region58: #{tpu_custom_call.1} parent=11 // pred_check_branch
        %416 = sbr.rel (%p414) target = $region60
      $region59: #{tpu_custom_call.1} parent=11 // pred_region
        _
      $region60: #{tpu_custom_call.1} parent=11 // pred_fallthru
        _
    $region12: #{tpu_custom_call.1} parent=5 // pred_fallthru
      _
    %p417 = scmp.lt.s32.totalorder %s20, 2
    // Predicated region
    $region61: #{tpu_custom_call.1} parent=5 // pred_check
      %p418 = pneg %p417
    $region62: #{tpu_custom_call.1} parent=5 // pred_check_branch
      %420 = sbr.rel (%p418) target = $region64
    $region63: #{tpu_custom_call.1} parent=5 // pred_region
      // Predicated region
      $region65: #{tpu_custom_call.1} parent=63 // pred_check
        %p421 = pneg %p52
      $region66: #{tpu_custom_call.1} parent=63 // pred_check_branch
        %423 = sbr.rel (%p421) target = $region68
      $region67: #{tpu_custom_call.1} parent=63 // pred_region
        %p424 = scmp.lt.s32.totalorder %s27, 1
        %s425 = scalar_select %p424, %s27, 1
        %s426 = smul.addr %s425, 8
        %s427 = smul.addr %s426, 8
        %s428 = scalar_lea.vmem %s0, %s427
      $region68: #{tpu_custom_call.1} parent=63 // pred_fallthru
        _
      // Predicated region
      $region69: #{tpu_custom_call.1} parent=63 // pred_check
        %p429 = pneg %p80
      $region70: #{tpu_custom_call.1} parent=63 // pred_check_branch
        %431 = sbr.rel (%p429) target = $region72
      $region71: #{tpu_custom_call.1} parent=63 // pred_region
        %s432 = smul.u32 8, %s28
        %p433 = scmp.lt.s32.totalorder %s27, 1
        %s434 = scalar_select %p433, %s27, 1
        %p435 = scmp.lt.s32.totalorder %s432, 7
        %s436 = scalar_select %p435, %s432, 7
        %s437 = smul.addr %s434, 8
        %s438 = sadd.s32 %s436, %s437
        %s439 = smul.addr %s438, 8
        %s440 = scalar_lea.vmem %s1, %s439
        %s441 = smul.u32 8, %s28
      $region72: #{tpu_custom_call.1} parent=63 // pred_fallthru
        _
    $region64: #{tpu_custom_call.1} parent=5 // pred_fallthru
      _
    %p442 = scmp.le.s32.totalorder 1, %s20
    %p443 = scmp.lt.s32.totalorder %s20, 3
    %p444 = pnand %p442, %p443
    %p445 = pneg %p444
    // Predicated region
    $region73: #{tpu_custom_call.1} parent=5 // pred_check
      _
    $region74: #{tpu_custom_call.1} parent=5 // pred_check_branch
      %447 = sbr.rel (%p444) target = $region76
    $region75: #{tpu_custom_call.1} parent=5 // pred_region
      %s448 = ssub.s32 %s20, 1
      %p449 = scmp.lt.s32.totalorder %s29, 1
      %s450 = scalar_select %p449, %s29, 1
      %s451 = smul.addr %s450, 8
      %s452 = smul.addr %s451, 8
      %s453 = scalar_lea.vmem %s0, %s452
      %p454 = pneg %p58
      %p455 = pneg %p55
      %s456 = smul.u32 8, %s30
      %p457 = scmp.lt.s32.totalorder %s29, 1
      %s458 = scalar_select %p457, %s29, 1
      %p459 = scmp.lt.s32.totalorder %s456, 7
      %s460 = scalar_select %p459, %s456, 7
      %s461 = smul.addr %s458, 8
      %s462 = sadd.s32 %s460, %s461
      %s463 = smul.addr %s462, 8
      %s464 = scalar_lea.vmem %s1, %s463
      %p465 = pneg %p86
      %p466 = pneg %p83
      %p467 = pneg %p107
      %p468 = pneg %p104
      %p469 = pneg %p128
      %p470 = pneg %p125
      %p471 = pneg %p149
      %p472 = pneg %p146
      %p473 = pneg %p170
      %p474 = pneg %p167
      %p475 = pneg %p191
      %p476 = pneg %p188
      %p477 = pneg %p212
      %p478 = pneg %p209
      %p479 = pneg %p233
      %p480 = pneg %p230
      %p481 = pneg %p254
      %p482 = pneg %p251
      %p483 = pneg %p275
      %p484 = pneg %p272
      %p485 = pneg %p296
      %p486 = pneg %p293
      %p487 = pneg %p317
      %p488 = pneg %p314
      %p489 = pneg %p338
      %p490 = pneg %p335
      %p491 = pneg %p366
      %p492 = pneg %p363
      %s493 = smul.u32 8, %s30
      %p494 = scmp.lt.s32.totalorder %s29, 1
      %s495 = scalar_select %p494, %s29, 1
      %p496 = scmp.lt.s32.totalorder %s493, 7
      %s497 = scalar_select %p496, %s493, 7
      %s498 = smul.addr %s495, 8
      %s499 = sadd.s32 %s497, %s498
      %s500 = smul.addr %s499, 8
      %s501 = scalar_lea.vmem %s14, %s500
      %p502 = scmp.lt.s32.totalorder %s29, 1
      %s503 = scalar_select %p502, %s29, 1
      %s504 = smul.addr %s503, 8
      %s505 = smul.addr %s504, 8
      %s506 = scalar_lea.vmem %s0, %s505
      %s507 = smul.u32 8, %s30
      %p508 = scmp.lt.s32.totalorder %s29, 1
      %s509 = scalar_select %p508, %s29, 1
      %p510 = scmp.lt.s32.totalorder %s507, 7
      %s511 = scalar_select %p510, %s507, 7
      %s512 = smul.addr %s509, 8
      %s513 = sadd.s32 %s511, %s512
      %s514 = smul.addr %s513, 8
      %s515 = scalar_lea.vmem %s1, %s514
      %s516 = smul.u32 8, %s30
      %s517 = smul.u32 8, %s30
      %p518 = scmp.lt.s32.totalorder %s29, 1
      %s519 = scalar_select %p518, %s29, 1
      %p520 = scmp.lt.s32.totalorder %s517, 7
      %s521 = scalar_select %p520, %s517, 7
      %s522 = smul.addr %s519, 8
      %s523 = sadd.s32 %s521, %s522
      %s524 = smul.addr %s523, 8
      %s525 = scalar_lea.vmem %s14, %s524
      %s526 = smul.u32 8, %s30
      %p528 = scmp.eq.s32.totalorder %s30, 0
      // Predicated region
      $region77: #{tpu_custom_call.1} parent=75 // pred_check
        %p529 = pneg %p528
      $region78: #{tpu_custom_call.1} parent=75 // pred_check_branch
        %531 = sbr.rel (%p529) target = $region80
      $region79: #{tpu_custom_call.1} parent=75 // pred_region
        %v532 = vld [vmem:[%s506] sm:$0xff]
        %v533 = vld [vmem:[%s506 + $0x8] sm:$0xff]
        %v534 = vld [vmem:[%s506 + $0x10] sm:$0xff]
        %v535 = vld [vmem:[%s506 + $0x18] sm:$0xff]
        %v536 = vld [vmem:[%s506 + $0x20] sm:$0xff]
        %v537 = vld [vmem:[%s506 + $0x28] sm:$0xff]
        %v538 = vld [vmem:[%s506 + $0x30] sm:$0xff]
        %v539 = vld [vmem:[%s506 + $0x38] sm:$0xff]
        %v540 = vld [vmem:[%s2] sm:$0x1]
        %v541 = vld [vmem:[%s3] sm:$0x1]
        %vm542 = vcmask 64512
        %v543 = vsel %vm542, %v532, 0.0
        %544 = vadd.xlane.f32.xlu0 %v543
        %v545 = vpop.xlane.xlu0 %544
        %v546 = vsel %vm542, %v533, 0.0
        %547 = vadd.xlane.f32.xlu0 %v546
        %v548 = vpop.xlane.xlu0 %547
        %v549 = vsel %vm542, %v534, 0.0
        %550 = vadd.xlane.f32.xlu0 %v549
        %v551 = vpop.xlane.xlu0 %550
        %v552 = vsel %vm542, %v535, 0.0
        %553 = vadd.xlane.f32.xlu0 %v552
        %v554 = vpop.xlane.xlu0 %553
        %v555 = vsel %vm542, %v536, 0.0
        %556 = vadd.xlane.f32.xlu0 %v555
        %v557 = vpop.xlane.xlu0 %556
        %v558 = vsel %vm542, %v537, 0.0
        %559 = vadd.xlane.f32.xlu0 %v558
        %v560 = vpop.xlane.xlu0 %559
        %v561 = vsel %vm542, %v538, 0.0
        %562 = vadd.xlane.f32.xlu0 %v561
        %v563 = vpop.xlane.xlu0 %562
        %v564 = vsel %vm542, %v539, 0.0
        %565 = vadd.xlane.f32.xlu0 %v564
        %v566 = vpop.xlane.xlu0 %565
        %v567 = vrcp.pop 8.0
        %v568 = vmul.f32 %v545, %v567
        %v569 = vmul.f32 %v548, %v567
        %v570 = vmul.f32 %v551, %v567
        %v571 = vmul.f32 %v554, %v567
        %v572 = vmul.f32 %v557, %v567
        %v573 = vmul.f32 %v560, %v567
        %v574 = vmul.f32 %v563, %v567
        %v575 = vmul.f32 %v566, %v567
        %v576 = vsub.f32 %v532, %v568
        %v577 = vsub.f32 %v533, %v569
        %v578 = vsub.f32 %v534, %v570
        %v579 = vsub.f32 %v535, %v571
        %v580 = vsub.f32 %v536, %v572
        %v581 = vsub.f32 %v537, %v573
        %v582 = vsub.f32 %v538, %v574
        %v583 = vsub.f32 %v539, %v575
        %v584 = vmul.f32 %v576, %v576
        %v585 = vmul.f32 %v577, %v577
        %v586 = vmul.f32 %v578, %v578
        %v587 = vmul.f32 %v579, %v579
        %v588 = vmul.f32 %v580, %v580
        %v589 = vmul.f32 %v581, %v581
        %v590 = vmul.f32 %v582, %v582
        %v591 = vmul.f32 %v583, %v583
        %v592 = vsel %vm542, %v584, 0.0
        %593 = vadd.xlane.f32.xlu0 %v592
        %v594 = vpop.xlane.xlu0 %593
        %v595 = vsel %vm542, %v585, 0.0
        %596 = vadd.xlane.f32.xlu0 %v595
        %v597 = vpop.xlane.xlu0 %596
        %v598 = vsel %vm542, %v586, 0.0
        %599 = vadd.xlane.f32.xlu0 %v598
        %v600 = vpop.xlane.xlu0 %599
        %v601 = vsel %vm542, %v587, 0.0
        %602 = vadd.xlane.f32.xlu0 %v601
        %v603 = vpop.xlane.xlu0 %602
        %v604 = vsel %vm542, %v588, 0.0
        %605 = vadd.xlane.f32.xlu0 %v604
        %v606 = vpop.xlane.xlu0 %605
        %v607 = vsel %vm542, %v589, 0.0
        %608 = vadd.xlane.f32.xlu0 %v607
        %v609 = vpop.xlane.xlu0 %608
        %v610 = vsel %vm542, %v590, 0.0
        %611 = vadd.xlane.f32.xlu0 %v610
        %v612 = vpop.xlane.xlu0 %611
        %v613 = vsel %vm542, %v591, 0.0
        %614 = vadd.xlane.f32.xlu0 %v613
        %v615 = vpop.xlane.xlu0 %614
        %v616 = vmul.f32 %v594, %v567
        %v617 = vmul.f32 %v597, %v567
        %v618 = vmul.f32 %v600, %v567
        %v619 = vmul.f32 %v603, %v567
        %v620 = vmul.f32 %v606, %v567
        %v621 = vmul.f32 %v609, %v567
        %v622 = vmul.f32 %v612, %v567
        %v623 = vmul.f32 %v615, %v567
        %v624 = vadd.f32 %v616, 1e-05
        %v625 = vadd.f32 %v617, 1e-05
        %v626 = vadd.f32 %v618, 1e-05
        %v627 = vadd.f32 %v619, 1e-05
        %v628 = vadd.f32 %v620, 1e-05
        %v629 = vadd.f32 %v621, 1e-05
        %v630 = vadd.f32 %v622, 1e-05
        %v631 = vadd.f32 %v623, 1e-05
        %v632 = vrsqrt.pop %v624
        %v633 = vrsqrt.pop %v625
        %v634 = vrsqrt.pop %v626
        %v635 = vrsqrt.pop %v627
        %v636 = vrsqrt.pop %v628
        %v637 = vrsqrt.pop %v629
        %v638 = vrsqrt.pop %v630
        %v639 = vrsqrt.pop %v631
        %v640 = vmul.f32 %v576, %v632
        %v641 = vmul.f32 %v577, %v633
        %v642 = vmul.f32 %v578, %v634
        %v643 = vmul.f32 %v579, %v635
        %v644 = vmul.f32 %v580, %v636
        %v645 = vmul.f32 %v581, %v637
        %v646 = vmul.f32 %v582, %v638
        %v647 = vmul.f32 %v583, %v639
        %v649 = vlaneseq
        %v650 = vshrl.u32 %v649, 7
        %v651 = vsub.s32 0, %v650
        %v652 = vrot.slane %v540, %v651
        %v654 = vmul.f32 %v640, %v652
        %v655 = vmul.f32 %v641, %v652
        %v656 = vmul.f32 %v642, %v652
        %v657 = vmul.f32 %v643, %v652
        %v658 = vmul.f32 %v644, %v652
        %v659 = vmul.f32 %v645, %v652
        %v660 = vmul.f32 %v646, %v652
        %v661 = vmul.f32 %v647, %v652
        %v663 = vlaneseq
        %v664 = vshrl.u32 %v663, 7
        %v665 = vsub.s32 0, %v664
        %v666 = vrot.slane %v541, %v665
        %v668 = vadd.f32 %v654, %v666
        %v669 = vadd.f32 %v655, %v666
        %v670 = vadd.f32 %v656, %v666
        %v671 = vadd.f32 %v657, %v666
        %v672 = vadd.f32 %v658, %v666
        %v673 = vadd.f32 %v659, %v666
        %v674 = vadd.f32 %v660, %v666
        %v675 = vadd.f32 %v661, %v666
        %v676 = vpack.c.bf16 %v669, %v668
        %v677 = vpack.c.bf16 %v671, %v670
        %v678 = vpack.c.bf16 %v673, %v672
        %v679 = vpack.c.bf16 %v675, %v674
        %v680 = vld [vmem:[%s4] sm:$0xf]
        %v681 = vld [vmem:[%s5] sm:$0x1]
        %v683 = vlaneseq
        %v684 = vshrl.u32 %v683, 7
        %v685 = vsub.s32 0, %v684
        %v686 = vrot.slane %v681, %v685
        %v689 = vsel %vm542, %v676, 0
        %v692 = vsel %vm542, %v677, 0
        %v695 = vsel %vm542, %v678, 0
        %v698 = vsel %vm542, %v679, 0
        %vm700 = vcmask 1043456
        %v702 = vsel %vm700, %v680, 0
        %704 = vmatprep.subr.bf16.mxu0 0
        %705 = vmatpush1.bf16.msra.mxu0 %v702
        %706 = vmatprep.subr.bf16.mxu0 0
        %707 = vmatpush1.bf16.msra.mxu0 0
        %708 = vmatprep.subr.bf16.mxu0 0
        %709 = vmatpush1.bf16.msra.mxu0 0
        %710 = vmatprep.subr.bf16.mxu0 0
        %711 = vmatpush1.bf16.msra.mxu0 0
        %712 = vmatprep.subr.bf16.mxu0 0
        %713 = vmatpush1.bf16.msra.mxu0 0
        %714 = vmatprep.subr.bf16.mxu0 0
        %715 = vmatpush1.bf16.msra.mxu0 0
        %716 = vmatprep.subr.bf16.mxu0 0
        %717 = vmatpush1.bf16.msra.mxu0 0
        %718 = vmatprep.subr.bf16.mxu0 0
        %719 = vmatpush1.bf16.msra.mxu0 0
        %720 = vmatprep.subr.bf16.mxu0 0
        %721 = vmatpush1.bf16.msra.mxu0 0
        %722 = vmatprep.subr.bf16.mxu0 0
        %723 = vmatpush1.bf16.msra.mxu0 0
        %724 = vmatprep.subr.bf16.mxu0 0
        %725 = vmatpush1.bf16.msra.mxu0 0
        %726 = vmatprep.subr.bf16.mxu0 0
        %727 = vmatpush1.bf16.msra.mxu0 0
        %728 = vmatprep.subr.bf16.mxu0 0
        %729 = vmatpush1.bf16.msra.mxu0 0
        %730 = vmatprep.subr.bf16.mxu0 0
        %731 = vmatpush1.bf16.msra.mxu0 0
        %732 = vmatprep.subr.bf16.mxu0 0
        %733 = vmatpush1.bf16.msra.mxu0 0
        %734 = vmatprep.subr.bf16.mxu0 0
        %735 = vmatpush1.bf16.msra.mxu0 0
        %736 = vmatprep.mubr.bf16.mxu0 0
        %737 = vmatmul.mubr.bf16.gmra.mrb[0].mxu0 %v689
        %v738 = vpop.f32.mrb[0].mxu0
        %v739 = vadd.f32 %v686, %v738
        %v740 = vpop.f32.mrb[0].mxu0
        %v741 = vpop.f32.mrb[0].mxu0
        %v742 = vadd.f32 %v686, %v741
        %v743 = vpop.f32.mrb[0].mxu0
        %744 = vmatprep.mubr.bf16.mxu0 0
        %745 = vmatmul.mubr.bf16.gmra.mrb[0].mxu0 %v692
        %v746 = vpop.f32.mrb[0].mxu0
        %v747 = vadd.f32 %v686, %v746
        %v748 = vpop.f32.mrb[0].mxu0
        %v749 = vpop.f32.mrb[0].mxu0
        %v750 = vadd.f32 %v686, %v749
        %v751 = vpop.f32.mrb[0].mxu0
        %752 = vmatprep.mubr.bf16.mxu0 0
        %753 = vmatmul.mubr.bf16.gmra.mrb[0].mxu0 %v695
        %v754 = vpop.f32.mrb[0].mxu0
        %v755 = vadd.f32 %v686, %v754
        %v756 = vpop.f32.mrb[0].mxu0
        %v757 = vpop.f32.mrb[0].mxu0
        %v758 = vadd.f32 %v686, %v757
        %v759 = vpop.f32.mrb[0].mxu0
        %760 = vmatprep.mubr.bf16.mxu0 0
        %761 = vmatmul.mubr.bf16.gmra.mrb[0].mxu0 %v698
        %v762 = vpop.f32.mrb[0].mxu0
        %v763 = vadd.f32 %v686, %v762
        %v764 = vpop.f32.mrb[0].mxu0
        %v765 = vpop.f32.mrb[0].mxu0
        %v766 = vadd.f32 %v686, %v765
        %v767 = vpop.f32.mrb[0].mxu0
        %768 = vdwg.mxu0
        %v769 = vmul.f32 %v739, 0.70710677
        %v770 = vmul.f32 %v742, 0.70710677
        %v771 = vmul.f32 %v747, 0.70710677
        %v772 = vmul.f32 %v750, 0.70710677
        %v773 = vmul.f32 %v755, 0.70710677
        %v774 = vmul.f32 %v758, 0.70710677
        %v775 = vmul.f32 %v763, 0.70710677
        %v776 = vmul.f32 %v766, 0.70710677
        %v777 = vpack.c.bf16 %v770, %v769
        %v778 = vpack.c.bf16 %v772, %v771
        %v779 = vpack.c.bf16 %v774, %v773
        %v780 = vpack.c.bf16 %v776, %v775
        %781 = vst.msk [vmem:[#allocation2] sm:$0xff] %vm542, %v777
        %782 = vst.msk [vmem:[#allocation2 + $0x8] sm:$0xff] %vm542, %v778
        %783 = vst.msk [vmem:[#allocation2 + $0x10] sm:$0xff] %vm542, %v779
        %784 = vst.msk [vmem:[#allocation2 + $0x18] sm:$0xff] %vm542, %v780
        %v785 = vpack.c.bf16 %v742, %v739
        %v786 = vpack.c.bf16 %v750, %v747
        %v787 = vpack.c.bf16 %v758, %v755
        %v788 = vpack.c.bf16 %v766, %v763
        %793 = vrot.lane.b32.xlu0 %v785, 120
        %v794 = vpop.permute.xlu0 %793
        %795 = vrot.lane.b32.xlu0 %v786, 120
        %v796 = vpop.permute.xlu0 %795
        %797 = vrot.lane.b32.xlu0 %v787, 120
        %v798 = vpop.permute.xlu0 %797
        %799 = vrot.lane.b32.xlu0 %v788, 120
        %v800 = vpop.permute.xlu0 %799
        %805 = vst.msk [vmem:[#allocation3] sm:$0xff] %vm542, %v794
        %806 = vst.msk [vmem:[#allocation3 + $0x8] sm:$0xff] %vm542, %v796
        %807 = vst.msk [vmem:[#allocation3 + $0x10] sm:$0xff] %vm542, %v798
        %808 = vst.msk [vmem:[#allocation3 + $0x18] sm:$0xff] %vm542, %v800
        %809 = vrot.lane.b32.xlu0 %v785, 112
        %v810 = vpop.permute.xlu0 %809
        %811 = vrot.lane.b32.xlu0 %v786, 112
        %v812 = vpop.permute.xlu0 %811
        %813 = vrot.lane.b32.xlu0 %v787, 112
        %v814 = vpop.permute.xlu0 %813
        %815 = vrot.lane.b32.xlu0 %v788, 112
        %v816 = vpop.permute.xlu0 %815
        %821 = vst.msk [vmem:[#allocation4] sm:$0xff] %vm542, %v810
        %822 = vst.msk [vmem:[#allocation4 + $0x8] sm:$0xff] %vm542, %v812
        %823 = vst.msk [vmem:[#allocation4 + $0x10] sm:$0xff] %vm542, %v814
        %824 = vst.msk [vmem:[#allocation4 + $0x18] sm:$0xff] %vm542, %v816
      $region80: #{tpu_custom_call.1} parent=75 // pred_fallthru
        _
      %s825 = smul.u32 %s30, 64
      %v826 = vld [vmem:[%s515] sm:$0xff]
      %v827 = vld [vmem:[%s515 + $0x8] sm:$0xff]
      %v828 = vld [vmem:[%s515 + $0x10] sm:$0xff]
      %v829 = vld [vmem:[%s515 + $0x18] sm:$0xff]
      %v830 = vld [vmem:[%s515 + $0x20] sm:$0xff]
      %v831 = vld [vmem:[%s515 + $0x28] sm:$0xff]
      %v832 = vld [vmem:[%s515 + $0x30] sm:$0xff]
      %v833 = vld [vmem:[%s515 + $0x38] sm:$0xff]
      %s834 = sshra.s32 %s825, 4
      %s835 = sand.u32 %s825, 15
      %s836 = smul.addr %s834, 8
      %s837 = scalar_lea.vmem [#allocation2], %s836
      %v838 = vld [vmem:[%s837] sm:$0xff]
      %v839 = vld [vmem:[%s837 + $0x8] sm:$0xff]
      %v840 = vld [vmem:[%s837 + $0x10] sm:$0xff]
      %v841 = vld [vmem:[%s837 + $0x18] sm:$0xff]
      %846 = vrot.lane.b32.xlu0 %v838, 126
      %v847 = vpop.permute.xlu0 %846
      %848 = vrot.lane.b32.xlu0 %v839, 126
      %v849 = vpop.permute.xlu0 %848
      %850 = vrot.lane.b32.xlu0 %v840, 126
      %v851 = vpop.permute.xlu0 %850
      %852 = vrot.lane.b32.xlu0 %v841, 126
      %v853 = vpop.permute.xlu0 %852
      %854 = vrot.lane.b32.xlu0 %v838, 124
      %v855 = vpop.permute.xlu0 %854
      %856 = vrot.lane.b32.xlu0 %v839, 124
      %v857 = vpop.permute.xlu0 %856
      %858 = vrot.lane.b32.xlu0 %v840, 124
      %v859 = vpop.permute.xlu0 %858
      %860 = vrot.lane.b32.xlu0 %v841, 124
      %v861 = vpop.permute.xlu0 %860
      %862 = vrot.lane.b32.xlu0 %v838, 122
      %v863 = vpop.permute.xlu0 %862
      %864 = vrot.lane.b32.xlu0 %v839, 122
      %v865 = vpop.permute.xlu0 %864
      %866 = vrot.lane.b32.xlu0 %v840, 122
      %v867 = vpop.permute.xlu0 %866
      %868 = vrot.lane.b32.xlu0 %v841, 122
      %v869 = vpop.permute.xlu0 %868
      %v870 = vld [vmem:[#allocation3] sm:$0xff]
      %v871 = vld [vmem:[#allocation3 + $0x8] sm:$0xff]
      %v872 = vld [vmem:[#allocation3 + $0x10] sm:$0xff]
      %v873 = vld [vmem:[#allocation3 + $0x18] sm:$0xff]
      %878 = vrot.lane.b32.xlu0 %v870, 126
      %v879 = vpop.permute.xlu0 %878
      %880 = vrot.lane.b32.xlu0 %v871, 126
      %v881 = vpop.permute.xlu0 %880
      %882 = vrot.lane.b32.xlu0 %v872, 126
      %v883 = vpop.permute.xlu0 %882
      %884 = vrot.lane.b32.xlu0 %v873, 126
      %v885 = vpop.permute.xlu0 %884
      %890 = vrot.lane.b32.xlu0 %v870, 124
      %v891 = vpop.permute.xlu0 %890
      %892 = vrot.lane.b32.xlu0 %v871, 124
      %v893 = vpop.permute.xlu0 %892
      %894 = vrot.lane.b32.xlu0 %v872, 124
      %v895 = vpop.permute.xlu0 %894
      %896 = vrot.lane.b32.xlu0 %v873, 124
      %v897 = vpop.permute.xlu0 %896
      %902 = vrot.lane.b32.xlu0 %v870, 122
      %v903 = vpop.permute.xlu0 %902
      %904 = vrot.lane.b32.xlu0 %v871, 122
      %v905 = vpop.permute.xlu0 %904
      %906 = vrot.lane.b32.xlu0 %v872, 122
      %v907 = vpop.permute.xlu0 %906
      %908 = vrot.lane.b32.xlu0 %v873, 122
      %v909 = vpop.permute.xlu0 %908
      %v914 = vld [vmem:[#allocation4] sm:$0xff]
      %v915 = vld [vmem:[#allocation4 + $0x8] sm:$0xff]
      %v916 = vld [vmem:[#allocation4 + $0x10] sm:$0xff]
      %v917 = vld [vmem:[#allocation4 + $0x18] sm:$0xff]
      %922 = vrot.lane.b32.xlu0 %v914, 126
      %v923 = vpop.permute.xlu0 %922
      %924 = vrot.lane.b32.xlu0 %v915, 126
      %v925 = vpop.permute.xlu0 %924
      %926 = vrot.lane.b32.xlu0 %v916, 126
      %v927 = vpop.permute.xlu0 %926
      %928 = vrot.lane.b32.xlu0 %v917, 126
      %v929 = vpop.permute.xlu0 %928
      %934 = vrot.lane.b32.xlu0 %v914, 124
      %v935 = vpop.permute.xlu0 %934
      %936 = vrot.lane.b32.xlu0 %v915, 124
      %v937 = vpop.permute.xlu0 %936
      %938 = vrot.lane.b32.xlu0 %v916, 124
      %v939 = vpop.permute.xlu0 %938
      %940 = vrot.lane.b32.xlu0 %v917, 124
      %v941 = vpop.permute.xlu0 %940
      %946 = vrot.lane.b32.xlu0 %v914, 122
      %v947 = vpop.permute.xlu0 %946
      %948 = vrot.lane.b32.xlu0 %v915, 122
      %v949 = vpop.permute.xlu0 %948
      %950 = vrot.lane.b32.xlu0 %v916, 122
      %v951 = vpop.permute.xlu0 %950
      %952 = vrot.lane.b32.xlu0 %v917, 122
      %v953 = vpop.permute.xlu0 %952
      %958 = vxpose.xlu0.c.b16.start [1/8] %v870, 128
      %959 = vxpose.xlu0.c.b16.cont [2/8] %v871, 128
      %960 = vxpose.xlu0.c.b16.cont [3/8] %v872, 128
      %961 = vxpose.xlu0.c.b16.cont [4/8] %v873, 128
      %962 = vxpose.xlu0.c.b16.cont [5/8] 0, 128
      %963 = vxpose.xlu0.c.b16.cont [6/8] 0, 128
      %964 = vxpose.xlu0.c.b16.cont [7/8] 0, 128
      %965 = vxpose.xlu0.c.b16.end [8/8] 0, 128
      %v966 = vpop.trf.xlu0
      %v967 = vpop.trf.xlu0
      %v968 = vpop.trf.xlu0
      %v969 = vpop.trf.xlu0
      %v970 = vpop.trf.xlu0
      %v971 = vpop.trf.xlu0
      %v972 = vpop.trf.xlu0
      %v973 = vpop.trf.xlu0
      %974 = vxpose.xlu0.c.b16.start [1/8] %v879, 128
      %975 = vxpose.xlu0.c.b16.cont [2/8] %v881, 128
      %976 = vxpose.xlu0.c.b16.cont [3/8] %v883, 128
      %977 = vxpose.xlu0.c.b16.cont [4/8] %v885, 128
      %978 = vxpose.xlu0.c.b16.cont [5/8] 0, 128
      %979 = vxpose.xlu0.c.b16.cont [6/8] 0, 128
      %980 = vxpose.xlu0.c.b16.cont [7/8] 0, 128
      %981 = vxpose.xlu0.c.b16.end [8/8] 0, 128
      %v982 = vpop.trf.xlu0
      %v983 = vpop.trf.xlu0
      %v984 = vpop.trf.xlu0
      %v985 = vpop.trf.xlu0
      %v986 = vpop.trf.xlu0
      %v987 = vpop.trf.xlu0
      %v988 = vpop.trf.xlu0
      %v989 = vpop.trf.xlu0
      %990 = vxpose.xlu0.c.b16.start [1/8] %v891, 128
      %991 = vxpose.xlu0.c.b16.cont [2/8] %v893, 128
      %992 = vxpose.xlu0.c.b16.cont [3/8] %v895, 128
      %993 = vxpose.xlu0.c.b16.cont [4/8] %v897, 128
      %994 = vxpose.xlu0.c.b16.cont [5/8] 0, 128
      %995 = vxpose.xlu0.c.b16.cont [6/8] 0, 128
      %996 = vxpose.xlu0.c.b16.cont [7/8] 0, 128
      %997 = vxpose.xlu0.c.b16.end [8/8] 0, 128
      %v998 = vpop.trf.xlu0
      %v999 = vpop.trf.xlu0
      %v1000 = vpop.trf.xlu0
      %v1001 = vpop.trf.xlu0
      %v1002 = vpop.trf.xlu0
      %v1003 = vpop.trf.xlu0
      %v1004 = vpop.trf.xlu0
      %v1005 = vpop.trf.xlu0
      %1006 = vxpose.xlu0.c.b16.start [1/8] %v903, 128
      %1007 = vxpose.xlu0.c.b16.cont [2/8] %v905, 128
      %1008 = vxpose.xlu0.c.b16.cont [3/8] %v907, 128
      %1009 = vxpose.xlu0.c.b16.cont [4/8] %v909, 128
      %1010 = vxpose.xlu0.c.b16.cont [5/8] 0, 128
      %1011 = vxpose.xlu0.c.b16.cont [6/8] 0, 128
      %1012 = vxpose.xlu0.c.b16.cont [7/8] 0, 128
      %1013 = vxpose.xlu0.c.b16.end [8/8] 0, 128
      %v1014 = vpop.trf.xlu0
      %v1015 = vpop.trf.xlu0
      %v1016 = vpop.trf.xlu0
      %v1017 = vpop.trf.xlu0
      %v1018 = vpop.trf.xlu0
      %v1019 = vpop.trf.xlu0
      %v1020 = vpop.trf.xlu0
      %v1021 = vpop.trf.xlu0
      %vm1022 = vcmask 15360
      %v1024 = vsel %vm1022, %v838, 0
      %v1027 = vsel %vm1022, %v839, 0
      %v1030 = vsel %vm1022, %v840, 0
      %v1033 = vsel %vm1022, %v841, 0
      %vm1035 = vcmask 1040384
      %v1037 = vsel %vm1035, %v966, 0
      %1039 = vmatprep.subr.bf16.mxu0 0
      %1040 = vmatpush1.bf16.msra.mxu0 %v1037
      %1041 = vmatprep.subr.bf16.mxu0 0
      %1042 = vmatpush1.bf16.msra.mxu0 0
      %1043 = vmatprep.subr.bf16.mxu0 0
      %1044 = vmatpush1.bf16.msra.mxu0 0
      %1045 = vmatprep.subr.bf16.mxu0 0
      %1046 = vmatpush1.bf16.msra.mxu0 0
      %1047 = vmatprep.subr.bf16.mxu0 0
      %1048 = vmatpush1.bf16.msra.mxu0 0
      %1049 = vmatprep.subr.bf16.mxu0 0
      %1050 = vmatpush1.bf16.msra.mxu0 0
      %1051 = vmatprep.subr.bf16.mxu0 0
      %1052 = vmatpush1.bf16.msra.mxu0 0
      %1053 = vmatprep.subr.bf16.mxu0 0
      %1054 = vmatpush1.bf16.msra.mxu0 0
      %1055 = vmatprep.subr.bf16.mxu0 0
      %1056 = vmatpush1.bf16.msra.mxu0 0
      %1057 = vmatprep.subr.bf16.mxu0 0
      %1058 = vmatpush1.bf16.msra.mxu0 0
      %1059 = vmatprep.subr.bf16.mxu0 0
      %1060 = vmatpush1.bf16.msra.mxu0 0
      %1061 = vmatprep.subr.bf16.mxu0 0
      %1062 = vmatpush1.bf16.msra.mxu0 0
      %1063 = vmatprep.subr.bf16.mxu0 0
      %1064 = vmatpush1.bf16.msra.mxu0 0
      %1065 = vmatprep.subr.bf16.mxu0 0
      %1066 = vmatpush1.bf16.msra.mxu0 0
      %1067 = vmatprep.subr.bf16.mxu0 0
      %1068 = vmatpush1.bf16.msra.mxu0 0
      %1069 = vmatprep.subr.bf16.mxu0 0
      %1070 = vmatpush1.bf16.msra.mxu0 0
      %1071 = vmatprep.mubr.bf16.mxu0 0
      %1072 = vmatmul.mubr.bf16.gmra.mrb[0].mxu0 %v1024
      %v1073 = vpop.f32.mrb[0].mxu0
      %v1074 = vadd.f32 0.0, %v1073
      %v1075 = vpop.f32.mrb[0].mxu0
      %v1076 = vpop.f32.mrb[0].mxu0
      %v1077 = vadd.f32 0.0, %v1076
      %v1078 = vpop.f32.mrb[0].mxu0
      %1079 = vmatprep.mubr.bf16.mxu0 0
      %1080 = vmatmul.mubr.bf16.gmra.mrb[0].mxu0 %v1027
      %v1081 = vpop.f32.mrb[0].mxu0
      %v1082 = vadd.f32 0.0, %v1081
      %v1083 = vpop.f32.mrb[0].mxu0
      %v1084 = vpop.f32.mrb[0].mxu0
      %v1085 = vadd.f32 0.0, %v1084
      %v1086 = vpop.f32.mrb[0].mxu0
      %1087 = vmatprep.mubr.bf16.mxu0 0
      %1088 = vmatmul.mubr.bf16.gmra.mrb[0].mxu0 %v1030
      %v1089 = vpop.f32.mrb[0].mxu0
      %v1090 = vadd.f32 0.0, %v1089
      %v1091 = vpop.f32.mrb[0].mxu0
      %v1092 = vpop.f32.mrb[0].mxu0
      %v1093 = vadd.f32 0.0, %v1092
      %v1094 = vpop.f32.mrb[0].mxu0
      %1095 = vmatprep.mubr.bf16.mxu0 0
      %1096 = vmatmul.mubr.bf16.gmra.mrb[0].mxu0 %v1033
      %v1097 = vpop.f32.mrb[0].mxu0
      %v1098 = vadd.f32 0.0, %v1097
      %v1099 = vpop.f32.mrb[0].mxu0
      %v1100 = vpop.f32.mrb[0].mxu0
      %v1101 = vadd.f32 0.0, %v1100
      %v1102 = vpop.f32.mrb[0].mxu0
      %1103 = vdwg.mxu0
      %v1105 = vsel %vm1022, %v847, 0
      %v1108 = vsel %vm1022, %v849, 0
      %v1111 = vsel %vm1022, %v851, 0
      %v1114 = vsel %vm1022, %v853, 0
      %v1117 = vsel %vm1035, %v982, 0
      %1119 = vmatprep.subr.bf16.mxu0 0
      %1120 = vmatpush1.bf16.msra.mxu0 %v1117
      %1121 = vmatprep.subr.bf16.mxu0 0
      %1122 = vmatpush1.bf16.msra.mxu0 0
      %1123 = vmatprep.subr.bf16.mxu0 0
      %1124 = vmatpush1.bf16.msra.mxu0 0
      %1125 = vmatprep.subr.bf16.mxu0 0
      %1126 = vmatpush1.bf16.msra.mxu0 0
      %1127 = vmatprep.subr.bf16.mxu0 0
      %1128 = vmatpush1.bf16.msra.mxu0 0
      %1129 = vmatprep.subr.bf16.mxu0 0
      %1130 = vmatpush1.bf16.msra.mxu0 0
      %1131 = vmatprep.subr.bf16.mxu0 0
      %1132 = vmatpush1.bf16.msra.mxu0 0
      %1133 = vmatprep.subr.bf16.mxu0 0
      %1134 = vmatpush1.bf16.msra.mxu0 0
      %1135 = vmatprep.subr.bf16.mxu0 0
      %1136 = vmatpush1.bf16.msra.mxu0 0
      %1137 = vmatprep.subr.bf16.mxu0 0
      %1138 = vmatpush1.bf16.msra.mxu0 0
      %1139 = vmatprep.subr.bf16.mxu0 0
      %1140 = vmatpush1.bf16.msra.mxu0 0
      %1141 = vmatprep.subr.bf16.mxu0 0
      %1142 = vmatpush1.bf16.msra.mxu0 0
      %1143 = vmatprep.subr.bf16.mxu0 0
      %1144 = vmatpush1.bf16.msra.mxu0 0
      %1145 = vmatprep.subr.bf16.mxu0 0
      %1146 = vmatpush1.bf16.msra.mxu0 0
      %1147 = vmatprep.subr.bf16.mxu0 0
      %1148 = vmatpush1.bf16.msra.mxu0 0
      %1149 = vmatprep.subr.bf16.mxu0 0
      %1150 = vmatpush1.bf16.msra.mxu0 0
      %1151 = vmatprep.mubr.bf16.mxu0 0
      %1152 = vmatmul.mubr.bf16.gmra.mrb[0].mxu0 %v1105
      %v1153 = vpop.f32.mrb[0].mxu0
      %v1154 = vadd.f32 0.0, %v1153
      %v1155 = vpop.f32.mrb[0].mxu0
      %v1156 = vpop.f32.mrb[0].mxu0
      %v1157 = vadd.f32 0.0, %v1156
      %v1158 = vpop.f32.mrb[0].mxu0
      %1159 = vmatprep.mubr.bf16.mxu0 0
      %1160 = vmatmul.mubr.bf16.gmra.mrb[0].mxu0 %v1108
      %v1161 = vpop.f32.mrb[0].mxu0
      %v1162 = vadd.f32 0.0, %v1161
      %v1163 = vpop.f32.mrb[0].mxu0
      %v1164 = vpop.f32.mrb[0].mxu0
      %v1165 = vadd.f32 0.0, %v1164
      %v1166 = vpop.f32.mrb[0].mxu0
      %1167 = vmatprep.mubr.bf16.mxu0 0
      %1168 = vmatmul.mubr.bf16.gmra.mrb[0].mxu0 %v1111
      %v1169 = vpop.f32.mrb[0].mxu0
      %v1170 = vadd.f32 0.0, %v1169
      %v1171 = vpop.f32.mrb[0].mxu0
      %v1172 = vpop.f32.mrb[0].mxu0
      %v1173 = vadd.f32 0.0, %v1172
      %v1174 = vpop.f32.mrb[0].mxu0
      %1175 = vmatprep.mubr.bf16.mxu0 0
      %1176 = vmatmul.mubr.bf16.gmra.mrb[0].mxu0 %v1114
      %v1177 = vpop.f32.mrb[0].mxu0
      %v1178 = vadd.f32 0.0, %v1177
      %v1179 = vpop.f32.mrb[0].mxu0
      %v1180 = vpop.f32.mrb[0].mxu0
      %v1181 = vadd.f32 0.0, %v1180
      %v1182 = vpop.f32.mrb[0].mxu0
      %1183 = vdwg.mxu0
      %v1185 = vsel %vm1022, %v855, 0
      %v1188 = vsel %vm1022, %v857, 0
      %v1191 = vsel %vm1022, %v859, 0
      %v1194 = vsel %vm1022, %v861, 0
      %v1197 = vsel %vm1035, %v998, 0
      %1199 = vmatprep.subr.bf16.mxu0 0
      %1200 = vmatpush1.bf16.msra.mxu0 %v1197
      %1201 = vmatprep.subr.bf16.mxu0 0
      %1202 = vmatpush1.bf16.msra.mxu0 0
      %1203 = vmatprep.subr.bf16.mxu0 0
      %1204 = vmatpush1.bf16.msra.mxu0 0
      %1205 = vmatprep.subr.bf16.mxu0 0
      %1206 = vmatpush1.bf16.msra.mxu0 0
      %1207 = vmatprep.subr.bf16.mxu0 0
      %1208 = vmatpush1.bf16.msra.mxu0 0
      %1209 = vmatprep.subr.bf16.mxu0 0
      %1210 = vmatpush1.bf16.msra.mxu0 0
      %1211 = vmatprep.subr.bf16.mxu0 0
      %1212 = vmatpush1.bf16.msra.mxu0 0
      %1213 = vmatprep.subr.bf16.mxu0 0
      %1214 = vmatpush1.bf16.msra.mxu0 0
      %1215 = vmatprep.subr.bf16.mxu0 0
      %1216 = vmatpush1.bf16.msra.mxu0 0
      %1217 = vmatprep.subr.bf16.mxu0 0
      %1218 = vmatpush1.bf16.msra.mxu0 0
      %1219 = vmatprep.subr.bf16.mxu0 0
      %1220 = vmatpush1.bf16.msra.mxu0 0
      %1221 = vmatprep.subr.bf16.mxu0 0
      %1222 = vmatpush1.bf16.msra.mxu0 0
      %1223 = vmatprep.subr.bf16.mxu0 0
      %1224 = vmatpush1.bf16.msra.mxu0 0
      %1225 = vmatprep.subr.bf16.mxu0 0
      %1226 = vmatpush1.bf16.msra.mxu0 0
      %1227 = vmatprep.subr.bf16.mxu0 0
      %1228 = vmatpush1.bf16.msra.mxu0 0
      %1229 = vmatprep.subr.bf16.mxu0 0
      %1230 = vmatpush1.bf16.msra.mxu0 0
      %1231 = vmatprep.mubr.bf16.mxu0 0
      %1232 = vmatmul.mubr.bf16.gmra.mrb[0].mxu0 %v1185
      %v1233 = vpop.f32.mrb[0].mxu0
      %v1234 = vadd.f32 0.0, %v1233
      %v1235 = vpop.f32.mrb[0].mxu0
      %v1236 = vpop.f32.mrb[0].mxu0
      %v1237 = vadd.f32 0.0, %v1236
      %v1238 = vpop.f32.mrb[0].mxu0
      %1239 = vmatprep.mubr.bf16.mxu0 0
      %1240 = vmatmul.mubr.bf16.gmra.mrb[0].mxu0 %v1188
      %v1241 = vpop.f32.mrb[0].mxu0
      %v1242 = vadd.f32 0.0, %v1241
      %v1243 = vpop.f32.mrb[0].mxu0
      %v1244 = vpop.f32.mrb[0].mxu0
      %v1245 = vadd.f32 0.0, %v1244
      %v1246 = vpop.f32.mrb[0].mxu0
      %1247 = vmatprep.mubr.bf16.mxu0 0
      %1248 = vmatmul.mubr.bf16.gmra.mrb[0].mxu0 %v1191
      %v1249 = vpop.f32.mrb[0].mxu0
      %v1250 = vadd.f32 0.0, %v1249
      %v1251 = vpop.f32.mrb[0].mxu0
      %v1252 = vpop.f32.mrb[0].mxu0
      %v1253 = vadd.f32 0.0, %v1252
      %v1254 = vpop.f32.mrb[0].mxu0
      %1255 = vmatprep.mubr.bf16.mxu0 0
      %1256 = vmatmul.mubr.bf16.gmra.mrb[0].mxu0 %v1194
      %v1257 = vpop.f32.mrb[0].mxu0
      %v1258 = vadd.f32 0.0, %v1257
      %v1259 = vpop.f32.mrb[0].mxu0
      %v1260 = vpop.f32.mrb[0].mxu0
      %v1261 = vadd.f32 0.0, %v1260
      %v1262 = vpop.f32.mrb[0].mxu0
      %1263 = vdwg.mxu0
      %v1265 = vsel %vm1022, %v863, 0
      %v1268 = vsel %vm1022, %v865, 0
      %v1271 = vsel %vm1022, %v867, 0
      %v1274 = vsel %vm1022, %v869, 0
      %v1277 = vsel %vm1035, %v1014, 0
      %1279 = vmatprep.subr.bf16.mxu0 0
      %1280 = vmatpush1.bf16.msra.mxu0 %v1277
      %1281 = vmatprep.subr.bf16.mxu0 0
      %1282 = vmatpush1.bf16.msra.mxu0 0
      %1283 = vmatprep.subr.bf16.mxu0 0
      %1284 = vmatpush1.bf16.msra.mxu0 0
      %1285 = vmatprep.subr.bf16.mxu0 0
      %1286 = vmatpush1.bf16.msra.mxu0 0
      %1287 = vmatprep.subr.bf16.mxu0 0
      %1288 = vmatpush1.bf16.msra.mxu0 0
      %1289 = vmatprep.subr.bf16.mxu0 0
      %1290 = vmatpush1.bf16.msra.mxu0 0
      %1291 = vmatprep.subr.bf16.mxu0 0
      %1292 = vmatpush1.bf16.msra.mxu0 0
      %1293 = vmatprep.subr.bf16.mxu0 0
      %1294 = vmatpush1.bf16.msra.mxu0 0
      %1295 = vmatprep.subr.bf16.mxu0 0
      %1296 = vmatpush1.bf16.msra.mxu0 0
      %1297 = vmatprep.subr.bf16.mxu0 0
      %1298 = vmatpush1.bf16.msra.mxu0 0
      %1299 = vmatprep.subr.bf16.mxu0 0
      %1300 = vmatpush1.bf16.msra.mxu0 0
      %1301 = vmatprep.subr.bf16.mxu0 0
      %1302 = vmatpush1.bf16.msra.mxu0 0
      %1303 = vmatprep.subr.bf16.mxu0 0
      %1304 = vmatpush1.bf16.msra.mxu0 0
      %1305 = vmatprep.subr.bf16.mxu0 0
      %1306 = vmatpush1.bf16.msra.mxu0 0
      %1307 = vmatprep.subr.bf16.mxu0 0
      %1308 = vmatpush1.bf16.msra.mxu0 0
      %1309 = vmatprep.subr.bf16.mxu0 0
      %1310 = vmatpush1.bf16.msra.mxu0 0
      %1311 = vmatprep.mubr.bf16.mxu0 0
      %1312 = vmatmul.mubr.bf16.gmra.mrb[0].mxu0 %v1265
      %v1313 = vpop.f32.mrb[0].mxu0
      %v1314 = vadd.f32 0.0, %v1313
      %v1315 = vpop.f32.mrb[0].mxu0
      %v1316 = vpop.f32.mrb[0].mxu0
      %v1317 = vadd.f32 0.0, %v1316
      %v1318 = vpop.f32.mrb[0].mxu0
      %1319 = vmatprep.mubr.bf16.mxu0 0
      %1320 = vmatmul.mubr.bf16.gmra.mrb[0].mxu0 %v1268
      %v1321 = vpop.f32.mrb[0].mxu0
      %v1322 = vadd.f32 0.0, %v1321
      %v1323 = vpop.f32.mrb[0].mxu0
      %v1324 = vpop.f32.mrb[0].mxu0
      %v1325 = vadd.f32 0.0, %v1324
      %v1326 = vpop.f32.mrb[0].mxu0
      %1327 = vmatprep.mubr.bf16.mxu0 0
      %1328 = vmatmul.mubr.bf16.gmra.mrb[0].mxu0 %v1271
      %v1329 = vpop.f32.mrb[0].mxu0
      %v1330 = vadd.f32 0.0, %v1329
      %v1331 = vpop.f32.mrb[0].mxu0
      %v1332 = vpop.f32.mrb[0].mxu0
      %v1333 = vadd.f32 0.0, %v1332
      %v1334 = vpop.f32.mrb[0].mxu0
      %1335 = vmatprep.mubr.bf16.mxu0 0
      %1336 = vmatmul.mubr.bf16.gmra.mrb[0].mxu0 %v1274
      %v1337 = vpop.f32.mrb[0].mxu0
      %v1338 = vadd.f32 0.0, %v1337
      %v1339 = vpop.f32.mrb[0].mxu0
      %v1340 = vpop.f32.mrb[0].mxu0
      %v1341 = vadd.f32 0.0, %v1340
      %v1342 = vpop.f32.mrb[0].mxu0
      %1343 = vdwg.mxu0
      %vm1344 = vcmask 523264
      %v1345 = vsel %vm1344, %v1074, -inf
      %1346 = vmax.xlane.f32.xlu0 %v1345
      %v1347 = vpop.xlane.xlu0 %1346
      %v1348 = vsel %vm1344, %v1077, -inf
      %1349 = vmax.xlane.f32.xlu0 %v1348
      %v1350 = vpop.xlane.xlu0 %1349
      %v1351 = vsel %vm1344, %v1082, -inf
      %1352 = vmax.xlane.f32.xlu0 %v1351
      %v1353 = vpop.xlane.xlu0 %1352
      %v1354 = vsel %vm1344, %v1085, -inf
      %1355 = vmax.xlane.f32.xlu0 %v1354
      %v1356 = vpop.xlane.xlu0 %1355
      %v1357 = vsel %vm1344, %v1090, -inf
      %1358 = vmax.xlane.f32.xlu0 %v1357
      %v1359 = vpop.xlane.xlu0 %1358
      %v1360 = vsel %vm1344, %v1093, -inf
      %1361 = vmax.xlane.f32.xlu0 %v1360
      %v1362 = vpop.xlane.xlu0 %1361
      %v1363 = vsel %vm1344, %v1098, -inf
      %1364 = vmax.xlane.f32.xlu0 %v1363
      %v1365 = vpop.xlane.xlu0 %1364
      %v1366 = vsel %vm1344, %v1101, -inf
      %1367 = vmax.xlane.f32.xlu0 %v1366
      %v1368 = vpop.xlane.xlu0 %1367
      %v1369 = vsel %vm1344, %v1154, -inf
      %1370 = vmax.xlane.f32.xlu0 %v1369
      %v1371 = vpop.xlane.xlu0 %1370
      %v1372 = vsel %vm1344, %v1157, -inf
      %1373 = vmax.xlane.f32.xlu0 %v1372
      %v1374 = vpop.xlane.xlu0 %1373
      %v1375 = vsel %vm1344, %v1162, -inf
      %1376 = vmax.xlane.f32.xlu0 %v1375
      %v1377 = vpop.xlane.xlu0 %1376
      %v1378 = vsel %vm1344, %v1165, -inf
      %1379 = vmax.xlane.f32.xlu0 %v1378
      %v1380 = vpop.xlane.xlu0 %1379
      %v1381 = vsel %vm1344, %v1170, -inf
      %1382 = vmax.xlane.f32.xlu0 %v1381
      %v1383 = vpop.xlane.xlu0 %1382
      %v1384 = vsel %vm1344, %v1173, -inf
      %1385 = vmax.xlane.f32.xlu0 %v1384
      %v1386 = vpop.xlane.xlu0 %1385
      %v1387 = vsel %vm1344, %v1178, -inf
      %1388 = vmax.xlane.f32.xlu0 %v1387
      %v1389 = vpop.xlane.xlu0 %1388
      %v1390 = vsel %vm1344, %v1181, -inf
      %1391 = vmax.xlane.f32.xlu0 %v1390
      %v1392 = vpop.xlane.xlu0 %1391
      %v1393 = vsel %vm1344, %v1234, -inf
      %1394 = vmax.xlane.f32.xlu0 %v1393
      %v1395 = vpop.xlane.xlu0 %1394
      %v1396 = vsel %vm1344, %v1237, -inf
      %1397 = vmax.xlane.f32.xlu0 %v1396
      %v1398 = vpop.xlane.xlu0 %1397
      %v1399 = vsel %vm1344, %v1242, -inf
      %1400 = vmax.xlane.f32.xlu0 %v1399
      %v1401 = vpop.xlane.xlu0 %1400
      %v1402 = vsel %vm1344, %v1245, -inf
      %1403 = vmax.xlane.f32.xlu0 %v1402
      %v1404 = vpop.xlane.xlu0 %1403
      %v1405 = vsel %vm1344, %v1250, -inf
      %1406 = vmax.xlane.f32.xlu0 %v1405
      %v1407 = vpop.xlane.xlu0 %1406
      %v1408 = vsel %vm1344, %v1253, -inf
      %1409 = vmax.xlane.f32.xlu0 %v1408
      %v1410 = vpop.xlane.xlu0 %1409
      %v1411 = vsel %vm1344, %v1258, -inf
      %1412 = vmax.xlane.f32.xlu0 %v1411
      %v1413 = vpop.xlane.xlu0 %1412
      %v1414 = vsel %vm1344, %v1261, -inf
      %1415 = vmax.xlane.f32.xlu0 %v1414
      %v1416 = vpop.xlane.xlu0 %1415
      %v1417 = vsel %vm1344, %v1314, -inf
      %1418 = vmax.xlane.f32.xlu0 %v1417
      %v1419 = vpop.xlane.xlu0 %1418
      %v1420 = vsel %vm1344, %v1317, -inf
      %1421 = vmax.xlane.f32.xlu0 %v1420
      %v1422 = vpop.xlane.xlu0 %1421
      %v1423 = vsel %vm1344, %v1322, -inf
      %1424 = vmax.xlane.f32.xlu0 %v1423
      %v1425 = vpop.xlane.xlu0 %1424
      %v1426 = vsel %vm1344, %v1325, -inf
      %1427 = vmax.xlane.f32.xlu0 %v1426
      %v1428 = vpop.xlane.xlu0 %1427
      %v1429 = vsel %vm1344, %v1330, -inf
      %1430 = vmax.xlane.f32.xlu0 %v1429
      %v1431 = vpop.xlane.xlu0 %1430
      %v1432 = vsel %vm1344, %v1333, -inf
      %1433 = vmax.xlane.f32.xlu0 %v1432
      %v1434 = vpop.xlane.xlu0 %1433
      %v1435 = vsel %vm1344, %v1338, -inf
      %1436 = vmax.xlane.f32.xlu0 %v1435
      %v1437 = vpop.xlane.xlu0 %1436
      %v1438 = vsel %vm1344, %v1341, -inf
      %1439 = vmax.xlane.f32.xlu0 %v1438
      %v1440 = vpop.xlane.xlu0 %1439
      %v1441 = vsub.f32 %v1074, %v1347
      %v1442 = vsub.f32 %v1077, %v1350
      %v1443 = vsub.f32 %v1082, %v1353
      %v1444 = vsub.f32 %v1085, %v1356
      %v1445 = vsub.f32 %v1090, %v1359
      %v1446 = vsub.f32 %v1093, %v1362
      %v1447 = vsub.f32 %v1098, %v1365
      %v1448 = vsub.f32 %v1101, %v1368
      %v1449 = vsub.f32 %v1154, %v1371
      %v1450 = vsub.f32 %v1157, %v1374
      %v1451 = vsub.f32 %v1162, %v1377
      %v1452 = vsub.f32 %v1165, %v1380
      %v1453 = vsub.f32 %v1170, %v1383
      %v1454 = vsub.f32 %v1173, %v1386
      %v1455 = vsub.f32 %v1178, %v1389
      %v1456 = vsub.f32 %v1181, %v1392
      %v1457 = vsub.f32 %v1234, %v1395
      %v1458 = vsub.f32 %v1237, %v1398
      %v1459 = vsub.f32 %v1242, %v1401
      %v1460 = vsub.f32 %v1245, %v1404
      %v1461 = vsub.f32 %v1250, %v1407
      %v1462 = vsub.f32 %v1253, %v1410
      %v1463 = vsub.f32 %v1258, %v1413
      %v1464 = vsub.f32 %v1261, %v1416
      %v1465 = vsub.f32 %v1314, %v1419
      %v1466 = vsub.f32 %v1317, %v1422
      %v1467 = vsub.f32 %v1322, %v1425
      %v1468 = vsub.f32 %v1325, %v1428
      %v1469 = vsub.f32 %v1330, %v1431
      %v1470 = vsub.f32 %v1333, %v1434
      %v1471 = vsub.f32 %v1338, %v1437
      %v1472 = vsub.f32 %v1341, %v1440
      %v1473 = vmul.f32 %v1441, 1.442695
      %v1474 = vpow.pop %v1473
      %v1475 = vmul.f32 %v1442, 1.442695
      %v1476 = vpow.pop %v1475
      %v1477 = vmul.f32 %v1443, 1.442695
      %v1478 = vpow.pop %v1477
      %v1479 = vmul.f32 %v1444, 1.442695
      %v1480 = vpow.pop %v1479
      %v1481 = vmul.f32 %v1445, 1.442695
      %v1482 = vpow.pop %v1481
      %v1483 = vmul.f32 %v1446, 1.442695
      %v1484 = vpow.pop %v1483
      %v1485 = vmul.f32 %v1447, 1.442695
      %v1486 = vpow.pop %v1485
      %v1487 = vmul.f32 %v1448, 1.442695
      %v1488 = vpow.pop %v1487
      %v1489 = vmul.f32 %v1449, 1.442695
      %v1490 = vpow.pop %v1489
      %v1491 = vmul.f32 %v1450, 1.442695
      %v1492 = vpow.pop %v1491
      %v1493 = vmul.f32 %v1451, 1.442695
      %v1494 = vpow.pop %v1493
      %v1495 = vmul.f32 %v1452, 1.442695
      %v1496 = vpow.pop %v1495
      %v1497 = vmul.f32 %v1453, 1.442695
      %v1498 = vpow.pop %v1497
      %v1499 = vmul.f32 %v1454, 1.442695
      %v1500 = vpow.pop %v1499
      %v1501 = vmul.f32 %v1455, 1.442695
      %v1502 = vpow.pop %v1501
      %v1503 = vmul.f32 %v1456, 1.442695
      %v1504 = vpow.pop %v1503
      %v1505 = vmul.f32 %v1457, 1.442695
      %v1506 = vpow.pop %v1505
      %v1507 = vmul.f32 %v1458, 1.442695
      %v1508 = vpow.pop %v1507
      %v1509 = vmul.f32 %v1459, 1.442695
      %v1510 = vpow.pop %v1509
      %v1511 = vmul.f32 %v1460, 1.442695
      %v1512 = vpow.pop %v1511
      %v1513 = vmul.f32 %v1461, 1.442695
      %v1514 = vpow.pop %v1513
      %v1515 = vmul.f32 %v1462, 1.442695
      %v1516 = vpow.pop %v1515
      %v1517 = vmul.f32 %v1463, 1.442695
      %v1518 = vpow.pop %v1517
      %v1519 = vmul.f32 %v1464, 1.442695
      %v1520 = vpow.pop %v1519
      %v1521 = vmul.f32 %v1465, 1.442695
      %v1522 = vpow.pop %v1521
      %v1523 = vmul.f32 %v1466, 1.442695
      %v1524 = vpow.pop %v1523
      %v1525 = vmul.f32 %v1467, 1.442695
      %v1526 = vpow.pop %v1525
      %v1527 = vmul.f32 %v1468, 1.442695
      %v1528 = vpow.pop %v1527
      %v1529 = vmul.f32 %v1469, 1.442695
      %v1530 = vpow.pop %v1529
      %v1531 = vmul.f32 %v1470, 1.442695
      %v1532 = vpow.pop %v1531
      %v1533 = vmul.f32 %v1471, 1.442695
      %v1534 = vpow.pop %v1533
      %v1535 = vmul.f32 %v1472, 1.442695
      %v1536 = vpow.pop %v1535
      %v1537 = vsel %vm1344, %v1474, 0.0
      %1538 = vadd.xlane.f32.xlu0 %v1537
      %v1539 = vpop.xlane.xlu0 %1538
      %v1540 = vsel %vm1344, %v1476, 0.0
      %1541 = vadd.xlane.f32.xlu0 %v1540
      %v1542 = vpop.xlane.xlu0 %1541
      %v1543 = vsel %vm1344, %v1478, 0.0
      %1544 = vadd.xlane.f32.xlu0 %v1543
      %v1545 = vpop.xlane.xlu0 %1544
      %v1546 = vsel %vm1344, %v1480, 0.0
      %1547 = vadd.xlane.f32.xlu0 %v1546
      %v1548 = vpop.xlane.xlu0 %1547
      %v1549 = vsel %vm1344, %v1482, 0.0
      %1550 = vadd.xlane.f32.xlu0 %v1549
      %v1551 = vpop.xlane.xlu0 %1550
      %v1552 = vsel %vm1344, %v1484, 0.0
      %1553 = vadd.xlane.f32.xlu0 %v1552
      %v1554 = vpop.xlane.xlu0 %1553
      %v1555 = vsel %vm1344, %v1486, 0.0
      %1556 = vadd.xlane.f32.xlu0 %v1555
      %v1557 = vpop.xlane.xlu0 %1556
      %v1558 = vsel %vm1344, %v1488, 0.0
      %1559 = vadd.xlane.f32.xlu0 %v1558
      %v1560 = vpop.xlane.xlu0 %1559
      %v1561 = vsel %vm1344, %v1490, 0.0
      %1562 = vadd.xlane.f32.xlu0 %v1561
      %v1563 = vpop.xlane.xlu0 %1562
      %v1564 = vsel %vm1344, %v1492, 0.0
      %1565 = vadd.xlane.f32.xlu0 %v1564
      %v1566 = vpop.xlane.xlu0 %1565
      %v1567 = vsel %vm1344, %v1494, 0.0
      %1568 = vadd.xlane.f32.xlu0 %v1567
      %v1569 = vpop.xlane.xlu0 %1568
      %v1570 = vsel %vm1344, %v1496, 0.0
      %1571 = vadd.xlane.f32.xlu0 %v1570
      %v1572 = vpop.xlane.xlu0 %1571
      %v1573 = vsel %vm1344, %v1498, 0.0
      %1574 = vadd.xlane.f32.xlu0 %v1573
      %v1575 = vpop.xlane.xlu0 %1574
      %v1576 = vsel %vm1344, %v1500, 0.0
      %1577 = vadd.xlane.f32.xlu0 %v1576
      %v1578 = vpop.xlane.xlu0 %1577
      %v1579 = vsel %vm1344, %v1502, 0.0
      %1580 = vadd.xlane.f32.xlu0 %v1579
      %v1581 = vpop.xlane.xlu0 %1580
      %v1582 = vsel %vm1344, %v1504, 0.0
      %1583 = vadd.xlane.f32.xlu0 %v1582
      %v1584 = vpop.xlane.xlu0 %1583
      %v1585 = vsel %vm1344, %v1506, 0.0
      %1586 = vadd.xlane.f32.xlu0 %v1585
      %v1587 = vpop.xlane.xlu0 %1586
      %v1588 = vsel %vm1344, %v1508, 0.0
      %1589 = vadd.xlane.f32.xlu0 %v1588
      %v1590 = vpop.xlane.xlu0 %1589
      %v1591 = vsel %vm1344, %v1510, 0.0
      %1592 = vadd.xlane.f32.xlu0 %v1591
      %v1593 = vpop.xlane.xlu0 %1592
      %v1594 = vsel %vm1344, %v1512, 0.0
      %1595 = vadd.xlane.f32.xlu0 %v1594
      %v1596 = vpop.xlane.xlu0 %1595
      %v1597 = vsel %vm1344, %v1514, 0.0
      %1598 = vadd.xlane.f32.xlu0 %v1597
      %v1599 = vpop.xlane.xlu0 %1598
      %v1600 = vsel %vm1344, %v1516, 0.0
      %1601 = vadd.xlane.f32.xlu0 %v1600
      %v1602 = vpop.xlane.xlu0 %1601
      %v1603 = vsel %vm1344, %v1518, 0.0
      %1604 = vadd.xlane.f32.xlu0 %v1603
      %v1605 = vpop.xlane.xlu0 %1604
      %v1606 = vsel %vm1344, %v1520, 0.0
      %1607 = vadd.xlane.f32.xlu0 %v1606
      %v1608 = vpop.xlane.xlu0 %1607
      %v1609 = vsel %vm1344, %v1522, 0.0
      %1610 = vadd.xlane.f32.xlu0 %v1609
      %v1611 = vpop.xlane.xlu0 %1610
      %v1612 = vsel %vm1344, %v1524, 0.0
      %1613 = vadd.xlane.f32.xlu0 %v1612
      %v1614 = vpop.xlane.xlu0 %1613
      %v1615 = vsel %vm1344, %v1526, 0.0
      %1616 = vadd.xlane.f32.xlu0 %v1615
      %v1617 = vpop.xlane.xlu0 %1616
      %v1618 = vsel %vm1344, %v1528, 0.0
      %1619 = vadd.xlane.f32.xlu0 %v1618
      %v1620 = vpop.xlane.xlu0 %1619
      %v1621 = vsel %vm1344, %v1530, 0.0
      %1622 = vadd.xlane.f32.xlu0 %v1621
      %v1623 = vpop.xlane.xlu0 %1622
      %v1624 = vsel %vm1344, %v1532, 0.0
      %1625 = vadd.xlane.f32.xlu0 %v1624
      %v1626 = vpop.xlane.xlu0 %1625
      %v1627 = vsel %vm1344, %v1534, 0.0
      %1628 = vadd.xlane.f32.xlu0 %v1627
      %v1629 = vpop.xlane.xlu0 %1628
      %v1630 = vsel %vm1344, %v1536, 0.0
      %1631 = vadd.xlane.f32.xlu0 %v1630
      %v1632 = vpop.xlane.xlu0 %1631
      %v1633 = vrcp.pop %v1539
      %v1634 = vrcp.pop %v1542
      %v1635 = vrcp.pop %v1545
      %v1636 = vrcp.pop %v1548
      %v1637 = vrcp.pop %v1551
      %v1638 = vrcp.pop %v1554
      %v1639 = vrcp.pop %v1557
      %v1640 = vrcp.pop %v1560
      %v1641 = vrcp.pop %v1563
      %v1642 = vrcp.pop %v1566
      %v1643 = vrcp.pop %v1569
      %v1644 = vrcp.pop %v1572
      %v1645 = vrcp.pop %v1575
      %v1646 = vrcp.pop %v1578
      %v1647 = vrcp.pop %v1581
      %v1648 = vrcp.pop %v1584
      %v1649 = vrcp.pop %v1587
      %v1650 = vrcp.pop %v1590
      %v1651 = vrcp.pop %v1593
      %v1652 = vrcp.pop %v1596
      %v1653 = vrcp.pop %v1599
      %v1654 = vrcp.pop %v1602
      %v1655 = vrcp.pop %v1605
      %v1656 = vrcp.pop %v1608
      %v1657 = vrcp.pop %v1611
      %v1658 = vrcp.pop %v1614
      %v1659 = vrcp.pop %v1617
      %v1660 = vrcp.pop %v1620
      %v1661 = vrcp.pop %v1623
      %v1662 = vrcp.pop %v1626
      %v1663 = vrcp.pop %v1629
      %v1664 = vrcp.pop %v1632
      %v1665 = vmul.f32 %v1474, %v1633
      %v1666 = vmul.f32 %v1476, %v1634
      %v1667 = vmul.f32 %v1478, %v1635
      %v1668 = vmul.f32 %v1480, %v1636
      %v1669 = vmul.f32 %v1482, %v1637
      %v1670 = vmul.f32 %v1484, %v1638
      %v1671 = vmul.f32 %v1486, %v1639
      %v1672 = vmul.f32 %v1488, %v1640
      %v1673 = vmul.f32 %v1490, %v1641
      %v1674 = vmul.f32 %v1492, %v1642
      %v1675 = vmul.f32 %v1494, %v1643
      %v1676 = vmul.f32 %v1496, %v1644
      %v1677 = vmul.f32 %v1498, %v1645
      %v1678 = vmul.f32 %v1500, %v1646
      %v1679 = vmul.f32 %v1502, %v1647
      %v1680 = vmul.f32 %v1504, %v1648
      %v1681 = vmul.f32 %v1506, %v1649
      %v1682 = vmul.f32 %v1508, %v1650
      %v1683 = vmul.f32 %v1510, %v1651
      %v1684 = vmul.f32 %v1512, %v1652
      %v1685 = vmul.f32 %v1514, %v1653
      %v1686 = vmul.f32 %v1516, %v1654
      %v1687 = vmul.f32 %v1518, %v1655
      %v1688 = vmul.f32 %v1520, %v1656
      %v1689 = vmul.f32 %v1522, %v1657
      %v1690 = vmul.f32 %v1524, %v1658
      %v1691 = vmul.f32 %v1526, %v1659
      %v1692 = vmul.f32 %v1528, %v1660
      %v1693 = vmul.f32 %v1530, %v1661
      %v1694 = vmul.f32 %v1532, %v1662
      %v1695 = vmul.f32 %v1534, %v1663
      %v1696 = vmul.f32 %v1536, %v1664
      %v1697 = vpack.c.bf16 %v1666, %v1665
      %v1698 = vpack.c.bf16 %v1668, %v1667
      %v1699 = vpack.c.bf16 %v1670, %v1669
      %v1700 = vpack.c.bf16 %v1672, %v1671
      %v1701 = vpack.c.bf16 %v1674, %v1673
      %v1702 = vpack.c.bf16 %v1676, %v1675
      %v1703 = vpack.c.bf16 %v1678, %v1677
      %v1704 = vpack.c.bf16 %v1680, %v1679
      %v1705 = vpack.c.bf16 %v1682, %v1681
      %v1706 = vpack.c.bf16 %v1684, %v1683
      %v1707 = vpack.c.bf16 %v1686, %v1685
      %v1708 = vpack.c.bf16 %v1688, %v1687
      %v1709 = vpack.c.bf16 %v1690, %v1689
      %v1710 = vpack.c.bf16 %v1692, %v1691
      %v1711 = vpack.c.bf16 %v1694, %v1693
      %v1712 = vpack.c.bf16 %v1696, %v1695
      %1713 = vxpose.xlu0.c.b16.start [1/8] %v914, 128
      %1714 = vxpose.xlu0.c.b16.cont [2/8] %v915, 128
      %1715 = vxpose.xlu0.c.b16.cont [3/8] %v916, 128
      %1716 = vxpose.xlu0.c.b16.cont [4/8] %v917, 128
      %1717 = vxpose.xlu0.c.b16.cont [5/8] 0, 128
      %1718 = vxpose.xlu0.c.b16.cont [6/8] 0, 128
      %1719 = vxpose.xlu0.c.b16.cont [7/8] 0, 128
      %1720 = vxpose.xlu0.c.b16.end [8/8] 0, 128
      %v1721 = vpop.trf.xlu0
      %v1722 = vpop.trf.xlu0
      %v1723 = vpop.trf.xlu0
      %v1724 = vpop.trf.xlu0
      %v1725 = vpop.trf.xlu0
      %v1726 = vpop.trf.xlu0
      %v1727 = vpop.trf.xlu0
      %v1728 = vpop.trf.xlu0
      %1729 = vxpose.xlu0.c.b16.start [1/8] %v923, 128
      %1730 = vxpose.xlu0.c.b16.cont [2/8] %v925, 128
      %1731 = vxpose.xlu0.c.b16.cont [3/8] %v927, 128
      %1732 = vxpose.xlu0.c.b16.cont [4/8] %v929, 128
      %1733 = vxpose.xlu0.c.b16.cont [5/8] 0, 128
      %1734 = vxpose.xlu0.c.b16.cont [6/8] 0, 128
      %1735 = vxpose.xlu0.c.b16.cont [7/8] 0, 128
      %1736 = vxpose.xlu0.c.b16.end [8/8] 0, 128
      %v1737 = vpop.trf.xlu0
      %v1738 = vpop.trf.xlu0
      %v1739 = vpop.trf.xlu0
      %v1740 = vpop.trf.xlu0
      %v1741 = vpop.trf.xlu0
      %v1742 = vpop.trf.xlu0
      %v1743 = vpop.trf.xlu0
      %v1744 = vpop.trf.xlu0
      %1745 = vxpose.xlu0.c.b16.start [1/8] %v935, 128
      %1746 = vxpose.xlu0.c.b16.cont [2/8] %v937, 128
      %1747 = vxpose.xlu0.c.b16.cont [3/8] %v939, 128
      %1748 = vxpose.xlu0.c.b16.cont [4/8] %v941, 128
      %1749 = vxpose.xlu0.c.b16.cont [5/8] 0, 128
      %1750 = vxpose.xlu0.c.b16.cont [6/8] 0, 128
      %1751 = vxpose.xlu0.c.b16.cont [7/8] 0, 128
      %1752 = vxpose.xlu0.c.b16.end [8/8] 0, 128
      %v1753 = vpop.trf.xlu0
      %v1754 = vpop.trf.xlu0
      %v1755 = vpop.trf.xlu0
      %v1756 = vpop.trf.xlu0
      %v1757 = vpop.trf.xlu0
      %v1758 = vpop.trf.xlu0
      %v1759 = vpop.trf.xlu0
      %v1760 = vpop.trf.xlu0
      %1761 = vxpose.xlu0.c.b16.start [1/8] %v947, 128
      %1762 = vxpose.xlu0.c.b16.cont [2/8] %v949, 128
      %1763 = vxpose.xlu0.c.b16.cont [3/8] %v951, 128
      %1764 = vxpose.xlu0.c.b16.cont [4/8] %v953, 128
      %1765 = vxpose.xlu0.c.b16.cont [5/8] 0, 128
      %1766 = vxpose.xlu0.c.b16.cont [6/8] 0, 128
      %1767 = vxpose.xlu0.c.b16.cont [7/8] 0, 128
      %1768 = vxpose.xlu0.c.b16.end [8/8] 0, 128
      %v1769 = vpop.trf.xlu0
      %v1770 = vpop.trf.xlu0
      %v1771 = vpop.trf.xlu0
      %v1772 = vpop.trf.xlu0
      %v1773 = vpop.trf.xlu0
      %v1774 = vpop.trf.xlu0
      %v1775 = vpop.trf.xlu0
      %v1776 = vpop.trf.xlu0
      %v1778 = vsel %vm1344, %v1721, 0
      %v1781 = vsel %vm1344, %v1697, 0
      %v1784 = vsel %vm1344, %v1698, 0
      %v1787 = vsel %vm1344, %v1699, 0
      %v1790 = vsel %vm1344, %v1700, 0
      %1792 = vmatprep.subr.bf16.mxu0 0
      %1793 = vmatpush1.bf16.xpose.msra.mxu0 %v1781
      %1794 = vmatprep.subr.bf16.mxu0 0
      %1795 = vmatpush1.bf16.xpose.msra.mxu0 %v1784
      %1796 = vmatprep.subr.bf16.mxu0 0
      %1797 = vmatpush1.bf16.xpose.msra.mxu0 %v1787
      %1798 = vmatprep.subr.bf16.mxu0 0
      %1799 = vmatpush1.bf16.xpose.msra.mxu0 %v1790
      %1800 = vmatprep.subr.bf16.mxu0 0
      %1801 = vmatpush1.bf16.xpose.msra.mxu0 0
      %1802 = vmatprep.subr.bf16.mxu0 0
      %1803 = vmatpush1.bf16.xpose.msra.mxu0 0
      %1804 = vmatprep.subr.bf16.mxu0 0
      %1805 = vmatpush1.bf16.xpose.msra.mxu0 0
      %1806 = vmatprep.subr.bf16.mxu0 0
      %1807 = vmatpush1.bf16.xpose.msra.mxu0 0
      %1808 = vmatprep.subr.bf16.mxu0 0
      %1809 = vmatpush1.bf16.xpose.msra.mxu0 0
      %1810 = vmatprep.subr.bf16.mxu0 0
      %1811 = vmatpush1.bf16.xpose.msra.mxu0 0
      %1812 = vmatprep.subr.bf16.mxu0 0
      %1813 = vmatpush1.bf16.xpose.msra.mxu0 0
      %1814 = vmatprep.subr.bf16.mxu0 0
      %1815 = vmatpush1.bf16.xpose.msra.mxu0 0
      %1816 = vmatprep.subr.bf16.mxu0 0
      %1817 = vmatpush1.bf16.xpose.msra.mxu0 0
      %1818 = vmatprep.subr.bf16.mxu0 0
      %1819 = vmatpush1.bf16.xpose.msra.mxu0 0
      %1820 = vmatprep.subr.bf16.mxu0 0
      %1821 = vmatpush1.bf16.xpose.msra.mxu0 0
      %1822 = vmatprep.subr.bf16.mxu0 0
      %1823 = vmatpush1.bf16.xpose.msra.mxu0 0
      %1824 = vmatprep.mubr.bf16.mxu0 0
      %1825 = vmatmul.mubr.bf16.gmra.mrb[0].mxu0 %v1778
      %v1826 = vpop.f32.mrb[0].mxu0
      %v1827 = vadd.f32 0.0, %v1826
      %v1828 = vpop.f32.mrb[0].mxu0
      %v1829 = vpop.f32.mrb[0].mxu0
      %v1830 = vpop.f32.mrb[0].mxu0
      %1831 = vdwg.mxu0
      %v1833 = vsel %vm1344, %v1737, 0
      %v1836 = vsel %vm1344, %v1701, 0
      %v1839 = vsel %vm1344, %v1702, 0
      %v1842 = vsel %vm1344, %v1703, 0
      %v1845 = vsel %vm1344, %v1704, 0
      %1847 = vmatprep.subr.bf16.mxu0 0
      %1848 = vmatpush1.bf16.xpose.msra.mxu0 %v1836
      %1849 = vmatprep.subr.bf16.mxu0 0
      %1850 = vmatpush1.bf16.xpose.msra.mxu0 %v1839
      %1851 = vmatprep.subr.bf16.mxu0 0
      %1852 = vmatpush1.bf16.xpose.msra.mxu0 %v1842
      %1853 = vmatprep.subr.bf16.mxu0 0
      %1854 = vmatpush1.bf16.xpose.msra.mxu0 %v1845
      %1855 = vmatprep.subr.bf16.mxu0 0
      %1856 = vmatpush1.bf16.xpose.msra.mxu0 0
      %1857 = vmatprep.subr.bf16.mxu0 0
      %1858 = vmatpush1.bf16.xpose.msra.mxu0 0
      %1859 = vmatprep.subr.bf16.mxu0 0
      %1860 = vmatpush1.bf16.xpose.msra.mxu0 0
      %1861 = vmatprep.subr.bf16.mxu0 0
      %1862 = vmatpush1.bf16.xpose.msra.mxu0 0
      %1863 = vmatprep.subr.bf16.mxu0 0
      %1864 = vmatpush1.bf16.xpose.msra.mxu0 0
      %1865 = vmatprep.subr.bf16.mxu0 0
      %1866 = vmatpush1.bf16.xpose.msra.mxu0 0
      %1867 = vmatprep.subr.bf16.mxu0 0
      %1868 = vmatpush1.bf16.xpose.msra.mxu0 0
      %1869 = vmatprep.subr.bf16.mxu0 0
      %1870 = vmatpush1.bf16.xpose.msra.mxu0 0
      %1871 = vmatprep.subr.bf16.mxu0 0
      %1872 = vmatpush1.bf16.xpose.msra.mxu0 0
      %1873 = vmatprep.subr.bf16.mxu0 0
      %1874 = vmatpush1.bf16.xpose.msra.mxu0 0
      %1875 = vmatprep.subr.bf16.mxu0 0
      %1876 = vmatpush1.bf16.xpose.msra.mxu0 0
      %1877 = vmatprep.subr.bf16.mxu0 0
      %1878 = vmatpush1.bf16.xpose.msra.mxu0 0
      %1879 = vmatprep.mubr.bf16.mxu0 0
      %1880 = vmatmul.mubr.bf16.gmra.mrb[0].mxu0 %v1833
      %v1881 = vpop.f32.mrb[0].mxu0
      %v1882 = vadd.f32 0.0, %v1881
      %v1883 = vpop.f32.mrb[0].mxu0
      %v1884 = vpop.f32.mrb[0].mxu0
      %v1885 = vpop.f32.mrb[0].mxu0
      %1886 = vdwg.mxu0
      %v1888 = vsel %vm1344, %v1753, 0
      %v1891 = vsel %vm1344, %v1705, 0
      %v1894 = vsel %vm1344, %v1706, 0
      %v1897 = vsel %vm1344, %v1707, 0
      %v1900 = vsel %vm1344, %v1708, 0
      %1902 = vmatprep.subr.bf16.mxu0 0
      %1903 = vmatpush1.bf16.xpose.msra.mxu0 %v1891
      %1904 = vmatprep.subr.bf16.mxu0 0
      %1905 = vmatpush1.bf16.xpose.msra.mxu0 %v1894
      %1906 = vmatprep.subr.bf16.mxu0 0
      %1907 = vmatpush1.bf16.xpose.msra.mxu0 %v1897
      %1908 = vmatprep.subr.bf16.mxu0 0
      %1909 = vmatpush1.bf16.xpose.msra.mxu0 %v1900
      %1910 = vmatprep.subr.bf16.mxu0 0
      %1911 = vmatpush1.bf16.xpose.msra.mxu0 0
      %1912 = vmatprep.subr.bf16.mxu0 0
      %1913 = vmatpush1.bf16.xpose.msra.mxu0 0
      %1914 = vmatprep.subr.bf16.mxu0 0
      %1915 = vmatpush1.bf16.xpose.msra.mxu0 0
      %1916 = vmatprep.subr.bf16.mxu0 0
      %1917 = vmatpush1.bf16.xpose.msra.mxu0 0
      %1918 = vmatprep.subr.bf16.mxu0 0
      %1919 = vmatpush1.bf16.xpose.msra.mxu0 0
      %1920 = vmatprep.subr.bf16.mxu0 0
      %1921 = vmatpush1.bf16.xpose.msra.mxu0 0
      %1922 = vmatprep.subr.bf16.mxu0 0
      %1923 = vmatpush1.bf16.xpose.msra.mxu0 0
      %1924 = vmatprep.subr.bf16.mxu0 0
      %1925 = vmatpush1.bf16.xpose.msra.mxu0 0
      %1926 = vmatprep.subr.bf16.mxu0 0
      %1927 = vmatpush1.bf16.xpose.msra.mxu0 0
      %1928 = vmatprep.subr.bf16.mxu0 0
      %1929 = vmatpush1.bf16.xpose.msra.mxu0 0
      %1930 = vmatprep.subr.bf16.mxu0 0
      %1931 = vmatpush1.bf16.xpose.msra.mxu0 0
      %1932 = vmatprep.subr.bf16.mxu0 0
      %1933 = vmatpush1.bf16.xpose.msra.mxu0 0
      %1934 = vmatprep.mubr.bf16.mxu0 0
      %1935 = vmatmul.mubr.bf16.gmra.mrb[0].mxu0 %v1888
      %v1936 = vpop.f32.mrb[0].mxu0
      %v1937 = vadd.f32 0.0, %v1936
      %v1938 = vpop.f32.mrb[0].mxu0
      %v1939 = vpop.f32.mrb[0].mxu0
      %v1940 = vpop.f32.mrb[0].mxu0
      %1941 = vdwg.mxu0
      %v1943 = vsel %vm1344, %v1769, 0
      %v1946 = vsel %vm1344, %v1709, 0
      %v1949 = vsel %vm1344, %v1710, 0
      %v1952 = vsel %vm1344, %v1711, 0
      %v1955 = vsel %vm1344, %v1712, 0
      %1957 = vmatprep.subr.bf16.mxu0 0
      %1958 = vmatpush1.bf16.xpose.msra.mxu0 %v1946
      %1959 = vmatprep.subr.bf16.mxu0 0
      %1960 = vmatpush1.bf16.xpose.msra.mxu0 %v1949
      %1961 = vmatprep.subr.bf16.mxu0 0
      %1962 = vmatpush1.bf16.xpose.msra.mxu0 %v1952
      %1963 = vmatprep.subr.bf16.mxu0 0
      %1964 = vmatpush1.bf16.xpose.msra.mxu0 %v1955
      %1965 = vmatprep.subr.bf16.mxu0 0
      %1966 = vmatpush1.bf16.xpose.msra.mxu0 0
      %1967 = vmatprep.subr.bf16.mxu0 0
      %1968 = vmatpush1.bf16.xpose.msra.mxu0 0
      %1969 = vmatprep.subr.bf16.mxu0 0
      %1970 = vmatpush1.bf16.xpose.msra.mxu0 0
      %1971 = vmatprep.subr.bf16.mxu0 0
      %1972 = vmatpush1.bf16.xpose.msra.mxu0 0
      %1973 = vmatprep.subr.bf16.mxu0 0
      %1974 = vmatpush1.bf16.xpose.msra.mxu0 0
      %1975 = vmatprep.subr.bf16.mxu0 0
      %1976 = vmatpush1.bf16.xpose.msra.mxu0 0
      %1977 = vmatprep.subr.bf16.mxu0 0
      %1978 = vmatpush1.bf16.xpose.msra.mxu0 0
      %1979 = vmatprep.subr.bf16.mxu0 0
      %1980 = vmatpush1.bf16.xpose.msra.mxu0 0
      %1981 = vmatprep.subr.bf16.mxu0 0
      %1982 = vmatpush1.bf16.xpose.msra.mxu0 0
      %1983 = vmatprep.subr.bf16.mxu0 0
      %1984 = vmatpush1.bf16.xpose.msra.mxu0 0
      %1985 = vmatprep.subr.bf16.mxu0 0
      %1986 = vmatpush1.bf16.xpose.msra.mxu0 0
      %1987 = vmatprep.subr.bf16.mxu0 0
      %1988 = vmatpush1.bf16.xpose.msra.mxu0 0
      %1989 = vmatprep.mubr.bf16.mxu0 0
      %1990 = vmatmul.mubr.bf16.gmra.mrb[0].mxu0 %v1943
      %v1991 = vpop.f32.mrb[0].mxu0
      %v1992 = vadd.f32 0.0, %v1991
      %v1993 = vpop.f32.mrb[0].mxu0
      %v1994 = vpop.f32.mrb[0].mxu0
      %v1995 = vpop.f32.mrb[0].mxu0
      %1996 = vdwg.mxu0
      %1997 = vxpose.xlu0.b32.start [1/16] %v1827, 128
      %1998 = vxpose.xlu0.b32.cont [2/16] 0.0, 128
      %1999 = vxpose.xlu0.b32.cont [3/16] 0.0, 128
      %2000 = vxpose.xlu0.b32.cont [4/16] 0.0, 128
      %2001 = vxpose.xlu0.b32.cont [5/16] 0.0, 128
      %2002 = vxpose.xlu0.b32.cont [6/16] 0.0, 128
      %2003 = vxpose.xlu0.b32.cont [7/16] 0.0, 128
      %2004 = vxpose.xlu0.b32.cont [8/16] 0.0, 128
      %2005 = vxpose.xlu0.b32.cont [9/16] 0.0, 128
      %2006 = vxpose.xlu0.b32.cont [10/16] 0.0, 128
      %2007 = vxpose.xlu0.b32.cont [11/16] 0.0, 128
      %2008 = vxpose.xlu0.b32.cont [12/16] 0.0, 128
      %2009 = vxpose.xlu0.b32.cont [13/16] 0.0, 128
      %2010 = vxpose.xlu0.b32.cont [14/16] 0.0, 128
      %2011 = vxpose.xlu0.b32.cont [15/16] 0.0, 128
      %2012 = vxpose.xlu0.b32.end [16/16] 0.0, 128
      %v2013 = vpop.trf.xlu0
      %v2014 = vpop.trf.xlu0
      %v2015 = vpop.trf.xlu0
      %v2016 = vpop.trf.xlu0
      %v2017 = vpop.trf.xlu0
      %v2018 = vpop.trf.xlu0
      %v2019 = vpop.trf.xlu0
      %v2020 = vpop.trf.xlu0
      %v2021 = vpop.trf.xlu0
      %v2022 = vpop.trf.xlu0
      %v2023 = vpop.trf.xlu0
      %v2024 = vpop.trf.xlu0
      %v2025 = vpop.trf.xlu0
      %v2026 = vpop.trf.xlu0
      %v2027 = vpop.trf.xlu0
      %v2028 = vpop.trf.xlu0
      %2029 = vxpose.xlu0.b32.start [1/16] %v1882, 128
      %2030 = vxpose.xlu0.b32.cont [2/16] 0.0, 128
      %2031 = vxpose.xlu0.b32.cont [3/16] 0.0, 128
      %2032 = vxpose.xlu0.b32.cont [4/16] 0.0, 128
      %2033 = vxpose.xlu0.b32.cont [5/16] 0.0, 128
      %2034 = vxpose.xlu0.b32.cont [6/16] 0.0, 128
      %2035 = vxpose.xlu0.b32.cont [7/16] 0.0, 128
      %2036 = vxpose.xlu0.b32.cont [8/16] 0.0, 128
      %2037 = vxpose.xlu0.b32.cont [9/16] 0.0, 128
      %2038 = vxpose.xlu0.b32.cont [10/16] 0.0, 128
      %2039 = vxpose.xlu0.b32.cont [11/16] 0.0, 128
      %2040 = vxpose.xlu0.b32.cont [12/16] 0.0, 128
      %2041 = vxpose.xlu0.b32.cont [13/16] 0.0, 128
      %2042 = vxpose.xlu0.b32.cont [14/16] 0.0, 128
      %2043 = vxpose.xlu0.b32.cont [15/16] 0.0, 128
      %2044 = vxpose.xlu0.b32.end [16/16] 0.0, 128
      %v2045 = vpop.trf.xlu0
      %v2046 = vpop.trf.xlu0
      %v2047 = vpop.trf.xlu0
      %v2048 = vpop.trf.xlu0
      %v2049 = vpop.trf.xlu0
      %v2050 = vpop.trf.xlu0
      %v2051 = vpop.trf.xlu0
      %v2052 = vpop.trf.xlu0
      %v2053 = vpop.trf.xlu0
      %v2054 = vpop.trf.xlu0
      %v2055 = vpop.trf.xlu0
      %v2056 = vpop.trf.xlu0
      %v2057 = vpop.trf.xlu0
      %v2058 = vpop.trf.xlu0
      %v2059 = vpop.trf.xlu0
      %v2060 = vpop.trf.xlu0
      %2061 = vxpose.xlu0.b32.start [1/16] %v1937, 128
      %2062 = vxpose.xlu0.b32.cont [2/16] 0.0, 128
      %2063 = vxpose.xlu0.b32.cont [3/16] 0.0, 128
      %2064 = vxpose.xlu0.b32.cont [4/16] 0.0, 128
      %2065 = vxpose.xlu0.b32.cont [5/16] 0.0, 128
      %2066 = vxpose.xlu0.b32.cont [6/16] 0.0, 128
      %2067 = vxpose.xlu0.b32.cont [7/16] 0.0, 128
      %2068 = vxpose.xlu0.b32.cont [8/16] 0.0, 128
      %2069 = vxpose.xlu0.b32.cont [9/16] 0.0, 128
      %2070 = vxpose.xlu0.b32.cont [10/16] 0.0, 128
      %2071 = vxpose.xlu0.b32.cont [11/16] 0.0, 128
      %2072 = vxpose.xlu0.b32.cont [12/16] 0.0, 128
      %2073 = vxpose.xlu0.b32.cont [13/16] 0.0, 128
      %2074 = vxpose.xlu0.b32.cont [14/16] 0.0, 128
      %2075 = vxpose.xlu0.b32.cont [15/16] 0.0, 128
      %2076 = vxpose.xlu0.b32.end [16/16] 0.0, 128
      %v2077 = vpop.trf.xlu0
      %v2078 = vpop.trf.xlu0
      %v2079 = vpop.trf.xlu0
      %v2080 = vpop.trf.xlu0
      %v2081 = vpop.trf.xlu0
      %v2082 = vpop.trf.xlu0
      %v2083 = vpop.trf.xlu0
      %v2084 = vpop.trf.xlu0
      %v2085 = vpop.trf.xlu0
      %v2086 = vpop.trf.xlu0
      %v2087 = vpop.trf.xlu0
      %v2088 = vpop.trf.xlu0
      %v2089 = vpop.trf.xlu0
      %v2090 = vpop.trf.xlu0
      %v2091 = vpop.trf.xlu0
      %v2092 = vpop.trf.xlu0
      %2093 = vxpose.xlu0.b32.start [1/16] %v1992, 128
      %2094 = vxpose.xlu0.b32.cont [2/16] 0.0, 128
      %2095 = vxpose.xlu0.b32.cont [3/16] 0.0, 128
      %2096 = vxpose.xlu0.b32.cont [4/16] 0.0, 128
      %2097 = vxpose.xlu0.b32.cont [5/16] 0.0, 128
      %2098 = vxpose.xlu0.b32.cont [6/16] 0.0, 128
      %2099 = vxpose.xlu0.b32.cont [7/16] 0.0, 128
      %2100 = vxpose.xlu0.b32.cont [8/16] 0.0, 128
      %2101 = vxpose.xlu0.b32.cont [9/16] 0.0, 128
      %2102 = vxpose.xlu0.b32.cont [10/16] 0.0, 128
      %2103 = vxpose.xlu0.b32.cont [11/16] 0.0, 128
      %2104 = vxpose.xlu0.b32.cont [12/16] 0.0, 128
      %2105 = vxpose.xlu0.b32.cont [13/16] 0.0, 128
      %2106 = vxpose.xlu0.b32.cont [14/16] 0.0, 128
      %2107 = vxpose.xlu0.b32.cont [15/16] 0.0, 128
      %2108 = vxpose.xlu0.b32.end [16/16] 0.0, 128
      %v2109 = vpop.trf.xlu0
      %v2110 = vpop.trf.xlu0
      %v2111 = vpop.trf.xlu0
      %v2112 = vpop.trf.xlu0
      %v2113 = vpop.trf.xlu0
      %v2114 = vpop.trf.xlu0
      %v2115 = vpop.trf.xlu0
      %v2116 = vpop.trf.xlu0
      %v2117 = vpop.trf.xlu0
      %v2118 = vpop.trf.xlu0
      %v2119 = vpop.trf.xlu0
      %v2120 = vpop.trf.xlu0
      %v2121 = vpop.trf.xlu0
      %v2122 = vpop.trf.xlu0
      %v2123 = vpop.trf.xlu0
      %v2124 = vpop.trf.xlu0
      %v2125 = vcombine.low %v2013, %v2077
      %v2126 = vcombine.high %v2013, %v2077
      %v2128 = vunpack.c.l.s4 1983009808
      %v2129 = vunpack.c.0.s8 %v2128
      %v2130 = vlaneseq
      %v2131 = vshrl.u32 %v2130, 7
      %v2132 = vsub.s32 %v2129, %v2131
      %v2133 = vrot.slane %v2125, %v2132
      %v2135 = vunpack.c.l.s4 1983009808
      %v2136 = vunpack.c.0.s8 %v2135
      %v2137 = vlaneseq
      %v2138 = vshrl.u32 %v2137, 7
      %v2139 = vsub.s32 %v2136, %v2138
      %v2140 = vrot.slane %v2126, %v2139
      %v2141 = vcombine.low %v2045, %v2109
      %v2142 = vcombine.high %v2045, %v2109
      %v2144 = vunpack.c.l.s4 1983009808
      %v2145 = vunpack.c.0.s8 %v2144
      %v2146 = vlaneseq
      %v2147 = vshrl.u32 %v2146, 7
      %v2148 = vsub.s32 %v2145, %v2147
      %v2149 = vrot.slane %v2141, %v2148
      %v2151 = vunpack.c.l.s4 1983009808
      %v2152 = vunpack.c.0.s8 %v2151
      %v2153 = vlaneseq
      %v2154 = vshrl.u32 %v2153, 7
      %v2155 = vsub.s32 %v2152, %v2154
      %v2156 = vrot.slane %v2142, %v2155
      %v2157 = vcombine.low %v2133, %v2149
      %v2158 = vcombine.high %v2133, %v2149
      %v2160 = vunpack.c.l.s4 1934713408
      %v2161 = vunpack.c.0.s8 %v2160
      %v2162 = vlaneseq
      %v2163 = vshrl.u32 %v2162, 7
      %v2164 = vsub.s32 %v2161, %v2163
      %v2165 = vrot.slane %v2157, %v2164
      %v2167 = vunpack.c.l.s4 1934713408
      %v2168 = vunpack.c.0.s8 %v2167
      %v2169 = vlaneseq
      %v2170 = vshrl.u32 %v2169, 7
      %v2171 = vsub.s32 %v2168, %v2170
      %v2172 = vrot.slane %v2158, %v2171
      %v2173 = vcombine.low %v2140, %v2156
      %v2174 = vcombine.high %v2140, %v2156
      %v2176 = vunpack.c.l.s4 1934713408
      %v2177 = vunpack.c.0.s8 %v2176
      %v2178 = vlaneseq
      %v2179 = vshrl.u32 %v2178, 7
      %v2180 = vsub.s32 %v2177, %v2179
      %v2181 = vrot.slane %v2173, %v2180
      %v2183 = vunpack.c.l.s4 1934713408
      %v2184 = vunpack.c.0.s8 %v2183
      %v2185 = vlaneseq
      %v2186 = vshrl.u32 %v2185, 7
      %v2187 = vsub.s32 %v2184, %v2186
      %v2188 = vrot.slane %v2174, %v2187
      %v2189 = vcombine.high %v2165, 0.0
      %v2190 = vcombine.high %v2172, 0.0
      %v2191 = vcombine.high %v2181, 0.0
      %v2192 = vcombine.high %v2188, 0.0
      %v2193 = vcombine.low %v2014, %v2078
      %v2194 = vcombine.high %v2014, %v2078
      %v2196 = vunpack.c.l.s4 1983009808
      %v2197 = vunpack.c.0.s8 %v2196
      %v2198 = vlaneseq
      %v2199 = vshrl.u32 %v2198, 7
      %v2200 = vsub.s32 %v2197, %v2199
      %v2201 = vrot.slane %v2193, %v2200
      %v2203 = vunpack.c.l.s4 1983009808
      %v2204 = vunpack.c.0.s8 %v2203
      %v2205 = vlaneseq
      %v2206 = vshrl.u32 %v2205, 7
      %v2207 = vsub.s32 %v2204, %v2206
      %v2208 = vrot.slane %v2194, %v2207
      %v2209 = vcombine.low %v2046, %v2110
      %v2210 = vcombine.high %v2046, %v2110
      %v2212 = vunpack.c.l.s4 1983009808
      %v2213 = vunpack.c.0.s8 %v2212
      %v2214 = vlaneseq
      %v2215 = vshrl.u32 %v2214, 7
      %v2216 = vsub.s32 %v2213, %v2215
      %v2217 = vrot.slane %v2209, %v2216
      %v2219 = vunpack.c.l.s4 1983009808
      %v2220 = vunpack.c.0.s8 %v2219
      %v2221 = vlaneseq
      %v2222 = vshrl.u32 %v2221, 7
      %v2223 = vsub.s32 %v2220, %v2222
      %v2224 = vrot.slane %v2210, %v2223
      %v2225 = vcombine.low %v2201, %v2217
      %v2226 = vcombine.high %v2201, %v2217
      %v2228 = vunpack.c.l.s4 1934713408
      %v2229 = vunpack.c.0.s8 %v2228
      %v2230 = vlaneseq
      %v2231 = vshrl.u32 %v2230, 7
      %v2232 = vsub.s32 %v2229, %v2231
      %v2233 = vrot.slane %v2225, %v2232
      %v2235 = vunpack.c.l.s4 1934713408
      %v2236 = vunpack.c.0.s8 %v2235
      %v2237 = vlaneseq
      %v2238 = vshrl.u32 %v2237, 7
      %v2239 = vsub.s32 %v2236, %v2238
      %v2240 = vrot.slane %v2226, %v2239
      %v2241 = vcombine.low %v2208, %v2224
      %v2242 = vcombine.high %v2208, %v2224
      %v2244 = vunpack.c.l.s4 1934713408
      %v2245 = vunpack.c.0.s8 %v2244
      %v2246 = vlaneseq
      %v2247 = vshrl.u32 %v2246, 7
      %v2248 = vsub.s32 %v2245, %v2247
      %v2249 = vrot.slane %v2241, %v2248
      %v2251 = vunpack.c.l.s4 1934713408
      %v2252 = vunpack.c.0.s8 %v2251
      %v2253 = vlaneseq
      %v2254 = vshrl.u32 %v2253, 7
      %v2255 = vsub.s32 %v2252, %v2254
      %v2256 = vrot.slane %v2242, %v2255
      %v2257 = vcombine.high %v2233, 0.0
      %v2258 = vcombine.high %v2240, 0.0
      %v2259 = vcombine.high %v2249, 0.0
      %v2260 = vcombine.high %v2256, 0.0
      %v2261 = vcombine.low %v2015, %v2079
      %v2262 = vcombine.high %v2015, %v2079
      %v2264 = vunpack.c.l.s4 1983009808
      %v2265 = vunpack.c.0.s8 %v2264
      %v2266 = vlaneseq
      %v2267 = vshrl.u32 %v2266, 7
      %v2268 = vsub.s32 %v2265, %v2267
      %v2269 = vrot.slane %v2261, %v2268
      %v2271 = vunpack.c.l.s4 1983009808
      %v2272 = vunpack.c.0.s8 %v2271
      %v2273 = vlaneseq
      %v2274 = vshrl.u32 %v2273, 7
      %v2275 = vsub.s32 %v2272, %v2274
      %v2276 = vrot.slane %v2262, %v2275
      %v2277 = vcombine.low %v2047, %v2111
      %v2278 = vcombine.high %v2047, %v2111
      %v2280 = vunpack.c.l.s4 1983009808
      %v2281 = vunpack.c.0.s8 %v2280
      %v2282 = vlaneseq
      %v2283 = vshrl.u32 %v2282, 7
      %v2284 = vsub.s32 %v2281, %v2283
      %v2285 = vrot.slane %v2277, %v2284
      %v2287 = vunpack.c.l.s4 1983009808
      %v2288 = vunpack.c.0.s8 %v2287
      %v2289 = vlaneseq
      %v2290 = vshrl.u32 %v2289, 7
      %v2291 = vsub.s32 %v2288, %v2290
      %v2292 = vrot.slane %v2278, %v2291
      %v2293 = vcombine.low %v2269, %v2285
      %v2294 = vcombine.high %v2269, %v2285
      %v2296 = vunpack.c.l.s4 1934713408
      %v2297 = vunpack.c.0.s8 %v2296
      %v2298 = vlaneseq
      %v2299 = vshrl.u32 %v2298, 7
      %v2300 = vsub.s32 %v2297, %v2299
      %v2301 = vrot.slane %v2293, %v2300
      %v2303 = vunpack.c.l.s4 1934713408
      %v2304 = vunpack.c.0.s8 %v2303
      %v2305 = vlaneseq
      %v2306 = vshrl.u32 %v2305, 7
      %v2307 = vsub.s32 %v2304, %v2306
      %v2308 = vrot.slane %v2294, %v2307
      %v2309 = vcombine.low %v2276, %v2292
      %v2310 = vcombine.high %v2276, %v2292
      %v2312 = vunpack.c.l.s4 1934713408
      %v2313 = vunpack.c.0.s8 %v2312
      %v2314 = vlaneseq
      %v2315 = vshrl.u32 %v2314, 7
      %v2316 = vsub.s32 %v2313, %v2315
      %v2317 = vrot.slane %v2309, %v2316
      %v2319 = vunpack.c.l.s4 1934713408
      %v2320 = vunpack.c.0.s8 %v2319
      %v2321 = vlaneseq
      %v2322 = vshrl.u32 %v2321, 7
      %v2323 = vsub.s32 %v2320, %v2322
      %v2324 = vrot.slane %v2310, %v2323
      %v2325 = vcombine.high %v2301, 0.0
      %v2326 = vcombine.high %v2308, 0.0
      %v2327 = vcombine.high %v2317, 0.0
      %v2328 = vcombine.high %v2324, 0.0
      %v2329 = vcombine.low %v2016, %v2080
      %v2330 = vcombine.high %v2016, %v2080
      %v2332 = vunpack.c.l.s4 1983009808
      %v2333 = vunpack.c.0.s8 %v2332
      %v2334 = vlaneseq
      %v2335 = vshrl.u32 %v2334, 7
      %v2336 = vsub.s32 %v2333, %v2335
      %v2337 = vrot.slane %v2329, %v2336
      %v2339 = vunpack.c.l.s4 1983009808
      %v2340 = vunpack.c.0.s8 %v2339
      %v2341 = vlaneseq
      %v2342 = vshrl.u32 %v2341, 7
      %v2343 = vsub.s32 %v2340, %v2342
      %v2344 = vrot.slane %v2330, %v2343
      %v2345 = vcombine.low %v2048, %v2112
      %v2346 = vcombine.high %v2048, %v2112
      %v2348 = vunpack.c.l.s4 1983009808
      %v2349 = vunpack.c.0.s8 %v2348
      %v2350 = vlaneseq
      %v2351 = vshrl.u32 %v2350, 7
      %v2352 = vsub.s32 %v2349, %v2351
      %v2353 = vrot.slane %v2345, %v2352
      %v2355 = vunpack.c.l.s4 1983009808
      %v2356 = vunpack.c.0.s8 %v2355
      %v2357 = vlaneseq
      %v2358 = vshrl.u32 %v2357, 7
      %v2359 = vsub.s32 %v2356, %v2358
      %v2360 = vrot.slane %v2346, %v2359
      %v2361 = vcombine.low %v2337, %v2353
      %v2362 = vcombine.high %v2337, %v2353
      %v2364 = vunpack.c.l.s4 1934713408
      %v2365 = vunpack.c.0.s8 %v2364
      %v2366 = vlaneseq
      %v2367 = vshrl.u32 %v2366, 7
      %v2368 = vsub.s32 %v2365, %v2367
      %v2369 = vrot.slane %v2361, %v2368
      %v2371 = vunpack.c.l.s4 1934713408
      %v2372 = vunpack.c.0.s8 %v2371
      %v2373 = vlaneseq
      %v2374 = vshrl.u32 %v2373, 7
      %v2375 = vsub.s32 %v2372, %v2374
      %v2376 = vrot.slane %v2362, %v2375
      %v2377 = vcombine.low %v2344, %v2360
      %v2378 = vcombine.high %v2344, %v2360
      %v2380 = vunpack.c.l.s4 1934713408
      %v2381 = vunpack.c.0.s8 %v2380
      %v2382 = vlaneseq
      %v2383 = vshrl.u32 %v2382, 7
      %v2384 = vsub.s32 %v2381, %v2383
      %v2385 = vrot.slane %v2377, %v2384
      %v2387 = vunpack.c.l.s4 1934713408
      %v2388 = vunpack.c.0.s8 %v2387
      %v2389 = vlaneseq
      %v2390 = vshrl.u32 %v2389, 7
      %v2391 = vsub.s32 %v2388, %v2390
      %v2392 = vrot.slane %v2378, %v2391
      %v2393 = vcombine.high %v2369, 0.0
      %v2394 = vcombine.high %v2376, 0.0
      %v2395 = vcombine.high %v2385, 0.0
      %v2396 = vcombine.high %v2392, 0.0
      %v2397 = vcombine.low %v2017, %v2081
      %v2398 = vcombine.high %v2017, %v2081
      %v2400 = vunpack.c.l.s4 1983009808
      %v2401 = vunpack.c.0.s8 %v2400
      %v2402 = vlaneseq
      %v2403 = vshrl.u32 %v2402, 7
      %v2404 = vsub.s32 %v2401, %v2403
      %v2405 = vrot.slane %v2397, %v2404
      %v2407 = vunpack.c.l.s4 1983009808
      %v2408 = vunpack.c.0.s8 %v2407
      %v2409 = vlaneseq
      %v2410 = vshrl.u32 %v2409, 7
      %v2411 = vsub.s32 %v2408, %v2410
      %v2412 = vrot.slane %v2398, %v2411
      %v2413 = vcombine.low %v2049, %v2113
      %v2414 = vcombine.high %v2049, %v2113
      %v2416 = vunpack.c.l.s4 1983009808
      %v2417 = vunpack.c.0.s8 %v2416
      %v2418 = vlaneseq
      %v2419 = vshrl.u32 %v2418, 7
      %v2420 = vsub.s32 %v2417, %v2419
      %v2421 = vrot.slane %v2413, %v2420
      %v2423 = vunpack.c.l.s4 1983009808
      %v2424 = vunpack.c.0.s8 %v2423
      %v2425 = vlaneseq
      %v2426 = vshrl.u32 %v2425, 7
      %v2427 = vsub.s32 %v2424, %v2426
      %v2428 = vrot.slane %v2414, %v2427
      %v2429 = vcombine.low %v2405, %v2421
      %v2430 = vcombine.high %v2405, %v2421
      %v2432 = vunpack.c.l.s4 1934713408
      %v2433 = vunpack.c.0.s8 %v2432
      %v2434 = vlaneseq
      %v2435 = vshrl.u32 %v2434, 7
      %v2436 = vsub.s32 %v2433, %v2435
      %v2437 = vrot.slane %v2429, %v2436
      %v2439 = vunpack.c.l.s4 1934713408
      %v2440 = vunpack.c.0.s8 %v2439
      %v2441 = vlaneseq
      %v2442 = vshrl.u32 %v2441, 7
      %v2443 = vsub.s32 %v2440, %v2442
      %v2444 = vrot.slane %v2430, %v2443
      %v2445 = vcombine.low %v2412, %v2428
      %v2446 = vcombine.high %v2412, %v2428
      %v2448 = vunpack.c.l.s4 1934713408
      %v2449 = vunpack.c.0.s8 %v2448
      %v2450 = vlaneseq
      %v2451 = vshrl.u32 %v2450, 7
      %v2452 = vsub.s32 %v2449, %v2451
      %v2453 = vrot.slane %v2445, %v2452
      %v2455 = vunpack.c.l.s4 1934713408
      %v2456 = vunpack.c.0.s8 %v2455
      %v2457 = vlaneseq
      %v2458 = vshrl.u32 %v2457, 7
      %v2459 = vsub.s32 %v2456, %v2458
      %v2460 = vrot.slane %v2446, %v2459
      %v2461 = vcombine.high %v2437, 0.0
      %v2462 = vcombine.high %v2444, 0.0
      %v2463 = vcombine.high %v2453, 0.0
      %v2464 = vcombine.high %v2460, 0.0
      %v2465 = vcombine.low %v2018, %v2082
      %v2466 = vcombine.high %v2018, %v2082
      %v2468 = vunpack.c.l.s4 1983009808
      %v2469 = vunpack.c.0.s8 %v2468
      %v2470 = vlaneseq
      %v2471 = vshrl.u32 %v2470, 7
      %v2472 = vsub.s32 %v2469, %v2471
      %v2473 = vrot.slane %v2465, %v2472
      %v2475 = vunpack.c.l.s4 1983009808
      %v2476 = vunpack.c.0.s8 %v2475
      %v2477 = vlaneseq
      %v2478 = vshrl.u32 %v2477, 7
      %v2479 = vsub.s32 %v2476, %v2478
      %v2480 = vrot.slane %v2466, %v2479
      %v2481 = vcombine.low %v2050, %v2114
      %v2482 = vcombine.high %v2050, %v2114
      %v2484 = vunpack.c.l.s4 1983009808
      %v2485 = vunpack.c.0.s8 %v2484
      %v2486 = vlaneseq
      %v2487 = vshrl.u32 %v2486, 7
      %v2488 = vsub.s32 %v2485, %v2487
      %v2489 = vrot.slane %v2481, %v2488
      %v2491 = vunpack.c.l.s4 1983009808
      %v2492 = vunpack.c.0.s8 %v2491
      %v2493 = vlaneseq
      %v2494 = vshrl.u32 %v2493, 7
      %v2495 = vsub.s32 %v2492, %v2494
      %v2496 = vrot.slane %v2482, %v2495
      %v2497 = vcombine.low %v2473, %v2489
      %v2498 = vcombine.high %v2473, %v2489
      %v2500 = vunpack.c.l.s4 1934713408
      %v2501 = vunpack.c.0.s8 %v2500
      %v2502 = vlaneseq
      %v2503 = vshrl.u32 %v2502, 7
      %v2504 = vsub.s32 %v2501, %v2503
      %v2505 = vrot.slane %v2497, %v2504
      %v2507 = vunpack.c.l.s4 1934713408
      %v2508 = vunpack.c.0.s8 %v2507
      %v2509 = vlaneseq
      %v2510 = vshrl.u32 %v2509, 7
      %v2511 = vsub.s32 %v2508, %v2510
      %v2512 = vrot.slane %v2498, %v2511
      %v2513 = vcombine.low %v2480, %v2496
      %v2514 = vcombine.high %v2480, %v2496
      %v2516 = vunpack.c.l.s4 1934713408
      %v2517 = vunpack.c.0.s8 %v2516
      %v2518 = vlaneseq
      %v2519 = vshrl.u32 %v2518, 7
      %v2520 = vsub.s32 %v2517, %v2519
      %v2521 = vrot.slane %v2513, %v2520
      %v2523 = vunpack.c.l.s4 1934713408
      %v2524 = vunpack.c.0.s8 %v2523
      %v2525 = vlaneseq
      %v2526 = vshrl.u32 %v2525, 7
      %v2527 = vsub.s32 %v2524, %v2526
      %v2528 = vrot.slane %v2514, %v2527
      %v2529 = vcombine.high %v2505, 0.0
      %v2530 = vcombine.high %v2512, 0.0
      %v2531 = vcombine.high %v2521, 0.0
      %v2532 = vcombine.high %v2528, 0.0
      %v2533 = vcombine.low %v2019, %v2083
      %v2534 = vcombine.high %v2019, %v2083
      %v2536 = vunpack.c.l.s4 1983009808
      %v2537 = vunpack.c.0.s8 %v2536
      %v2538 = vlaneseq
      %v2539 = vshrl.u32 %v2538, 7
      %v2540 = vsub.s32 %v2537, %v2539
      %v2541 = vrot.slane %v2533, %v2540
      %v2543 = vunpack.c.l.s4 1983009808
      %v2544 = vunpack.c.0.s8 %v2543
      %v2545 = vlaneseq
      %v2546 = vshrl.u32 %v2545, 7
      %v2547 = vsub.s32 %v2544, %v2546
      %v2548 = vrot.slane %v2534, %v2547
      %v2549 = vcombine.low %v2051, %v2115
      %v2550 = vcombine.high %v2051, %v2115
      %v2552 = vunpack.c.l.s4 1983009808
      %v2553 = vunpack.c.0.s8 %v2552
      %v2554 = vlaneseq
      %v2555 = vshrl.u32 %v2554, 7
      %v2556 = vsub.s32 %v2553, %v2555
      %v2557 = vrot.slane %v2549, %v2556
      %v2559 = vunpack.c.l.s4 1983009808
      %v2560 = vunpack.c.0.s8 %v2559
      %v2561 = vlaneseq
      %v2562 = vshrl.u32 %v2561, 7
      %v2563 = vsub.s32 %v2560, %v2562
      %v2564 = vrot.slane %v2550, %v2563
      %v2565 = vcombine.low %v2541, %v2557
      %v2566 = vcombine.high %v2541, %v2557
      %v2568 = vunpack.c.l.s4 1934713408
      %v2569 = vunpack.c.0.s8 %v2568
      %v2570 = vlaneseq
      %v2571 = vshrl.u32 %v2570, 7
      %v2572 = vsub.s32 %v2569, %v2571
      %v2573 = vrot.slane %v2565, %v2572
      %v2575 = vunpack.c.l.s4 1934713408
      %v2576 = vunpack.c.0.s8 %v2575
      %v2577 = vlaneseq
      %v2578 = vshrl.u32 %v2577, 7
      %v2579 = vsub.s32 %v2576, %v2578
      %v2580 = vrot.slane %v2566, %v2579
      %v2581 = vcombine.low %v2548, %v2564
      %v2582 = vcombine.high %v2548, %v2564
      %v2584 = vunpack.c.l.s4 1934713408
      %v2585 = vunpack.c.0.s8 %v2584
      %v2586 = vlaneseq
      %v2587 = vshrl.u32 %v2586, 7
      %v2588 = vsub.s32 %v2585, %v2587
      %v2589 = vrot.slane %v2581, %v2588
      %v2591 = vunpack.c.l.s4 1934713408
      %v2592 = vunpack.c.0.s8 %v2591
      %v2593 = vlaneseq
      %v2594 = vshrl.u32 %v2593, 7
      %v2595 = vsub.s32 %v2592, %v2594
      %v2596 = vrot.slane %v2582, %v2595
      %v2597 = vcombine.high %v2573, 0.0
      %v2598 = vcombine.high %v2580, 0.0
      %v2599 = vcombine.high %v2589, 0.0
      %v2600 = vcombine.high %v2596, 0.0
      %v2601 = vcombine.low %v2020, %v2084
      %v2602 = vcombine.high %v2020, %v2084
      %v2604 = vunpack.c.l.s4 1983009808
      %v2605 = vunpack.c.0.s8 %v2604
      %v2606 = vlaneseq
      %v2607 = vshrl.u32 %v2606, 7
      %v2608 = vsub.s32 %v2605, %v2607
      %v2609 = vrot.slane %v2601, %v2608
      %v2611 = vunpack.c.l.s4 1983009808
      %v2612 = vunpack.c.0.s8 %v2611
      %v2613 = vlaneseq
      %v2614 = vshrl.u32 %v2613, 7
      %v2615 = vsub.s32 %v2612, %v2614
      %v2616 = vrot.slane %v2602, %v2615
      %v2617 = vcombine.low %v2052, %v2116
      %v2618 = vcombine.high %v2052, %v2116
      %v2620 = vunpack.c.l.s4 1983009808
      %v2621 = vunpack.c.0.s8 %v2620
      %v2622 = vlaneseq
      %v2623 = vshrl.u32 %v2622, 7
      %v2624 = vsub.s32 %v2621, %v2623
      %v2625 = vrot.slane %v2617, %v2624
      %v2627 = vunpack.c.l.s4 1983009808
      %v2628 = vunpack.c.0.s8 %v2627
      %v2629 = vlaneseq
      %v2630 = vshrl.u32 %v2629, 7
      %v2631 = vsub.s32 %v2628, %v2630
      %v2632 = vrot.slane %v2618, %v2631
      %v2633 = vcombine.low %v2609, %v2625
      %v2634 = vcombine.high %v2609, %v2625
      %v2636 = vunpack.c.l.s4 1934713408
      %v2637 = vunpack.c.0.s8 %v2636
      %v2638 = vlaneseq
      %v2639 = vshrl.u32 %v2638, 7
      %v2640 = vsub.s32 %v2637, %v2639
      %v2641 = vrot.slane %v2633, %v2640
      %v2643 = vunpack.c.l.s4 1934713408
      %v2644 = vunpack.c.0.s8 %v2643
      %v2645 = vlaneseq
      %v2646 = vshrl.u32 %v2645, 7
      %v2647 = vsub.s32 %v2644, %v2646
      %v2648 = vrot.slane %v2634, %v2647
      %v2649 = vcombine.low %v2616, %v2632
      %v2650 = vcombine.high %v2616, %v2632
      %v2652 = vunpack.c.l.s4 1934713408
      %v2653 = vunpack.c.0.s8 %v2652
      %v2654 = vlaneseq
      %v2655 = vshrl.u32 %v2654, 7
      %v2656 = vsub.s32 %v2653, %v2655
      %v2657 = vrot.slane %v2649, %v2656
      %v2659 = vunpack.c.l.s4 1934713408
      %v2660 = vunpack.c.0.s8 %v2659
      %v2661 = vlaneseq
      %v2662 = vshrl.u32 %v2661, 7
      %v2663 = vsub.s32 %v2660, %v2662
      %v2664 = vrot.slane %v2650, %v2663
      %v2665 = vcombine.high %v2641, 0.0
      %v2666 = vcombine.high %v2648, 0.0
      %v2667 = vcombine.high %v2657, 0.0
      %v2668 = vcombine.high %v2664, 0.0
      %v2669 = vcombine.low %v2165, %v2172
      %v2671 = vunpack.c.l.s4 1983009808
      %v2672 = vunpack.c.0.s8 %v2671
      %v2673 = vlaneseq
      %v2674 = vshrl.u32 %v2673, 7
      %v2675 = vsub.s32 %v2672, %v2674
      %v2676 = vrot.slane %v2669, %v2675
      %v2677 = vcombine.low %v2189, %v2190
      %v2679 = vunpack.c.l.s4 1983009808
      %v2680 = vunpack.c.0.s8 %v2679
      %v2681 = vlaneseq
      %v2682 = vshrl.u32 %v2681, 7
      %v2683 = vsub.s32 %v2680, %v2682
      %v2684 = vrot.slane %v2677, %v2683
      %v2685 = vcombine.low %v2181, %v2188
      %v2687 = vunpack.c.l.s4 1983009808
      %v2688 = vunpack.c.0.s8 %v2687
      %v2689 = vlaneseq
      %v2690 = vshrl.u32 %v2689, 7
      %v2691 = vsub.s32 %v2688, %v2690
      %v2692 = vrot.slane %v2685, %v2691
      %v2693 = vcombine.low %v2191, %v2192
      %v2695 = vunpack.c.l.s4 1983009808
      %v2696 = vunpack.c.0.s8 %v2695
      %v2697 = vlaneseq
      %v2698 = vshrl.u32 %v2697, 7
      %v2699 = vsub.s32 %v2696, %v2698
      %v2700 = vrot.slane %v2693, %v2699
      %v2701 = vcombine.low %v2676, %v2684
      %v2702 = vcombine.high %v2676, %v2684
      %v2704 = vunpack.c.l.s4 1934713408
      %v2705 = vunpack.c.0.s8 %v2704
      %v2706 = vlaneseq
      %v2707 = vshrl.u32 %v2706, 7
      %v2708 = vsub.s32 %v2705, %v2707
      %v2709 = vrot.slane %v2701, %v2708
      %v2711 = vunpack.c.l.s4 1934713408
      %v2712 = vunpack.c.0.s8 %v2711
      %v2713 = vlaneseq
      %v2714 = vshrl.u32 %v2713, 7
      %v2715 = vsub.s32 %v2712, %v2714
      %v2716 = vrot.slane %v2702, %v2715
      %v2717 = vcombine.low %v2692, %v2700
      %v2718 = vcombine.high %v2692, %v2700
      %v2720 = vunpack.c.l.s4 1934713408
      %v2721 = vunpack.c.0.s8 %v2720
      %v2722 = vlaneseq
      %v2723 = vshrl.u32 %v2722, 7
      %v2724 = vsub.s32 %v2721, %v2723
      %v2725 = vrot.slane %v2717, %v2724
      %v2727 = vunpack.c.l.s4 1934713408
      %v2728 = vunpack.c.0.s8 %v2727
      %v2729 = vlaneseq
      %v2730 = vshrl.u32 %v2729, 7
      %v2731 = vsub.s32 %v2728, %v2730
      %v2732 = vrot.slane %v2718, %v2731
      %v2733 = vcombine.low %v2709, %v2725
      %v2734 = vcombine.high %v2709, %v2725
      %v2735 = vcombine.low %v2716, %v2732
      %v2736 = vcombine.high %v2716, %v2732
      %v2737 = vcombine.low %v2233, %v2240
      %v2739 = vunpack.c.l.s4 1983009808
      %v2740 = vunpack.c.0.s8 %v2739
      %v2741 = vlaneseq
      %v2742 = vshrl.u32 %v2741, 7
      %v2743 = vsub.s32 %v2740, %v2742
      %v2744 = vrot.slane %v2737, %v2743
      %v2745 = vcombine.low %v2257, %v2258
      %v2747 = vunpack.c.l.s4 1983009808
      %v2748 = vunpack.c.0.s8 %v2747
      %v2749 = vlaneseq
      %v2750 = vshrl.u32 %v2749, 7
      %v2751 = vsub.s32 %v2748, %v2750
      %v2752 = vrot.slane %v2745, %v2751
      %v2753 = vcombine.low %v2249, %v2256
      %v2755 = vunpack.c.l.s4 1983009808
      %v2756 = vunpack.c.0.s8 %v2755
      %v2757 = vlaneseq
      %v2758 = vshrl.u32 %v2757, 7
      %v2759 = vsub.s32 %v2756, %v2758
      %v2760 = vrot.slane %v2753, %v2759
      %v2761 = vcombine.low %v2259, %v2260
      %v2763 = vunpack.c.l.s4 1983009808
      %v2764 = vunpack.c.0.s8 %v2763
      %v2765 = vlaneseq
      %v2766 = vshrl.u32 %v2765, 7
      %v2767 = vsub.s32 %v2764, %v2766
      %v2768 = vrot.slane %v2761, %v2767
      %v2769 = vcombine.low %v2744, %v2752
      %v2770 = vcombine.high %v2744, %v2752
      %v2772 = vunpack.c.l.s4 1934713408
      %v2773 = vunpack.c.0.s8 %v2772
      %v2774 = vlaneseq
      %v2775 = vshrl.u32 %v2774, 7
      %v2776 = vsub.s32 %v2773, %v2775
      %v2777 = vrot.slane %v2769, %v2776
      %v2779 = vunpack.c.l.s4 1934713408
      %v2780 = vunpack.c.0.s8 %v2779
      %v2781 = vlaneseq
      %v2782 = vshrl.u32 %v2781, 7
      %v2783 = vsub.s32 %v2780, %v2782
      %v2784 = vrot.slane %v2770, %v2783
      %v2785 = vcombine.low %v2760, %v2768
      %v2786 = vcombine.high %v2760, %v2768
      %v2788 = vunpack.c.l.s4 1934713408
      %v2789 = vunpack.c.0.s8 %v2788
      %v2790 = vlaneseq
      %v2791 = vshrl.u32 %v2790, 7
      %v2792 = vsub.s32 %v2789, %v2791
      %v2793 = vrot.slane %v2785, %v2792
      %v2795 = vunpack.c.l.s4 1934713408
      %v2796 = vunpack.c.0.s8 %v2795
      %v2797 = vlaneseq
      %v2798 = vshrl.u32 %v2797, 7
      %v2799 = vsub.s32 %v2796, %v2798
      %v2800 = vrot.slane %v2786, %v2799
      %v2801 = vcombine.low %v2777, %v2793
      %v2802 = vcombine.high %v2777, %v2793
      %v2803 = vcombine.low %v2784, %v2800
      %v2804 = vcombine.high %v2784, %v2800
      %v2805 = vcombine.low %v2301, %v2308
      %v2807 = vunpack.c.l.s4 1983009808
      %v2808 = vunpack.c.0.s8 %v2807
      %v2809 = vlaneseq
      %v2810 = vshrl.u32 %v2809, 7
      %v2811 = vsub.s32 %v2808, %v2810
      %v2812 = vrot.slane %v2805, %v2811
      %v2813 = vcombine.low %v2325, %v2326
      %v2815 = vunpack.c.l.s4 1983009808
      %v2816 = vunpack.c.0.s8 %v2815
      %v2817 = vlaneseq
      %v2818 = vshrl.u32 %v2817, 7
      %v2819 = vsub.s32 %v2816, %v2818
      %v2820 = vrot.slane %v2813, %v2819
      %v2821 = vcombine.low %v2317, %v2324
      %v2823 = vunpack.c.l.s4 1983009808
      %v2824 = vunpack.c.0.s8 %v2823
      %v2825 = vlaneseq
      %v2826 = vshrl.u32 %v2825, 7
      %v2827 = vsub.s32 %v2824, %v2826
      %v2828 = vrot.slane %v2821, %v2827
      %v2829 = vcombine.low %v2327, %v2328
      %v2831 = vunpack.c.l.s4 1983009808
      %v2832 = vunpack.c.0.s8 %v2831
      %v2833 = vlaneseq
      %v2834 = vshrl.u32 %v2833, 7
      %v2835 = vsub.s32 %v2832, %v2834
      %v2836 = vrot.slane %v2829, %v2835
      %v2837 = vcombine.low %v2812, %v2820
      %v2838 = vcombine.high %v2812, %v2820
      %v2840 = vunpack.c.l.s4 1934713408
      %v2841 = vunpack.c.0.s8 %v2840
      %v2842 = vlaneseq
      %v2843 = vshrl.u32 %v2842, 7
      %v2844 = vsub.s32 %v2841, %v2843
      %v2845 = vrot.slane %v2837, %v2844
      %v2847 = vunpack.c.l.s4 1934713408
      %v2848 = vunpack.c.0.s8 %v2847
      %v2849 = vlaneseq
      %v2850 = vshrl.u32 %v2849, 7
      %v2851 = vsub.s32 %v2848, %v2850
      %v2852 = vrot.slane %v2838, %v2851
      %v2853 = vcombine.low %v2828, %v2836
      %v2854 = vcombine.high %v2828, %v2836
      %v2856 = vunpack.c.l.s4 1934713408
      %v2857 = vunpack.c.0.s8 %v2856
      %v2858 = vlaneseq
      %v2859 = vshrl.u32 %v2858, 7
      %v2860 = vsub.s32 %v2857, %v2859
      %v2861 = vrot.slane %v2853, %v2860
      %v2863 = vunpack.c.l.s4 1934713408
      %v2864 = vunpack.c.0.s8 %v2863
      %v2865 = vlaneseq
      %v2866 = vshrl.u32 %v2865, 7
      %v2867 = vsub.s32 %v2864, %v2866
      %v2868 = vrot.slane %v2854, %v2867
      %v2869 = vcombine.low %v2845, %v2861
      %v2870 = vcombine.high %v2845, %v2861
      %v2871 = vcombine.low %v2852, %v2868
      %v2872 = vcombine.high %v2852, %v2868
      %v2873 = vcombine.low %v2369, %v2376
      %v2875 = vunpack.c.l.s4 1983009808
      %v2876 = vunpack.c.0.s8 %v2875
      %v2877 = vlaneseq
      %v2878 = vshrl.u32 %v2877, 7
      %v2879 = vsub.s32 %v2876, %v2878
      %v2880 = vrot.slane %v2873, %v2879
      %v2881 = vcombine.low %v2393, %v2394
      %v2883 = vunpack.c.l.s4 1983009808
      %v2884 = vunpack.c.0.s8 %v2883
      %v2885 = vlaneseq
      %v2886 = vshrl.u32 %v2885, 7
      %v2887 = vsub.s32 %v2884, %v2886
      %v2888 = vrot.slane %v2881, %v2887
      %v2889 = vcombine.low %v2385, %v2392
      %v2891 = vunpack.c.l.s4 1983009808
      %v2892 = vunpack.c.0.s8 %v2891
      %v2893 = vlaneseq
      %v2894 = vshrl.u32 %v2893, 7
      %v2895 = vsub.s32 %v2892, %v2894
      %v2896 = vrot.slane %v2889, %v2895
      %v2897 = vcombine.low %v2395, %v2396
      %v2899 = vunpack.c.l.s4 1983009808
      %v2900 = vunpack.c.0.s8 %v2899
      %v2901 = vlaneseq
      %v2902 = vshrl.u32 %v2901, 7
      %v2903 = vsub.s32 %v2900, %v2902
      %v2904 = vrot.slane %v2897, %v2903
      %v2905 = vcombine.low %v2880, %v2888
      %v2906 = vcombine.high %v2880, %v2888
      %v2908 = vunpack.c.l.s4 1934713408
      %v2909 = vunpack.c.0.s8 %v2908
      %v2910 = vlaneseq
      %v2911 = vshrl.u32 %v2910, 7
      %v2912 = vsub.s32 %v2909, %v2911
      %v2913 = vrot.slane %v2905, %v2912
      %v2915 = vunpack.c.l.s4 1934713408
      %v2916 = vunpack.c.0.s8 %v2915
      %v2917 = vlaneseq
      %v2918 = vshrl.u32 %v2917, 7
      %v2919 = vsub.s32 %v2916, %v2918
      %v2920 = vrot.slane %v2906, %v2919
      %v2921 = vcombine.low %v2896, %v2904
      %v2922 = vcombine.high %v2896, %v2904
      %v2924 = vunpack.c.l.s4 1934713408
      %v2925 = vunpack.c.0.s8 %v2924
      %v2926 = vlaneseq
      %v2927 = vshrl.u32 %v2926, 7
      %v2928 = vsub.s32 %v2925, %v2927
      %v2929 = vrot.slane %v2921, %v2928
      %v2931 = vunpack.c.l.s4 1934713408
      %v2932 = vunpack.c.0.s8 %v2931
      %v2933 = vlaneseq
      %v2934 = vshrl.u32 %v2933, 7
      %v2935 = vsub.s32 %v2932, %v2934
      %v2936 = vrot.slane %v2922, %v2935
      %v2937 = vcombine.low %v2913, %v2929
      %v2938 = vcombine.high %v2913, %v2929
      %v2939 = vcombine.low %v2920, %v2936
      %v2940 = vcombine.high %v2920, %v2936
      %v2941 = vcombine.low %v2437, %v2444
      %v2943 = vunpack.c.l.s4 1983009808
      %v2944 = vunpack.c.0.s8 %v2943
      %v2945 = vlaneseq
      %v2946 = vshrl.u32 %v2945, 7
      %v2947 = vsub.s32 %v2944, %v2946
      %v2948 = vrot.slane %v2941, %v2947
      %v2949 = vcombine.low %v2461, %v2462
      %v2951 = vunpack.c.l.s4 1983009808
      %v2952 = vunpack.c.0.s8 %v2951
      %v2953 = vlaneseq
      %v2954 = vshrl.u32 %v2953, 7
      %v2955 = vsub.s32 %v2952, %v2954
      %v2956 = vrot.slane %v2949, %v2955
      %v2957 = vcombine.low %v2453, %v2460
      %v2959 = vunpack.c.l.s4 1983009808
      %v2960 = vunpack.c.0.s8 %v2959
      %v2961 = vlaneseq
      %v2962 = vshrl.u32 %v2961, 7
      %v2963 = vsub.s32 %v2960, %v2962
      %v2964 = vrot.slane %v2957, %v2963
      %v2965 = vcombine.low %v2463, %v2464
      %v2967 = vunpack.c.l.s4 1983009808
      %v2968 = vunpack.c.0.s8 %v2967
      %v2969 = vlaneseq
      %v2970 = vshrl.u32 %v2969, 7
      %v2971 = vsub.s32 %v2968, %v2970
      %v2972 = vrot.slane %v2965, %v2971
      %v2973 = vcombine.low %v2948, %v2956
      %v2974 = vcombine.high %v2948, %v2956
      %v2976 = vunpack.c.l.s4 1934713408
      %v2977 = vunpack.c.0.s8 %v2976
      %v2978 = vlaneseq
      %v2979 = vshrl.u32 %v2978, 7
      %v2980 = vsub.s32 %v2977, %v2979
      %v2981 = vrot.slane %v2973, %v2980
      %v2983 = vunpack.c.l.s4 1934713408
      %v2984 = vunpack.c.0.s8 %v2983
      %v2985 = vlaneseq
      %v2986 = vshrl.u32 %v2985, 7
      %v2987 = vsub.s32 %v2984, %v2986
      %v2988 = vrot.slane %v2974, %v2987
      %v2989 = vcombine.low %v2964, %v2972
      %v2990 = vcombine.high %v2964, %v2972
      %v2992 = vunpack.c.l.s4 1934713408
      %v2993 = vunpack.c.0.s8 %v2992
      %v2994 = vlaneseq
      %v2995 = vshrl.u32 %v2994, 7
      %v2996 = vsub.s32 %v2993, %v2995
      %v2997 = vrot.slane %v2989, %v2996
      %v2999 = vunpack.c.l.s4 1934713408
      %v3000 = vunpack.c.0.s8 %v2999
      %v3001 = vlaneseq
      %v3002 = vshrl.u32 %v3001, 7
      %v3003 = vsub.s32 %v3000, %v3002
      %v3004 = vrot.slane %v2990, %v3003
      %v3005 = vcombine.low %v2981, %v2997
      %v3006 = vcombine.high %v2981, %v2997
      %v3007 = vcombine.low %v2988, %v3004
      %v3008 = vcombine.high %v2988, %v3004
      %v3009 = vcombine.low %v2505, %v2512
      %v3011 = vunpack.c.l.s4 1983009808
      %v3012 = vunpack.c.0.s8 %v3011
      %v3013 = vlaneseq
      %v3014 = vshrl.u32 %v3013, 7
      %v3015 = vsub.s32 %v3012, %v3014
      %v3016 = vrot.slane %v3009, %v3015
      %v3017 = vcombine.low %v2529, %v2530
      %v3019 = vunpack.c.l.s4 1983009808
      %v3020 = vunpack.c.0.s8 %v3019
      %v3021 = vlaneseq
      %v3022 = vshrl.u32 %v3021, 7
      %v3023 = vsub.s32 %v3020, %v3022
      %v3024 = vrot.slane %v3017, %v3023
      %v3025 = vcombine.low %v2521, %v2528
      %v3027 = vunpack.c.l.s4 1983009808
      %v3028 = vunpack.c.0.s8 %v3027
      %v3029 = vlaneseq
      %v3030 = vshrl.u32 %v3029, 7
      %v3031 = vsub.s32 %v3028, %v3030
      %v3032 = vrot.slane %v3025, %v3031
      %v3033 = vcombine.low %v2531, %v2532
      %v3035 = vunpack.c.l.s4 1983009808
      %v3036 = vunpack.c.0.s8 %v3035
      %v3037 = vlaneseq
      %v3038 = vshrl.u32 %v3037, 7
      %v3039 = vsub.s32 %v3036, %v3038
      %v3040 = vrot.slane %v3033, %v3039
      %v3041 = vcombine.low %v3016, %v3024
      %v3042 = vcombine.high %v3016, %v3024
      %v3044 = vunpack.c.l.s4 1934713408
      %v3045 = vunpack.c.0.s8 %v3044
      %v3046 = vlaneseq
      %v3047 = vshrl.u32 %v3046, 7
      %v3048 = vsub.s32 %v3045, %v3047
      %v3049 = vrot.slane %v3041, %v3048
      %v3051 = vunpack.c.l.s4 1934713408
      %v3052 = vunpack.c.0.s8 %v3051
      %v3053 = vlaneseq
      %v3054 = vshrl.u32 %v3053, 7
      %v3055 = vsub.s32 %v3052, %v3054
      %v3056 = vrot.slane %v3042, %v3055
      %v3057 = vcombine.low %v3032, %v3040
      %v3058 = vcombine.high %v3032, %v3040
      %v3060 = vunpack.c.l.s4 1934713408
      %v3061 = vunpack.c.0.s8 %v3060
      %v3062 = vlaneseq
      %v3063 = vshrl.u32 %v3062, 7
      %v3064 = vsub.s32 %v3061, %v3063
      %v3065 = vrot.slane %v3057, %v3064
      %v3067 = vunpack.c.l.s4 1934713408
      %v3068 = vunpack.c.0.s8 %v3067
      %v3069 = vlaneseq
      %v3070 = vshrl.u32 %v3069, 7
      %v3071 = vsub.s32 %v3068, %v3070
      %v3072 = vrot.slane %v3058, %v3071
      %v3073 = vcombine.low %v3049, %v3065
      %v3074 = vcombine.high %v3049, %v3065
      %v3075 = vcombine.low %v3056, %v3072
      %v3076 = vcombine.high %v3056, %v3072
      %v3077 = vcombine.low %v2573, %v2580
      %v3079 = vunpack.c.l.s4 1983009808
      %v3080 = vunpack.c.0.s8 %v3079
      %v3081 = vlaneseq
      %v3082 = vshrl.u32 %v3081, 7
      %v3083 = vsub.s32 %v3080, %v3082
      %v3084 = vrot.slane %v3077, %v3083
      %v3085 = vcombine.low %v2597, %v2598
      %v3087 = vunpack.c.l.s4 1983009808
      %v3088 = vunpack.c.0.s8 %v3087
      %v3089 = vlaneseq
      %v3090 = vshrl.u32 %v3089, 7
      %v3091 = vsub.s32 %v3088, %v3090
      %v3092 = vrot.slane %v3085, %v3091
      %v3093 = vcombine.low %v2589, %v2596
      %v3095 = vunpack.c.l.s4 1983009808
      %v3096 = vunpack.c.0.s8 %v3095
      %v3097 = vlaneseq
      %v3098 = vshrl.u32 %v3097, 7
      %v3099 = vsub.s32 %v3096, %v3098
      %v3100 = vrot.slane %v3093, %v3099
      %v3101 = vcombine.low %v2599, %v2600
      %v3103 = vunpack.c.l.s4 1983009808
      %v3104 = vunpack.c.0.s8 %v3103
      %v3105 = vlaneseq
      %v3106 = vshrl.u32 %v3105, 7
      %v3107 = vsub.s32 %v3104, %v3106
      %v3108 = vrot.slane %v3101, %v3107
      %v3109 = vcombine.low %v3084, %v3092
      %v3110 = vcombine.high %v3084, %v3092
      %v3112 = vunpack.c.l.s4 1934713408
      %v3113 = vunpack.c.0.s8 %v3112
      %v3114 = vlaneseq
      %v3115 = vshrl.u32 %v3114, 7
      %v3116 = vsub.s32 %v3113, %v3115
      %v3117 = vrot.slane %v3109, %v3116
      %v3119 = vunpack.c.l.s4 1934713408
      %v3120 = vunpack.c.0.s8 %v3119
      %v3121 = vlaneseq
      %v3122 = vshrl.u32 %v3121, 7
      %v3123 = vsub.s32 %v3120, %v3122
      %v3124 = vrot.slane %v3110, %v3123
      %v3125 = vcombine.low %v3100, %v3108
      %v3126 = vcombine.high %v3100, %v3108
      %v3128 = vunpack.c.l.s4 1934713408
      %v3129 = vunpack.c.0.s8 %v3128
      %v3130 = vlaneseq
      %v3131 = vshrl.u32 %v3130, 7
      %v3132 = vsub.s32 %v3129, %v3131
      %v3133 = vrot.slane %v3125, %v3132
      %v3135 = vunpack.c.l.s4 1934713408
      %v3136 = vunpack.c.0.s8 %v3135
      %v3137 = vlaneseq
      %v3138 = vshrl.u32 %v3137, 7
      %v3139 = vsub.s32 %v3136, %v3138
      %v3140 = vrot.slane %v3126, %v3139
      %v3141 = vcombine.low %v3117, %v3133
      %v3142 = vcombine.high %v3117, %v3133
      %v3143 = vcombine.low %v3124, %v3140
      %v3144 = vcombine.high %v3124, %v3140
      %v3145 = vcombine.low %v2641, %v2648
      %v3147 = vunpack.c.l.s4 1983009808
      %v3148 = vunpack.c.0.s8 %v3147
      %v3149 = vlaneseq
      %v3150 = vshrl.u32 %v3149, 7
      %v3151 = vsub.s32 %v3148, %v3150
      %v3152 = vrot.slane %v3145, %v3151
      %v3153 = vcombine.low %v2665, %v2666
      %v3155 = vunpack.c.l.s4 1983009808
      %v3156 = vunpack.c.0.s8 %v3155
      %v3157 = vlaneseq
      %v3158 = vshrl.u32 %v3157, 7
      %v3159 = vsub.s32 %v3156, %v3158
      %v3160 = vrot.slane %v3153, %v3159
      %v3161 = vcombine.low %v2657, %v2664
      %v3163 = vunpack.c.l.s4 1983009808
      %v3164 = vunpack.c.0.s8 %v3163
      %v3165 = vlaneseq
      %v3166 = vshrl.u32 %v3165, 7
      %v3167 = vsub.s32 %v3164, %v3166
      %v3168 = vrot.slane %v3161, %v3167
      %v3169 = vcombine.low %v2667, %v2668
      %v3171 = vunpack.c.l.s4 1983009808
      %v3172 = vunpack.c.0.s8 %v3171
      %v3173 = vlaneseq
      %v3174 = vshrl.u32 %v3173, 7
      %v3175 = vsub.s32 %v3172, %v3174
      %v3176 = vrot.slane %v3169, %v3175
      %v3177 = vcombine.low %v3152, %v3160
      %v3178 = vcombine.high %v3152, %v3160
      %v3180 = vunpack.c.l.s4 1934713408
      %v3181 = vunpack.c.0.s8 %v3180
      %v3182 = vlaneseq
      %v3183 = vshrl.u32 %v3182, 7
      %v3184 = vsub.s32 %v3181, %v3183
      %v3185 = vrot.slane %v3177, %v3184
      %v3187 = vunpack.c.l.s4 1934713408
      %v3188 = vunpack.c.0.s8 %v3187
      %v3189 = vlaneseq
      %v3190 = vshrl.u32 %v3189, 7
      %v3191 = vsub.s32 %v3188, %v3190
      %v3192 = vrot.slane %v3178, %v3191
      %v3193 = vcombine.low %v3168, %v3176
      %v3194 = vcombine.high %v3168, %v3176
      %v3196 = vunpack.c.l.s4 1934713408
      %v3197 = vunpack.c.0.s8 %v3196
      %v3198 = vlaneseq
      %v3199 = vshrl.u32 %v3198, 7
      %v3200 = vsub.s32 %v3197, %v3199
      %v3201 = vrot.slane %v3193, %v3200
      %v3203 = vunpack.c.l.s4 1934713408
      %v3204 = vunpack.c.0.s8 %v3203
      %v3205 = vlaneseq
      %v3206 = vshrl.u32 %v3205, 7
      %v3207 = vsub.s32 %v3204, %v3206
      %v3208 = vrot.slane %v3194, %v3207
      %v3209 = vcombine.low %v3185, %v3201
      %v3210 = vcombine.high %v3185, %v3201
      %v3211 = vcombine.low %v3192, %v3208
      %v3212 = vcombine.high %v3192, %v3208
      %3221 = vrot.lane.b32.xlu0 %v2734, 2
      %v3222 = vpop.permute.xlu0 %3221
      %3223 = vrot.lane.b32.xlu0 %v2802, 2
      %v3224 = vpop.permute.xlu0 %3223
      %3225 = vrot.lane.b32.xlu0 %v2870, 2
      %v3226 = vpop.permute.xlu0 %3225
      %3227 = vrot.lane.b32.xlu0 %v2938, 2
      %v3228 = vpop.permute.xlu0 %3227
      %3229 = vrot.lane.b32.xlu0 %v3006, 2
      %v3230 = vpop.permute.xlu0 %3229
      %3231 = vrot.lane.b32.xlu0 %v3074, 2
      %v3232 = vpop.permute.xlu0 %3231
      %3233 = vrot.lane.b32.xlu0 %v3142, 2
      %v3234 = vpop.permute.xlu0 %3233
      %3235 = vrot.lane.b32.xlu0 %v3210, 2
      %v3236 = vpop.permute.xlu0 %3235
      %3253 = vrot.lane.b32.xlu0 %v2735, 4
      %v3254 = vpop.permute.xlu0 %3253
      %3255 = vrot.lane.b32.xlu0 %v2803, 4
      %v3256 = vpop.permute.xlu0 %3255
      %3257 = vrot.lane.b32.xlu0 %v2871, 4
      %v3258 = vpop.permute.xlu0 %3257
      %3259 = vrot.lane.b32.xlu0 %v2939, 4
      %v3260 = vpop.permute.xlu0 %3259
      %3261 = vrot.lane.b32.xlu0 %v3007, 4
      %v3262 = vpop.permute.xlu0 %3261
      %3263 = vrot.lane.b32.xlu0 %v3075, 4
      %v3264 = vpop.permute.xlu0 %3263
      %3265 = vrot.lane.b32.xlu0 %v3143, 4
      %v3266 = vpop.permute.xlu0 %3265
      %3267 = vrot.lane.b32.xlu0 %v3211, 4
      %v3268 = vpop.permute.xlu0 %3267
      %3285 = vrot.lane.b32.xlu0 %v2736, 6
      %v3286 = vpop.permute.xlu0 %3285
      %3287 = vrot.lane.b32.xlu0 %v2804, 6
      %v3288 = vpop.permute.xlu0 %3287
      %3289 = vrot.lane.b32.xlu0 %v2872, 6
      %v3290 = vpop.permute.xlu0 %3289
      %3291 = vrot.lane.b32.xlu0 %v2940, 6
      %v3292 = vpop.permute.xlu0 %3291
      %3293 = vrot.lane.b32.xlu0 %v3008, 6
      %v3294 = vpop.permute.xlu0 %3293
      %3295 = vrot.lane.b32.xlu0 %v3076, 6
      %v3296 = vpop.permute.xlu0 %3295
      %3297 = vrot.lane.b32.xlu0 %v3144, 6
      %v3298 = vpop.permute.xlu0 %3297
      %3299 = vrot.lane.b32.xlu0 %v3212, 6
      %v3300 = vpop.permute.xlu0 %3299
      %v3309 = vsel %vm1022, %v2733, %v3222
      %v3310 = vsel %vm1022, %v2801, %v3224
      %v3311 = vsel %vm1022, %v2869, %v3226
      %v3312 = vsel %vm1022, %v2937, %v3228
      %v3313 = vsel %vm1022, %v3005, %v3230
      %v3314 = vsel %vm1022, %v3073, %v3232
      %v3315 = vsel %vm1022, %v3141, %v3234
      %v3316 = vsel %vm1022, %v3209, %v3236
      %vm3317 = vcmask 31744
      %v3318 = vsel %vm3317, %v3309, %v3254
      %v3319 = vsel %vm3317, %v3310, %v3256
      %v3320 = vsel %vm3317, %v3311, %v3258
      %v3321 = vsel %vm3317, %v3312, %v3260
      %v3322 = vsel %vm3317, %v3313, %v3262
      %v3323 = vsel %vm3317, %v3314, %v3264
      %v3324 = vsel %vm3317, %v3315, %v3266
      %v3325 = vsel %vm3317, %v3316, %v3268
      %vm3326 = vcmask 48128
      %v3327 = vsel %vm3326, %v3318, %v3286
      %v3328 = vsel %vm3326, %v3319, %v3288
      %v3329 = vsel %vm3326, %v3320, %v3290
      %v3330 = vsel %vm3326, %v3321, %v3292
      %v3331 = vsel %vm3326, %v3322, %v3294
      %v3332 = vsel %vm3326, %v3323, %v3296
      %v3333 = vsel %vm3326, %v3324, %v3298
      %v3334 = vsel %vm3326, %v3325, %v3300
      %v3335 = vpack.c.bf16 %v3328, %v3327
      %v3336 = vpack.c.bf16 %v3330, %v3329
      %v3337 = vpack.c.bf16 %v3332, %v3331
      %v3338 = vpack.c.bf16 %v3334, %v3333
      %v3339 = vld [vmem:[%s6] sm:$0xf]
      %v3340 = vld [vmem:[%s7] sm:$0x1]
      %v3342 = vlaneseq
      %v3343 = vshrl.u32 %v3342, 7
      %v3344 = vsub.s32 0, %v3343
      %v3345 = vrot.slane %v3340, %v3344
      %vm3347 = vcmask 64512
      %v3349 = vsel %vm3347, %v3335, 0
      %v3352 = vsel %vm3347, %v3336, 0
      %v3355 = vsel %vm3347, %v3337, 0
      %v3358 = vsel %vm3347, %v3338, 0
      %vm3360 = vcmask 1043456
      %v3362 = vsel %vm3360, %v3339, 0
      %3364 = vmatprep.subr.bf16.mxu0 0
      %3365 = vmatpush1.bf16.msra.mxu0 %v3362
      %3366 = vmatprep.subr.bf16.mxu0 0
      %3367 = vmatpush1.bf16.msra.mxu0 0
      %3368 = vmatprep.subr.bf16.mxu0 0
      %3369 = vmatpush1.bf16.msra.mxu0 0
      %3370 = vmatprep.subr.bf16.mxu0 0
      %3371 = vmatpush1.bf16.msra.mxu0 0
      %3372 = vmatprep.subr.bf16.mxu0 0
      %3373 = vmatpush1.bf16.msra.mxu0 0
      %3374 = vmatprep.subr.bf16.mxu0 0
      %3375 = vmatpush1.bf16.msra.mxu0 0
      %3376 = vmatprep.subr.bf16.mxu0 0
      %3377 = vmatpush1.bf16.msra.mxu0 0
      %3378 = vmatprep.subr.bf16.mxu0 0
      %3379 = vmatpush1.bf16.msra.mxu0 0
      %3380 = vmatprep.subr.bf16.mxu0 0
      %3381 = vmatpush1.bf16.msra.mxu0 0
      %3382 = vmatprep.subr.bf16.mxu0 0
      %3383 = vmatpush1.bf16.msra.mxu0 0
      %3384 = vmatprep.subr.bf16.mxu0 0
      %3385 = vmatpush1.bf16.msra.mxu0 0
      %3386 = vmatprep.subr.bf16.mxu0 0
      %3387 = vmatpush1.bf16.msra.mxu0 0
      %3388 = vmatprep.subr.bf16.mxu0 0
      %3389 = vmatpush1.bf16.msra.mxu0 0
      %3390 = vmatprep.subr.bf16.mxu0 0
      %3391 = vmatpush1.bf16.msra.mxu0 0
      %3392 = vmatprep.subr.bf16.mxu0 0
      %3393 = vmatpush1.bf16.msra.mxu0 0
      %3394 = vmatprep.subr.bf16.mxu0 0
      %3395 = vmatpush1.bf16.msra.mxu0 0
      %3396 = vmatprep.mubr.bf16.mxu0 0
      %3397 = vmatmul.mubr.bf16.gmra.mrb[0].mxu0 %v3349
      %v3398 = vpop.f32.mrb[0].mxu0
      %v3399 = vadd.f32 %v3345, %v3398
      %v3400 = vpop.f32.mrb[0].mxu0
      %v3401 = vpop.f32.mrb[0].mxu0
      %v3402 = vadd.f32 %v3345, %v3401
      %v3403 = vpop.f32.mrb[0].mxu0
      %3404 = vmatprep.mubr.bf16.mxu0 0
      %3405 = vmatmul.mubr.bf16.gmra.mrb[0].mxu0 %v3352
      %v3406 = vpop.f32.mrb[0].mxu0
      %v3407 = vadd.f32 %v3345, %v3406
      %v3408 = vpop.f32.mrb[0].mxu0
      %v3409 = vpop.f32.mrb[0].mxu0
      %v3410 = vadd.f32 %v3345, %v3409
      %v3411 = vpop.f32.mrb[0].mxu0
      %3412 = vmatprep.mubr.bf16.mxu0 0
      %3413 = vmatmul.mubr.bf16.gmra.mrb[0].mxu0 %v3355
      %v3414 = vpop.f32.mrb[0].mxu0
      %v3415 = vadd.f32 %v3345, %v3414
      %v3416 = vpop.f32.mrb[0].mxu0
      %v3417 = vpop.f32.mrb[0].mxu0
      %v3418 = vadd.f32 %v3345, %v3417
      %v3419 = vpop.f32.mrb[0].mxu0
      %3420 = vmatprep.mubr.bf16.mxu0 0
      %3421 = vmatmul.mubr.bf16.gmra.mrb[0].mxu0 %v3358
      %v3422 = vpop.f32.mrb[0].mxu0
      %v3423 = vadd.f32 %v3345, %v3422
      %v3424 = vpop.f32.mrb[0].mxu0
      %v3425 = vpop.f32.mrb[0].mxu0
      %v3426 = vadd.f32 %v3345, %v3425
      %v3427 = vpop.f32.mrb[0].mxu0
      %3428 = vdwg.mxu0
      %v3429 = vadd.f32 %v3399, %v826
      %v3430 = vadd.f32 %v3402, %v827
      %v3431 = vadd.f32 %v3407, %v828
      %v3432 = vadd.f32 %v3410, %v829
      %v3433 = vadd.f32 %v3415, %v830
      %v3434 = vadd.f32 %v3418, %v831
      %v3435 = vadd.f32 %v3423, %v832
      %v3436 = vadd.f32 %v3426, %v833
      %v3437 = vld [vmem:[%s8] sm:$0x1]
      %v3438 = vld [vmem:[%s9] sm:$0x1]
      %v3439 = vsel %vm3347, %v3429, 0.0
      %3440 = vadd.xlane.f32.xlu0 %v3439
      %v3441 = vpop.xlane.xlu0 %3440
      %v3442 = vsel %vm3347, %v3430, 0.0
      %3443 = vadd.xlane.f32.xlu0 %v3442
      %v3444 = vpop.xlane.xlu0 %3443
      %v3445 = vsel %vm3347, %v3431, 0.0
      %3446 = vadd.xlane.f32.xlu0 %v3445
      %v3447 = vpop.xlane.xlu0 %3446
      %v3448 = vsel %vm3347, %v3432, 0.0
      %3449 = vadd.xlane.f32.xlu0 %v3448
      %v3450 = vpop.xlane.xlu0 %3449
      %v3451 = vsel %vm3347, %v3433, 0.0
      %3452 = vadd.xlane.f32.xlu0 %v3451
      %v3453 = vpop.xlane.xlu0 %3452
      %v3454 = vsel %vm3347, %v3434, 0.0
      %3455 = vadd.xlane.f32.xlu0 %v3454
      %v3456 = vpop.xlane.xlu0 %3455
      %v3457 = vsel %vm3347, %v3435, 0.0
      %3458 = vadd.xlane.f32.xlu0 %v3457
      %v3459 = vpop.xlane.xlu0 %3458
      %v3460 = vsel %vm3347, %v3436, 0.0
      %3461 = vadd.xlane.f32.xlu0 %v3460
      %v3462 = vpop.xlane.xlu0 %3461
      %v3463 = vrcp.pop 8.0
      %v3464 = vmul.f32 %v3441, %v3463
      %v3465 = vmul.f32 %v3444, %v3463
      %v3466 = vmul.f32 %v3447, %v3463
      %v3467 = vmul.f32 %v3450, %v3463
      %v3468 = vmul.f32 %v3453, %v3463
      %v3469 = vmul.f32 %v3456, %v3463
      %v3470 = vmul.f32 %v3459, %v3463
      %v3471 = vmul.f32 %v3462, %v3463
      %v3472 = vsub.f32 %v3429, %v3464
      %v3473 = vsub.f32 %v3430, %v3465
      %v3474 = vsub.f32 %v3431, %v3466
      %v3475 = vsub.f32 %v3432, %v3467
      %v3476 = vsub.f32 %v3433, %v3468
      %v3477 = vsub.f32 %v3434, %v3469
      %v3478 = vsub.f32 %v3435, %v3470
      %v3479 = vsub.f32 %v3436, %v3471
      %v3480 = vmul.f32 %v3472, %v3472
      %v3481 = vmul.f32 %v3473, %v3473
      %v3482 = vmul.f32 %v3474, %v3474
      %v3483 = vmul.f32 %v3475, %v3475
      %v3484 = vmul.f32 %v3476, %v3476
      %v3485 = vmul.f32 %v3477, %v3477
      %v3486 = vmul.f32 %v3478, %v3478
      %v3487 = vmul.f32 %v3479, %v3479
      %v3488 = vsel %vm3347, %v3480, 0.0
      %3489 = vadd.xlane.f32.xlu0 %v3488
      %v3490 = vpop.xlane.xlu0 %3489
      %v3491 = vsel %vm3347, %v3481, 0.0
      %3492 = vadd.xlane.f32.xlu0 %v3491
      %v3493 = vpop.xlane.xlu0 %3492
      %v3494 = vsel %vm3347, %v3482, 0.0
      %3495 = vadd.xlane.f32.xlu0 %v3494
      %v3496 = vpop.xlane.xlu0 %3495
      %v3497 = vsel %vm3347, %v3483, 0.0
      %3498 = vadd.xlane.f32.xlu0 %v3497
      %v3499 = vpop.xlane.xlu0 %3498
      %v3500 = vsel %vm3347, %v3484, 0.0
      %3501 = vadd.xlane.f32.xlu0 %v3500
      %v3502 = vpop.xlane.xlu0 %3501
      %v3503 = vsel %vm3347, %v3485, 0.0
      %3504 = vadd.xlane.f32.xlu0 %v3503
      %v3505 = vpop.xlane.xlu0 %3504
      %v3506 = vsel %vm3347, %v3486, 0.0
      %3507 = vadd.xlane.f32.xlu0 %v3506
      %v3508 = vpop.xlane.xlu0 %3507
      %v3509 = vsel %vm3347, %v3487, 0.0
      %3510 = vadd.xlane.f32.xlu0 %v3509
      %v3511 = vpop.xlane.xlu0 %3510
      %v3512 = vmul.f32 %v3490, %v3463
      %v3513 = vmul.f32 %v3493, %v3463
      %v3514 = vmul.f32 %v3496, %v3463
      %v3515 = vmul.f32 %v3499, %v3463
      %v3516 = vmul.f32 %v3502, %v3463
      %v3517 = vmul.f32 %v3505, %v3463
      %v3518 = vmul.f32 %v3508, %v3463
      %v3519 = vmul.f32 %v3511, %v3463
      %v3520 = vadd.f32 %v3512, 1e-05
      %v3521 = vadd.f32 %v3513, 1e-05
      %v3522 = vadd.f32 %v3514, 1e-05
      %v3523 = vadd.f32 %v3515, 1e-05
      %v3524 = vadd.f32 %v3516, 1e-05
      %v3525 = vadd.f32 %v3517, 1e-05
      %v3526 = vadd.f32 %v3518, 1e-05
      %v3527 = vadd.f32 %v3519, 1e-05
      %v3528 = vrsqrt.pop %v3520
      %v3529 = vrsqrt.pop %v3521
      %v3530 = vrsqrt.pop %v3522
      %v3531 = vrsqrt.pop %v3523
      %v3532 = vrsqrt.pop %v3524
      %v3533 = vrsqrt.pop %v3525
      %v3534 = vrsqrt.pop %v3526
      %v3535 = vrsqrt.pop %v3527
      %v3536 = vmul.f32 %v3472, %v3528
      %v3537 = vmul.f32 %v3473, %v3529
      %v3538 = vmul.f32 %v3474, %v3530
      %v3539 = vmul.f32 %v3475, %v3531
      %v3540 = vmul.f32 %v3476, %v3532
      %v3541 = vmul.f32 %v3477, %v3533
      %v3542 = vmul.f32 %v3478, %v3534
      %v3543 = vmul.f32 %v3479, %v3535
      %v3545 = vlaneseq
      %v3546 = vshrl.u32 %v3545, 7
      %v3547 = vsub.s32 0, %v3546
      %v3548 = vrot.slane %v3437, %v3547
      %v3550 = vmul.f32 %v3536, %v3548
      %v3551 = vmul.f32 %v3537, %v3548
      %v3552 = vmul.f32 %v3538, %v3548
      %v3553 = vmul.f32 %v3539, %v3548
      %v3554 = vmul.f32 %v3540, %v3548
      %v3555 = vmul.f32 %v3541, %v3548
      %v3556 = vmul.f32 %v3542, %v3548
      %v3557 = vmul.f32 %v3543, %v3548
      %v3559 = vlaneseq
      %v3560 = vshrl.u32 %v3559, 7
      %v3561 = vsub.s32 0, %v3560
      %v3562 = vrot.slane %v3438, %v3561
      %v3564 = vadd.f32 %v3550, %v3562
      %v3565 = vadd.f32 %v3551, %v3562
      %v3566 = vadd.f32 %v3552, %v3562
      %v3567 = vadd.f32 %v3553, %v3562
      %v3568 = vadd.f32 %v3554, %v3562
      %v3569 = vadd.f32 %v3555, %v3562
      %v3570 = vadd.f32 %v3556, %v3562
      %v3571 = vadd.f32 %v3557, %v3562
      %v3572 = vpack.c.bf16 %v3565, %v3564
      %v3573 = vpack.c.bf16 %v3567, %v3566
      %v3574 = vpack.c.bf16 %v3569, %v3568
      %v3575 = vpack.c.bf16 %v3571, %v3570
      %v3576 = vld [vmem:[%s10] sm:$0xf]
      %v3577 = vld [vmem:[%s11] sm:$0x1]
      %v3579 = vlaneseq
      %v3580 = vshrl.u32 %v3579, 7
      %v3581 = vsub.s32 0, %v3580
      %v3582 = vrot.slane %v3577, %v3581
      %v3585 = vsel %vm3347, %v3572, 0
      %v3588 = vsel %vm3347, %v3573, 0
      %v3591 = vsel %vm3347, %v3574, 0
      %v3594 = vsel %vm3347, %v3575, 0
      %v3597 = vsel %vm3360, %v3576, 0
      %3599 = vmatprep.subr.bf16.mxu0 0
      %3600 = vmatpush1.bf16.msra.mxu0 %v3597
      %3601 = vmatprep.subr.bf16.mxu0 0
      %3602 = vmatpush1.bf16.msra.mxu0 0
      %3603 = vmatprep.subr.bf16.mxu0 0
      %3604 = vmatpush1.bf16.msra.mxu0 0
      %3605 = vmatprep.subr.bf16.mxu0 0
      %3606 = vmatpush1.bf16.msra.mxu0 0
      %3607 = vmatprep.subr.bf16.mxu0 0
      %3608 = vmatpush1.bf16.msra.mxu0 0
      %3609 = vmatprep.subr.bf16.mxu0 0
      %3610 = vmatpush1.bf16.msra.mxu0 0
      %3611 = vmatprep.subr.bf16.mxu0 0
      %3612 = vmatpush1.bf16.msra.mxu0 0
      %3613 = vmatprep.subr.bf16.mxu0 0
      %3614 = vmatpush1.bf16.msra.mxu0 0
      %3615 = vmatprep.subr.bf16.mxu0 0
      %3616 = vmatpush1.bf16.msra.mxu0 0
      %3617 = vmatprep.subr.bf16.mxu0 0
      %3618 = vmatpush1.bf16.msra.mxu0 0
      %3619 = vmatprep.subr.bf16.mxu0 0
      %3620 = vmatpush1.bf16.msra.mxu0 0
      %3621 = vmatprep.subr.bf16.mxu0 0
      %3622 = vmatpush1.bf16.msra.mxu0 0
      %3623 = vmatprep.subr.bf16.mxu0 0
      %3624 = vmatpush1.bf16.msra.mxu0 0
      %3625 = vmatprep.subr.bf16.mxu0 0
      %3626 = vmatpush1.bf16.msra.mxu0 0
      %3627 = vmatprep.subr.bf16.mxu0 0
      %3628 = vmatpush1.bf16.msra.mxu0 0
      %3629 = vmatprep.subr.bf16.mxu0 0
      %3630 = vmatpush1.bf16.msra.mxu0 0
      %3631 = vmatprep.mubr.bf16.mxu0 0
      %3632 = vmatmul.mubr.bf16.gmra.mrb[0].mxu0 %v3585
      %v3633 = vpop.f32.mrb[0].mxu0
      %v3634 = vadd.f32 %v3582, %v3633
      %v3635 = vpop.f32.mrb[0].mxu0
      %v3636 = vpop.f32.mrb[0].mxu0
      %v3637 = vadd.f32 %v3582, %v3636
      %v3638 = vpop.f32.mrb[0].mxu0
      %3639 = vmatprep.mubr.bf16.mxu0 0
      %3640 = vmatmul.mubr.bf16.gmra.mrb[0].mxu0 %v3588
      %v3641 = vpop.f32.mrb[0].mxu0
      %v3642 = vadd.f32 %v3582, %v3641
      %v3643 = vpop.f32.mrb[0].mxu0
      %v3644 = vpop.f32.mrb[0].mxu0
      %v3645 = vadd.f32 %v3582, %v3644
      %v3646 = vpop.f32.mrb[0].mxu0
      %3647 = vmatprep.mubr.bf16.mxu0 0
      %3648 = vmatmul.mubr.bf16.gmra.mrb[0].mxu0 %v3591
      %v3649 = vpop.f32.mrb[0].mxu0
      %v3650 = vadd.f32 %v3582, %v3649
      %v3651 = vpop.f32.mrb[0].mxu0
      %v3652 = vpop.f32.mrb[0].mxu0
      %v3653 = vadd.f32 %v3582, %v3652
      %v3654 = vpop.f32.mrb[0].mxu0
      %3655 = vmatprep.mubr.bf16.mxu0 0
      %3656 = vmatmul.mubr.bf16.gmra.mrb[0].mxu0 %v3594
      %v3657 = vpop.f32.mrb[0].mxu0
      %v3658 = vadd.f32 %v3582, %v3657
      %v3659 = vpop.f32.mrb[0].mxu0
      %v3660 = vpop.f32.mrb[0].mxu0
      %v3661 = vadd.f32 %v3582, %v3660
      %v3662 = vpop.f32.mrb[0].mxu0
      %3663 = vdwg.mxu0
      %v3664 = vmul.f32 %v3634, 0.5
      %v3665 = vmul.f32 %v3637, 0.5
      %v3666 = vmul.f32 %v3642, 0.5
      %v3667 = vmul.f32 %v3645, 0.5
      %v3668 = vmul.f32 %v3650, 0.5
      %v3669 = vmul.f32 %v3653, 0.5
      %v3670 = vmul.f32 %v3658, 0.5
      %v3671 = vmul.f32 %v3661, 0.5
      %v3672 = vmul.f32 %v3634, 0.70710677
      %v3673 = vmul.f32 %v3637, 0.70710677
      %v3674 = vmul.f32 %v3642, 0.70710677
      %v3675 = vmul.f32 %v3645, 0.70710677
      %v3676 = vmul.f32 %v3650, 0.70710677
      %v3677 = vmul.f32 %v3653, 0.70710677
      %v3678 = vmul.f32 %v3658, 0.70710677
      %v3679 = vmul.f32 %v3661, 0.70710677
      %v3680 = verf.f32.pop %v3672
      %v3681 = verf.f32.pop %v3673
      %v3682 = verf.f32.pop %v3674
      %v3683 = verf.f32.pop %v3675
      %v3684 = verf.f32.pop %v3676
      %v3685 = verf.f32.pop %v3677
      %v3686 = verf.f32.pop %v3678
      %v3687 = verf.f32.pop %v3679
      %v3688 = vadd.f32 %v3680, 1.0
      %v3689 = vadd.f32 %v3681, 1.0
      %v3690 = vadd.f32 %v3682, 1.0
      %v3691 = vadd.f32 %v3683, 1.0
      %v3692 = vadd.f32 %v3684, 1.0
      %v3693 = vadd.f32 %v3685, 1.0
      %v3694 = vadd.f32 %v3686, 1.0
      %v3695 = vadd.f32 %v3687, 1.0
      %v3696 = vmul.f32 %v3664, %v3688
      %v3697 = vmul.f32 %v3665, %v3689
      %v3698 = vmul.f32 %v3666, %v3690
      %v3699 = vmul.f32 %v3667, %v3691
      %v3700 = vmul.f32 %v3668, %v3692
      %v3701 = vmul.f32 %v3669, %v3693
      %v3702 = vmul.f32 %v3670, %v3694
      %v3703 = vmul.f32 %v3671, %v3695
      %v3704 = vpack.c.bf16 %v3697, %v3696
      %v3705 = vpack.c.bf16 %v3699, %v3698
      %v3706 = vpack.c.bf16 %v3701, %v3700
      %v3707 = vpack.c.bf16 %v3703, %v3702
      %v3708 = vld [vmem:[%s12] sm:$0xf]
      %v3709 = vld [vmem:[%s13] sm:$0x1]
      %v3711 = vlaneseq
      %v3712 = vshrl.u32 %v3711, 7
      %v3713 = vsub.s32 0, %v3712
      %v3714 = vrot.slane %v3709, %v3713
      %v3717 = vsel %vm3347, %v3704, 0
      %v3720 = vsel %vm3347, %v3705, 0
      %v3723 = vsel %vm3347, %v3706, 0
      %v3726 = vsel %vm3347, %v3707, 0
      %v3729 = vsel %vm3360, %v3708, 0
      %3731 = vmatprep.subr.bf16.mxu0 0
      %3732 = vmatpush1.bf16.msra.mxu0 %v3729
      %3733 = vmatprep.subr.bf16.mxu0 0
      %3734 = vmatpush1.bf16.msra.mxu0 0
      %3735 = vmatprep.subr.bf16.mxu0 0
      %3736 = vmatpush1.bf16.msra.mxu0 0
      %3737 = vmatprep.subr.bf16.mxu0 0
      %3738 = vmatpush1.bf16.msra.mxu0 0
      %3739 = vmatprep.subr.bf16.mxu0 0
      %3740 = vmatpush1.bf16.msra.mxu0 0
      %3741 = vmatprep.subr.bf16.mxu0 0
      %3742 = vmatpush1.bf16.msra.mxu0 0
      %3743 = vmatprep.subr.bf16.mxu0 0
      %3744 = vmatpush1.bf16.msra.mxu0 0
      %3745 = vmatprep.subr.bf16.mxu0 0
      %3746 = vmatpush1.bf16.msra.mxu0 0
      %3747 = vmatprep.subr.bf16.mxu0 0
      %3748 = vmatpush1.bf16.msra.mxu0 0
      %3749 = vmatprep.subr.bf16.mxu0 0
      %3750 = vmatpush1.bf16.msra.mxu0 0
      %3751 = vmatprep.subr.bf16.mxu0 0
      %3752 = vmatpush1.bf16.msra.mxu0 0
      %3753 = vmatprep.subr.bf16.mxu0 0
      %3754 = vmatpush1.bf16.msra.mxu0 0
      %3755 = vmatprep.subr.bf16.mxu0 0
      %3756 = vmatpush1.bf16.msra.mxu0 0
      %3757 = vmatprep.subr.bf16.mxu0 0
      %3758 = vmatpush1.bf16.msra.mxu0 0
      %3759 = vmatprep.subr.bf16.mxu0 0
      %3760 = vmatpush1.bf16.msra.mxu0 0
      %3761 = vmatprep.subr.bf16.mxu0 0
      %3762 = vmatpush1.bf16.msra.mxu0 0
      %3763 = vmatprep.mubr.bf16.mxu0 0
      %3764 = vmatmul.mubr.bf16.gmra.mrb[0].mxu0 %v3717
      %v3765 = vpop.f32.mrb[0].mxu0
      %v3766 = vadd.f32 %v3714, %v3765
      %v3767 = vpop.f32.mrb[0].mxu0
      %v3768 = vpop.f32.mrb[0].mxu0
      %v3769 = vadd.f32 %v3714, %v3768
      %v3770 = vpop.f32.mrb[0].mxu0
      %3771 = vmatprep.mubr.bf16.mxu0 0
      %3772 = vmatmul.mubr.bf16.gmra.mrb[0].mxu0 %v3720
      %v3773 = vpop.f32.mrb[0].mxu0
      %v3774 = vadd.f32 %v3714, %v3773
      %v3775 = vpop.f32.mrb[0].mxu0
      %v3776 = vpop.f32.mrb[0].mxu0
      %v3777 = vadd.f32 %v3714, %v3776
      %v3778 = vpop.f32.mrb[0].mxu0
      %3779 = vmatprep.mubr.bf16.mxu0 0
      %3780 = vmatmul.mubr.bf16.gmra.mrb[0].mxu0 %v3723
      %v3781 = vpop.f32.mrb[0].mxu0
      %v3782 = vadd.f32 %v3714, %v3781
      %v3783 = vpop.f32.mrb[0].mxu0
      %v3784 = vpop.f32.mrb[0].mxu0
      %v3785 = vadd.f32 %v3714, %v3784
      %v3786 = vpop.f32.mrb[0].mxu0
      %3787 = vmatprep.mubr.bf16.mxu0 0
      %3788 = vmatmul.mubr.bf16.gmra.mrb[0].mxu0 %v3726
      %v3789 = vpop.f32.mrb[0].mxu0
      %v3790 = vadd.f32 %v3714, %v3789
      %v3791 = vpop.f32.mrb[0].mxu0
      %v3792 = vpop.f32.mrb[0].mxu0
      %v3793 = vadd.f32 %v3714, %v3792
      %v3794 = vpop.f32.mrb[0].mxu0
      %3795 = vdwg.mxu0
      %v3796 = vadd.f32 %v3766, %v3429
      %v3797 = vadd.f32 %v3769, %v3430
      %v3798 = vadd.f32 %v3774, %v3431
      %v3799 = vadd.f32 %v3777, %v3432
      %v3800 = vadd.f32 %v3782, %v3433
      %v3801 = vadd.f32 %v3785, %v3434
      %v3802 = vadd.f32 %v3790, %v3435
      %v3803 = vadd.f32 %v3793, %v3436
      %3804 = vst.msk [vmem:[%s525] sm:$0xff] %vm3347, %v3796
      %3805 = vst.msk [vmem:[%s525 + $0x8] sm:$0xff] %vm3347, %v3797
      %3806 = vst.msk [vmem:[%s525 + $0x10] sm:$0xff] %vm3347, %v3798
      %3807 = vst.msk [vmem:[%s525 + $0x18] sm:$0xff] %vm3347, %v3799
      %3808 = vst.msk [vmem:[%s525 + $0x20] sm:$0xff] %vm3347, %v3800
      %3809 = vst.msk [vmem:[%s525 + $0x28] sm:$0xff] %vm3347, %v3801
      %3810 = vst.msk [vmem:[%s525 + $0x30] sm:$0xff] %vm3347, %v3802
      %3811 = vst.msk [vmem:[%s525 + $0x38] sm:$0xff] %vm3347, %v3803
      %s3812 = smul.u32 8, %s30
      %p3813 = scmp.lt.s32.totalorder %s29, 1
      %s3814 = scalar_select %p3813, %s29, 1
      %p3815 = scmp.lt.s32.totalorder %s3812, 7
      %s3816 = scalar_select %p3815, %s3812, 7
      %s3817 = smul.addr %s3814, 8
      %s3818 = sadd.s32 %s3816, %s3817
      %s3819 = smul.addr %s3818, 8
      %s3820 = scalar_lea.vmem %s14, %s3819
      // Predicated region
      $region81: #{tpu_custom_call.1} parent=75 // pred_check
        %p3821 = pneg %p363
      $region82: #{tpu_custom_call.1} parent=75 // pred_check_branch
        %3823 = sbr.rel (%p3821) target = $region84
      $region83: #{tpu_custom_call.1} parent=75 // pred_region
        %s3824 = smul.u32 8, %s30
      $region84: #{tpu_custom_call.1} parent=75 // pred_fallthru
        _
    $region76: #{tpu_custom_call.1} parent=5 // pred_fallthru
      _
    %p3825 = scmp.le.s32.totalorder 2, %s20
    // Predicated region
    $region85: #{tpu_custom_call.1} parent=5 // pred_check
      %p3826 = pneg %p3825
    $region86: #{tpu_custom_call.1} parent=5 // pred_check_branch
      %3828 = sbr.rel (%p3826) target = $region88
    $region87: #{tpu_custom_call.1} parent=5 // pred_region
      %s3829 = ssub.s32 %s20, 2
      // Predicated region
      $region89: #{tpu_custom_call.1} parent=87 // pred_check
        %p3830 = pneg %p369
      $region90: #{tpu_custom_call.1} parent=87 // pred_check_branch
        %3832 = sbr.rel (%p3830) target = $region92
      $region91: #{tpu_custom_call.1} parent=87 // pred_region
        %s3833 = smul.u32 8, %s32
        %p3834 = scmp.lt.s32.totalorder %s31, 1
        %s3835 = scalar_select %p3834, %s31, 1
        %p3836 = scmp.lt.s32.totalorder %s3833, 7
        %s3837 = scalar_select %p3836, %s3833, 7
        %s3838 = smul.addr %s3835, 8
        %s3839 = sadd.s32 %s3837, %s3838
        %s3840 = smul.addr %s3839, 8
        %s3841 = scalar_lea.vmem %s14, %s3840
      $region92: #{tpu_custom_call.1} parent=87 // pred_fallthru
        _
    $region88: #{tpu_custom_call.1} parent=5 // pred_fallthru
      _
  $region6: #{tpu_custom_call.1} parent=0 // loop_footer
    %s24 = sadd.s32 1, %s20
  $region7: #{tpu_custom_call.1} parent=0 // loop_footer_branch
    %19 = sbr.rel target = $region3
  $region8: #{tpu_custom_call.1} parent=0 // loop_exit
    _

</llo_original>
